<compile_context>
chip_gen: v7x
topology: tpu7x:2x2x1
jax: 0.10.0
libtpu: 0.0.40
codegen_flags: <defaults>
</compile_context>

<pallas_src>
import functools

import jax
import jax.numpy as jnp
from jax.experimental import pallas as pl
from jax.experimental.pallas import tpu as pltpu


# ---------------------------------------------------------------------------
# Fused kernel: one grid step == one lane-packed tile of TB images.
# refs = [x, (conv_w, conv_b)*, (lin_w, lin_b)*, out]
# ---------------------------------------------------------------------------
def _cnn_fused_kernel(*refs, conv_cfgs, fc_positions, fc_len, n_linear):
    idx = 0
    x_ref = refs[idx]; idx += 1
    conv_refs = []
    for _ in conv_cfgs:
        conv_refs.append((refs[idx], refs[idx + 1])); idx += 2
    lin_refs = []
    for _ in range(n_linear):
        lin_refs.append((refs[idx], refs[idx + 1])); idx += 2
    o_ref = refs[idx]

    act = x_ref[0]                                       # (C_in, TB*P) f32

    # ---- conv -> bias -> ReLU -> max-pool stages --------------------------
    for (w_ref, b_ref), (k, R, cs, l_conv, l_pool, pool) in zip(conv_refs,
                                                                conv_cfgs):
        # Stack the k*k taps along sublanes -> ONE MXU matmul per conv layer.
        taps = []
        for kh in range(k):
            for kw in range(k):
                s = kh * R + kw * cs
                taps.append(act[:, s:s + l_conv])
        x_stack = jnp.concatenate(taps, axis=0)          # (k*k*cin, l_conv)
        acc = jnp.dot(w_ref[...], x_stack,
                      preferred_element_type=jnp.float32)
        acc = jnp.maximum(acc + b_ref[...], 0.0)
        # Max-pool: elementwise max of pool^2 shifted slices (pure VPU).
        pooled = None
        for dh in range(pool):
            for dw in range(pool):
                d = dh * R + dw * cs
                cand = acc[:, d:d + l_pool]
                pooled = cand if pooled is None else jnp.maximum(pooled, cand)
        act = pooled                                     # strides -> (*pool)

    # ---- first linear: one stacked-tap contraction over (spatial, channel) -
    w_ref, b_ref = lin_refs[0]
    taps = [act[:, p:p + fc_len] for p in fc_positions]
    x_stack = jnp.concatenate(taps, axis=0)              # (S*C, fc_len)
    y = jnp.dot(w_ref[...], x_stack, preferred_element_type=jnp.float32)
    y = jnp.maximum(y + b_ref[...], 0.0)                 # valid at lanes i*P

    # ---- remaining linear layers ------------------------------------------
    for w_ref, b_ref in lin_refs[1:]:
        y = jnp.maximum(
            jnp.dot(w_ref[...], y, preferred_element_type=jnp.float32)
            + b_ref[...], 0.0)

    o_ref[0] = y                                         # lane-dense store


# ---------------------------------------------------------------------------
# Wrapper: static layout plan, host-side weight reordering, single pallas_call.
# ---------------------------------------------------------------------------
@functools.partial(jax.jit, static_argnums=(2,))
def cnn_forward(x, params, pool):
    n, c0, h, w = x.shape
    L0 = h * w
    f32 = jnp.float32

    # ---- static layout plan (pure Python at trace time) -------------------
    R, cs = w, 1
    sh, sw, C = h, w, c0
    plan = []                       # per conv: (k, R, cs, conv_cut, pool_cut)
    total_cut = 0
    for (wgt, _) in params["convs"]:
        cout, cin, k, _ = wgt.shape
        conv_cut = (k - 1) * (R + cs)
        pool_cut = (pool - 1) * (R + cs)
        plan.append((k, R, cs, conv_cut, pool_cut))
        total_cut += conv_cut + pool_cut
        sh, sw = (sh - k + 1) // pool, (sw - k + 1) // pool
        R, cs, C = R * pool, cs * pool, cout
    fc_positions = tuple(r * R + c * cs for r in range(sh) for c in range(sw))
    fc_cut = fc_positions[-1]
    total_cut += fc_cut

    # ---- batch tiling: TB images per grid step, >= 2 grid steps ------------
    TB_MAX = 8
    n_steps = max(2, -(-n // TB_MAX))        # keep both v7x TCs busy
    tb = -(-n // n_steps)
    n_pad = n_steps * tb
    P = -(-(L0 + total_cut) // 128) * 128    # per-image lane pitch, aligned
    L_total = tb * P

    # live lane lengths per layer in the packed layout
    conv_cfgs = []
    L_cur = L_total
    for (k, Rl, csl, conv_cut, pool_cut) in plan:
        l_conv = L_cur - conv_cut
        l_pool = l_conv - pool_cut
        conv_cfgs.append((k, Rl, csl, l_conv, l_pool, pool))
        L_cur = l_pool
    fc_len = L_cur - fc_cut

    # ---- pack the batch along the lane axis --------------------------------
    xf = x.astype(f32)
    if n_pad > n:
        xf = jnp.pad(xf, ((0, n_pad - n), (0, 0), (0, 0), (0, 0)))
    xf = xf.reshape(n_pad, c0, L0)
    xf = jnp.pad(xf, ((0, 0), (0, 0), (0, P - L0)))
    xf = xf.reshape(n_steps, tb, c0, P).transpose(0, 2, 1, 3)
    xf = xf.reshape(n_steps, c0, L_total)

    operands = [xf]
    in_specs = [pl.BlockSpec((1, c0, L_total), lambda g: (g, 0, 0))]

    # conv weights: (cout, cin, k, k) -> (cout, k*k*cin), tap-major rows
    for (wgt, b) in params["convs"]:
        cout, cin, k, _ = wgt.shape
        w_stack = jnp.transpose(wgt, (0, 2, 3, 1)).reshape(cout, k * k * cin)
        operands += [w_stack.astype(f32), b.reshape(cout, 1).astype(f32)]
        in_specs += [pl.BlockSpec((cout, k * k * cin), lambda g: (0, 0)),
                     pl.BlockSpec((cout, 1), lambda g: (0, 0))]

    # first FC: (F1, C*sh*sw) -> (F1, sh*sw*C), position-major rows to match
    # the in-kernel tap-stack ordering (p = r*sw + c slow, channel fast).
    (w1, b1) = params["linears"][0]
    f1 = w1.shape[0]
    s_sp = sh * sw
    w1_stack = (w1.reshape(f1, C, s_sp).transpose(0, 2, 1)
                  .reshape(f1, s_sp * C)).astype(f32)
    operands += [w1_stack, b1.reshape(f1, 1).astype(f32)]
    in_specs += [pl.BlockSpec((f1, s_sp * C), lambda g: (0, 0)),
                 pl.BlockSpec((f1, 1), lambda g: (0, 0))]

    f_prev = f1
    for (wl, bl) in params["linears"][1:]:
        fo = wl.shape[0]
        operands += [wl.astype(f32), bl.reshape(fo, 1).astype(f32)]
        in_specs += [pl.BlockSpec((fo, f_prev), lambda g: (0, 0)),
                     pl.BlockSpec((fo, 1), lambda g: (0, 0))]
        f_prev = fo

    kernel = functools.partial(
        _cnn_fused_kernel,
        conv_cfgs=tuple(conv_cfgs),
        fc_positions=fc_positions,
        fc_len=fc_len,
        n_linear=len(params["linears"]),
    )

    out_slab = pl.pallas_call(
        kernel,
        out_shape=jax.ShapeDtypeStruct((n_steps, f_prev, fc_len), f32),
        grid=(n_steps,),
        in_specs=in_specs,
        out_specs=pl.BlockSpec((1, f_prev, fc_len), lambda g: (g, 0, 0)),
        compiler_params=pltpu.CompilerParams(
            dimension_semantics=("parallel",)),
    )(*operands)

    # image i's logits live at lane i*P of its tile's slab
    logits = out_slab[:, :, :(tb - 1) * P + 1:P]         # (n_steps, F, tb)
    logits = jnp.transpose(logits, (0, 2, 1)).reshape(n_pad, f_prev)
    return logits[:n]


# ---------------------------------------------------------------------------
# Parameter init (deterministic, PyTorch-default-like uniform) and reference.
# ---------------------------------------------------------------------------
def init_params(key, convolutions, pooling_size, layers, image_shape):
    c, s = image_shape[0], image_shape[1]
    convs, lins = [], []
    for (cout, k) in convolutions:
        key, k1, k2 = jax.random.split(key, 3)
        bound = 1.0 / float(c * k * k) ** 0.5
        w = jax.random.uniform(k1, (cout, c, k, k), jnp.float32, -bound, bound)
        b = jax.random.uniform(k2, (cout,), jnp.float32, -bound, bound)
        convs.append((w, b))
        c = cout
        s = int((s - (k - 1)) / pooling_size)
    fan_in = c * s * s
    for fout in layers:
        key, k1, k2 = jax.random.split(key, 3)
        bound = 1.0 / float(fan_in) ** 0.5
        w = jax.random.uniform(k1, (fout, fan_in), jnp.float32, -bound, bound)
        b = jax.random.uniform(k2, (fout,), jnp.float32, -bound, bound)
        lins.append((w, b))
        fan_in = fout
    return {"convs": convs, "linears": lins}


def reference_forward(x, params, pool):
    for (w, b) in params["convs"]:
        y = jax.lax.conv_general_dilated(
            x, w, (1, 1), "VALID",
            dimension_numbers=("NCHW", "OIHW", "NCHW"))
        y = jax.nn.relu(y + b.reshape(1, -1, 1, 1))
        x = jax.lax.reduce_window(y, -jnp.inf, jax.lax.max,
                                  (1, 1, pool, pool), (1, 1, pool, pool),
                                  "VALID")
    x = x.reshape(x.shape[0], -1)
    for (w, b) in params["linears"]:
        x = jax.nn.relu(x @ w.T + b)
    return x


if __name__ == "__main__":
    # CNN(convolutions=[(8,3),(16,3)], pooling_size=2, layers=[32,10],
    #     image_shape=[4,16]) ; batch = 8 -> 2 grid steps of 4 packed images.
    convolutions = [(8, 3), (16, 3)]
    pooling_size = 2
    layers = [32, 10]
    image_shape = [4, 16]
    batch = 8

    key = jax.random.PRNGKey(0)
    key, xk = jax.random.split(key)
    x = jax.random.normal(
        xk, (batch, image_shape[0], image_shape[1], image_shape[1]),
        dtype=jnp.float32)

    params = init_params(key, convolutions, pooling_size, layers, image_shape)

    out = cnn_forward(x, params, pooling_size)
    out = jax.block_until_ready(out)

    ref = jax.block_until_ready(reference_forward(x, params, pooling_size))
    assert out.shape == (batch, layers[-1]), out.shape
    assert jnp.allclose(out, ref, atol=1e-4, rtol=1e-4), (
        float(jnp.max(jnp.abs(out - ref))))

    print("KERNEL_OK")
</pallas_src>

<mosaic_0001>
module attributes {stable_mosaic.version = 11 : i64} {
  func.func @_cnn_fused_kernel(%arg0: i32, %arg1: memref<1x4x2048xf32, #tpu.memory_space<vmem>>, %arg2: memref<8x36xf32, #tpu.memory_space<vmem>>, %arg3: memref<8x1xf32, #tpu.memory_space<vmem>>, %arg4: memref<16x72xf32, #tpu.memory_space<vmem>>, %arg5: memref<16x1xf32, #tpu.memory_space<vmem>>, %arg6: memref<32x64xf32, #tpu.memory_space<vmem>>, %arg7: memref<32x1xf32, #tpu.memory_space<vmem>>, %arg8: memref<10x32xf32, #tpu.memory_space<vmem>>, %arg9: memref<10x1xf32, #tpu.memory_space<vmem>>, %arg10: memref<1x10x1827xf32, #tpu.memory_space<vmem>>) attributes {dimension_semantics = [#tpu.dimension_semantics<parallel>], iteration_bounds = array<i64: 2>, scalar_prefetch = 0 : i64, scratch_operands = 0 : i64, tpu.core_type = #tpu.core_type<tc>, window_params = [{transform_indices = @transform_0, window_bounds = array<i64: 1, 4, 2048>}, {pipeline_mode = #tpu.pipeline_mode<synchronous>, transform_indices = @transform_1, window_bounds = array<i64: 8, 36>}, {pipeline_mode = #tpu.pipeline_mode<synchronous>, transform_indices = @transform_2, window_bounds = array<i64: 8, 1>}, {pipeline_mode = #tpu.pipeline_mode<synchronous>, transform_indices = @transform_3, window_bounds = array<i64: 16, 72>}, {pipeline_mode = #tpu.pipeline_mode<synchronous>, transform_indices = @transform_4, window_bounds = array<i64: 16, 1>}, {pipeline_mode = #tpu.pipeline_mode<synchronous>, transform_indices = @transform_5, window_bounds = array<i64: 32, 64>}, {pipeline_mode = #tpu.pipeline_mode<synchronous>, transform_indices = @transform_6, window_bounds = array<i64: 32, 1>}, {pipeline_mode = #tpu.pipeline_mode<synchronous>, transform_indices = @transform_7, window_bounds = array<i64: 10, 32>}, {pipeline_mode = #tpu.pipeline_mode<synchronous>, transform_indices = @transform_8, window_bounds = array<i64: 10, 1>}, {transform_indices = @transform_9, window_bounds = array<i64: 1, 10, 1827>}]} {
    %c0 = arith.constant 0 : index
    %c0_0 = arith.constant 0 : index
    %c0_1 = arith.constant 0 : index
    %0 = vector.load %arg1[%c0, %c0_0, %c0_1] : memref<1x4x2048xf32, #tpu.memory_space<vmem>>, vector<1x4x2048xf32>
    %1 = vector.shape_cast %0 : vector<1x4x2048xf32> to vector<4x2048xf32>
    %2 = vector.extract_strided_slice %1 {offsets = [0, 0], sizes = [4, 2014], strides = [1, 1]} : vector<4x2048xf32> to vector<4x2014xf32>
    %3 = vector.extract_strided_slice %1 {offsets = [0, 1], sizes = [4, 2014], strides = [1, 1]} : vector<4x2048xf32> to vector<4x2014xf32>
    %4 = vector.extract_strided_slice %1 {offsets = [0, 2], sizes = [4, 2014], strides = [1, 1]} : vector<4x2048xf32> to vector<4x2014xf32>
    %5 = vector.extract_strided_slice %1 {offsets = [0, 16], sizes = [4, 2014], strides = [1, 1]} : vector<4x2048xf32> to vector<4x2014xf32>
    %6 = vector.extract_strided_slice %1 {offsets = [0, 17], sizes = [4, 2014], strides = [1, 1]} : vector<4x2048xf32> to vector<4x2014xf32>
    %7 = vector.extract_strided_slice %1 {offsets = [0, 18], sizes = [4, 2014], strides = [1, 1]} : vector<4x2048xf32> to vector<4x2014xf32>
    %8 = vector.extract_strided_slice %1 {offsets = [0, 32], sizes = [4, 2014], strides = [1, 1]} : vector<4x2048xf32> to vector<4x2014xf32>
    %9 = vector.extract_strided_slice %1 {offsets = [0, 33], sizes = [4, 2014], strides = [1, 1]} : vector<4x2048xf32> to vector<4x2014xf32>
    %10 = vector.extract_strided_slice %1 {offsets = [0, 34], sizes = [4, 2014], strides = [1, 1]} : vector<4x2048xf32> to vector<4x2014xf32>
    %11 = tpu.concatenate %2, %3, %4, %5, %6, %7, %8, %9, %10 in 0 : vector<4x2014xf32>, vector<4x2014xf32>, vector<4x2014xf32>, vector<4x2014xf32>, vector<4x2014xf32>, vector<4x2014xf32>, vector<4x2014xf32>, vector<4x2014xf32>, vector<4x2014xf32> -> vector<36x2014xf32>
    %c0_2 = arith.constant 0 : index
    %c0_3 = arith.constant 0 : index
    %12 = vector.load %arg2[%c0_2, %c0_3] : memref<8x36xf32, #tpu.memory_space<vmem>>, vector<8x36xf32>
    %cst = arith.constant dense<0.000000e+00> : vector<8x2014xf32>
    %13 = tpu.matmul %12, %11, %cst {dimension_numbers = #tpu.dot_dimension_numbers<[1], [0], [0], [1], [0, 0, 1, 1], [], []>} : vector<8x36xf32>, vector<36x2014xf32>, vector<8x2014xf32> -> vector<8x2014xf32>
    %c0_4 = arith.constant 0 : index
    %c0_5 = arith.constant 0 : index
    %14 = vector.load %arg3[%c0_4, %c0_5] : memref<8x1xf32, #tpu.memory_space<vmem>>, vector<8x1xf32>
    %15 = vector.broadcast %14 : vector<8x1xf32> to vector<8x2014xf32>
    %16 = arith.addf %13, %15 : vector<8x2014xf32>
    %cst_6 = arith.constant 0.000000e+00 : f32
    %17 = vector.broadcast %cst_6 : f32 to vector<8x2014xf32>
    %18 = arith.maximumf %16, %17 : vector<8x2014xf32>
    %19 = vector.extract_strided_slice %18 {offsets = [0, 0], sizes = [8, 1997], strides = [1, 1]} : vector<8x2014xf32> to vector<8x1997xf32>
    %20 = vector.extract_strided_slice %18 {offsets = [0, 1], sizes = [8, 1997], strides = [1, 1]} : vector<8x2014xf32> to vector<8x1997xf32>
    %21 = arith.maximumf %19, %20 : vector<8x1997xf32>
    %22 = vector.extract_strided_slice %18 {offsets = [0, 16], sizes = [8, 1997], strides = [1, 1]} : vector<8x2014xf32> to vector<8x1997xf32>
    %23 = arith.maximumf %21, %22 : vector<8x1997xf32>
    %24 = vector.extract_strided_slice %18 {offsets = [0, 17], sizes = [8, 1997], strides = [1, 1]} : vector<8x2014xf32> to vector<8x1997xf32>
    %25 = arith.maximumf %23, %24 : vector<8x1997xf32>
    %26 = vector.extract_strided_slice %25 {offsets = [0, 0], sizes = [8, 1929], strides = [1, 1]} : vector<8x1997xf32> to vector<8x1929xf32>
    %27 = vector.extract_strided_slice %25 {offsets = [0, 2], sizes = [8, 1929], strides = [1, 1]} : vector<8x1997xf32> to vector<8x1929xf32>
    %28 = vector.extract_strided_slice %25 {offsets = [0, 4], sizes = [8, 1929], strides = [1, 1]} : vector<8x1997xf32> to vector<8x1929xf32>
    %29 = vector.extract_strided_slice %25 {offsets = [0, 32], sizes = [8, 1929], strides = [1, 1]} : vector<8x1997xf32> to vector<8x1929xf32>
    %30 = vector.extract_strided_slice %25 {offsets = [0, 34], sizes = [8, 1929], strides = [1, 1]} : vector<8x1997xf32> to vector<8x1929xf32>
    %31 = vector.extract_strided_slice %25 {offsets = [0, 36], sizes = [8, 1929], strides = [1, 1]} : vector<8x1997xf32> to vector<8x1929xf32>
    %32 = vector.extract_strided_slice %25 {offsets = [0, 64], sizes = [8, 1929], strides = [1, 1]} : vector<8x1997xf32> to vector<8x1929xf32>
    %33 = vector.extract_strided_slice %25 {offsets = [0, 66], sizes = [8, 1929], strides = [1, 1]} : vector<8x1997xf32> to vector<8x1929xf32>
    %34 = vector.extract_strided_slice %25 {offsets = [0, 68], sizes = [8, 1929], strides = [1, 1]} : vector<8x1997xf32> to vector<8x1929xf32>
    %35 = tpu.concatenate %26, %27, %28, %29, %30, %31, %32, %33, %34 in 0 : vector<8x1929xf32>, vector<8x1929xf32>, vector<8x1929xf32>, vector<8x1929xf32>, vector<8x1929xf32>, vector<8x1929xf32>, vector<8x1929xf32>, vector<8x1929xf32>, vector<8x1929xf32> -> vector<72x1929xf32>
    %c0_7 = arith.constant 0 : index
    %c0_8 = arith.constant 0 : index
    %36 = vector.load %arg4[%c0_7, %c0_8] : memref<16x72xf32, #tpu.memory_space<vmem>>, vector<16x72xf32>
    %cst_9 = arith.constant dense<0.000000e+00> : vector<16x1929xf32>
    %37 = tpu.matmul %36, %35, %cst_9 {dimension_numbers = #tpu.dot_dimension_numbers<[1], [0], [0], [1], [0, 0, 1, 1], [], []>} : vector<16x72xf32>, vector<72x1929xf32>, vector<16x1929xf32> -> vector<16x1929xf32>
    %c0_10 = arith.constant 0 : index
    %c0_11 = arith.constant 0 : index
    %38 = vector.load %arg5[%c0_10, %c0_11] : memref<16x1xf32, #tpu.memory_space<vmem>>, vector<16x1xf32>
    %39 = vector.broadcast %38 : vector<16x1xf32> to vector<16x1929xf32>
    %40 = arith.addf %37, %39 : vector<16x1929xf32>
    %cst_12 = arith.constant 0.000000e+00 : f32
    %41 = vector.broadcast %cst_12 : f32 to vector<16x1929xf32>
    %42 = arith.maximumf %40, %41 : vector<16x1929xf32>
    %43 = vector.extract_strided_slice %42 {offsets = [0, 0], sizes = [16, 1895], strides = [1, 1]} : vector<16x1929xf32> to vector<16x1895xf32>
    %44 = vector.extract_strided_slice %42 {offsets = [0, 2], sizes = [16, 1895], strides = [1, 1]} : vector<16x1929xf32> to vector<16x1895xf32>
    %45 = arith.maximumf %43, %44 : vector<16x1895xf32>
    %46 = vector.extract_strided_slice %42 {offsets = [0, 32], sizes = [16, 1895], strides = [1, 1]} : vector<16x1929xf32> to vector<16x1895xf32>
    %47 = arith.maximumf %45, %46 : vector<16x1895xf32>
    %48 = vector.extract_strided_slice %42 {offsets = [0, 34], sizes = [16, 1895], strides = [1, 1]} : vector<16x1929xf32> to vector<16x1895xf32>
    %49 = arith.maximumf %47, %48 : vector<16x1895xf32>
    %50 = vector.extract_strided_slice %49 {offsets = [0, 0], sizes = [16, 1827], strides = [1, 1]} : vector<16x1895xf32> to vector<16x1827xf32>
    %51 = vector.extract_strided_slice %49 {offsets = [0, 4], sizes = [16, 1827], strides = [1, 1]} : vector<16x1895xf32> to vector<16x1827xf32>
    %52 = vector.extract_strided_slice %49 {offsets = [0, 64], sizes = [16, 1827], strides = [1, 1]} : vector<16x1895xf32> to vector<16x1827xf32>
    %53 = vector.extract_strided_slice %49 {offsets = [0, 68], sizes = [16, 1827], strides = [1, 1]} : vector<16x1895xf32> to vector<16x1827xf32>
    %54 = tpu.concatenate %50, %51, %52, %53 in 0 : vector<16x1827xf32>, vector<16x1827xf32>, vector<16x1827xf32>, vector<16x1827xf32> -> vector<64x1827xf32>
    %c0_13 = arith.constant 0 : index
    %c0_14 = arith.constant 0 : index
    %55 = vector.load %arg6[%c0_13, %c0_14] : memref<32x64xf32, #tpu.memory_space<vmem>>, vector<32x64xf32>
    %cst_15 = arith.constant dense<0.000000e+00> : vector<32x1827xf32>
    %56 = tpu.matmul %55, %54, %cst_15 {dimension_numbers = #tpu.dot_dimension_numbers<[1], [0], [0], [1], [0, 0, 1, 1], [], []>} : vector<32x64xf32>, vector<64x1827xf32>, vector<32x1827xf32> -> vector<32x1827xf32>
    %c0_16 = arith.constant 0 : index
    %c0_17 = arith.constant 0 : index
    %57 = vector.load %arg7[%c0_16, %c0_17] : memref<32x1xf32, #tpu.memory_space<vmem>>, vector<32x1xf32>
    %58 = vector.broadcast %57 : vector<32x1xf32> to vector<32x1827xf32>
    %59 = arith.addf %56, %58 : vector<32x1827xf32>
    %cst_18 = arith.constant 0.000000e+00 : f32
    %60 = vector.broadcast %cst_18 : f32 to vector<32x1827xf32>
    %61 = arith.maximumf %59, %60 : vector<32x1827xf32>
    %c0_19 = arith.constant 0 : index
    %c0_20 = arith.constant 0 : index
    %62 = vector.load %arg8[%c0_19, %c0_20] : memref<10x32xf32, #tpu.memory_space<vmem>>, vector<10x32xf32>
    %cst_21 = arith.constant dense<0.000000e+00> : vector<10x1827xf32>
    %63 = tpu.matmul %62, %61, %cst_21 {dimension_numbers = #tpu.dot_dimension_numbers<[1], [0], [0], [1], [0, 0, 1, 1], [], []>} : vector<10x32xf32>, vector<32x1827xf32>, vector<10x1827xf32> -> vector<10x1827xf32>
    %c0_22 = arith.constant 0 : index
    %c0_23 = arith.constant 0 : index
    %64 = vector.load %arg9[%c0_22, %c0_23] : memref<10x1xf32, #tpu.memory_space<vmem>>, vector<10x1xf32>
    %65 = vector.broadcast %64 : vector<10x1xf32> to vector<10x1827xf32>
    %66 = arith.addf %63, %65 : vector<10x1827xf32>
    %cst_24 = arith.constant 0.000000e+00 : f32
    %67 = vector.broadcast %cst_24 : f32 to vector<10x1827xf32>
    %68 = arith.maximumf %66, %67 : vector<10x1827xf32>
    %c0_25 = arith.constant 0 : index
    %c0_26 = arith.constant 0 : index
    %c0_27 = arith.constant 0 : index
    %69 = vector.load %arg10[%c0_25, %c0_26, %c0_27] : memref<1x10x1827xf32, #tpu.memory_space<vmem>>, vector<1x10x1827xf32>
    %70 = vector.shape_cast %69 : vector<1x10x1827xf32> to vector<10x1827xf32>
    %71 = vector.shape_cast %68 : vector<10x1827xf32> to vector<1x10x1827xf32>
    tpu.vector_store %arg10[%c0_25, %c0_26, %c0_27], %71 {strides = array<i32>} : memref<1x10x1827xf32, #tpu.memory_space<vmem>>, vector<1x10x1827xf32>,
    return
  }
  func.func @transform_0(%arg0: i32) -> (i32, i32, i32) {
    %c0_i32 = arith.constant 0 : i32
    %c0_i32_0 = arith.constant 0 : i32
    %c0_i32_1 = arith.constant 0 : i32
    return %arg0, %c0_i32, %c0_i32_0 : i32, i32, i32
  }
  func.func @transform_1(%arg0: i32) -> (i32, i32) {
    %c0_i32 = arith.constant 0 : i32
    %c0_i32_0 = arith.constant 0 : i32
    %c0_i32_1 = arith.constant 0 : i32
    return %c0_i32, %c0_i32_0 : i32, i32
  }
  func.func @transform_2(%arg0: i32) -> (i32, i32) {
    %c0_i32 = arith.constant 0 : i32
    %c0_i32_0 = arith.constant 0 : i32
    %c0_i32_1 = arith.constant 0 : i32
    return %c0_i32, %c0_i32_0 : i32, i32
  }
  func.func @transform_3(%arg0: i32) -> (i32, i32) {
    %c0_i32 = arith.constant 0 : i32
    %c0_i32_0 = arith.constant 0 : i32
    %c0_i32_1 = arith.constant 0 : i32
    return %c0_i32, %c0_i32_0 : i32, i32
  }
  func.func @transform_4(%arg0: i32) -> (i32, i32) {
    %c0_i32 = arith.constant 0 : i32
    %c0_i32_0 = arith.constant 0 : i32
    %c0_i32_1 = arith.constant 0 : i32
    return %c0_i32, %c0_i32_0 : i32, i32
  }
  func.func @transform_5(%arg0: i32) -> (i32, i32) {
    %c0_i32 = arith.constant 0 : i32
    %c0_i32_0 = arith.constant 0 : i32
    %c0_i32_1 = arith.constant 0 : i32
    return %c0_i32, %c0_i32_0 : i32, i32
  }
  func.func @transform_6(%arg0: i32) -> (i32, i32) {
    %c0_i32 = arith.constant 0 : i32
    %c0_i32_0 = arith.constant 0 : i32
    %c0_i32_1 = arith.constant 0 : i32
    return %c0_i32, %c0_i32_0 : i32, i32
  }
  func.func @transform_7(%arg0: i32) -> (i32, i32) {
    %c0_i32 = arith.constant 0 : i32
    %c0_i32_0 = arith.constant 0 : i32
    %c0_i32_1 = arith.constant 0 : i32
    return %c0_i32, %c0_i32_0 : i32, i32
  }
  func.func @transform_8(%arg0: i32) -> (i32, i32) {
    %c0_i32 = arith.constant 0 : i32
    %c0_i32_0 = arith.constant 0 : i32
    %c0_i32_1 = arith.constant 0 : i32
    return %c0_i32, %c0_i32_0 : i32, i32
  }
  func.func @transform_9(%arg0: i32) -> (i32, i32, i32) {
    %c0_i32 = arith.constant 0 : i32
    %c0_i32_0 = arith.constant 0 : i32
    %c0_i32_1 = arith.constant 0 : i32
    return %arg0, %c0_i32, %c0_i32_0 : i32, i32, i32
  }
}

</mosaic_0001>

<llo_original>
// kernel: cnn_forward.1
$region0: #{cnn_forward.1}
  #allocation0 [shape = 'u32[]', space=smem, size = 0x4, offset = 0x4, fixed_abs, tag = 'smem constant byte address 0x4 - core index']
  #allocation1 [shape = 'u32[144,128]{1,0:T(1,128)}', space=vmem, size = 0x12000, scoped, tag = 'internal scratch']
  %s0 = inlined_call_operand.vmem [shape: f32[2,4,2048], index: 0, kind: input, shape index: {}]
  %s1 = inlined_call_operand.vmem [shape: f32[8,36], index: 1, kind: input, shape index: {}]
  %s2 = inlined_call_operand.vmem [shape: f32[8,1], index: 2, kind: input, shape index: {}]
  %s3 = inlined_call_operand.vmem [shape: f32[16,72], index: 3, kind: input, shape index: {}]
  %s4 = inlined_call_operand.vmem [shape: f32[16,1], index: 4, kind: input, shape index: {}]
  %s5 = inlined_call_operand.vmem [shape: f32[32,64], index: 5, kind: input, shape index: {}]
  %s6 = inlined_call_operand.vmem [shape: f32[32,1], index: 6, kind: input, shape index: {}]
  %s7 = inlined_call_operand.vmem [shape: f32[10,32], index: 7, kind: input, shape index: {}]
  %s8 = inlined_call_operand.vmem [shape: f32[10,1], index: 8, kind: input, shape index: {}]
  %s9 = inlined_call_operand.vmem [shape: f32[2,10,1827], index: 9, kind: output, shape index: {}]
  %s10 = sld [smem:[#allocation0]]
  $region69: #{cnn_forward.1} parent=0
    _
  %s12 = ssub.s32 1, %s10
  %s13 = scalar_select 0, %s12, %s10
  loop: start=0, step=1, limit=4
  $region2: #{cnn_forward.1} parent=0 // loop_pre_header
    _
  $region3: #{cnn_forward.1} parent=0 // loop_header
    %s15 = sphi 0, %s19
    %p16 = scmp.ge.s32.totalorder %s15, 4
    %s25 = sphi 0, %s27
    %s28 = sphi 0, %s25
    %s29 = sphi 0, %s28
    %s45 = sphi 0, %s29
    %s49 = sphi 0, %s49
    %s51 = sphi 0, %s49
    %s52 = sphi 0, %s51
    %s66 = sphi 0, %s52
    %s70 = sphi 0, %s70
    %s72 = sphi 0, %s70
    %s73 = sphi 0, %s72
    %s87 = sphi 0, %s73
    %s91 = sphi 0, %s91
    %s93 = sphi 0, %s91
    %s94 = sphi 0, %s93
    %s108 = sphi 0, %s94
    %s112 = sphi 0, %s112
    %s114 = sphi 0, %s112
    %s115 = sphi 0, %s114
    %s129 = sphi 0, %s115
    %s133 = sphi 0, %s133
    %s135 = sphi 0, %s133
    %s136 = sphi 0, %s135
    %s150 = sphi 0, %s136
    %s154 = sphi 0, %s154
    %s156 = sphi 0, %s154
    %s157 = sphi 0, %s156
    %s171 = sphi 0, %s157
    %s175 = sphi 0, %s175
    %s177 = sphi 0, %s175
    %s178 = sphi 0, %s177
    %s192 = sphi 0, %s178
    %s196 = sphi 0, %s196
    %s198 = sphi 0, %s196
    %s199 = sphi 0, %s198
    %s213 = sphi 0, %s199
    %s219 = sphi 0, %s221
    %s222 = sphi 0, %s219
    %s223 = sphi 0, %s222
    %s239 = sphi 0, %s223
  $region4: #{cnn_forward.1} parent=0 // loop_header_branch
    %18 = sbr.rel (%p16) target = $region8
  $region5: #{cnn_forward.1} parent=0 // loop_body
    %s20 = ssub.s32 %s15, 1
    %s21 = ssub.s32 %s15, 2
    %s22 = sadd.s32 %s15, 1
    %s23 = ssub.s32 %s15, %s22
    %p24 = scmp.eq.s32.totalorder %s23, 0
    %s26 = sadd.s32 %s25, 1
    %s27 = scalar_select %p24, %s25, %s26
    %p30 = pneg %p24
    %p31 = scmp.eq.s32.totalorder %s15, 1
    %p32 = por %p30, %p31
    %p33 = scmp.ne.s32.totalorder %s25, %s28
    %p34 = scmp.eq.s32.totalorder %s15, 0
    %p35 = por %p33, %p34
    %p36 = scmp.ne.s32.totalorder %s25, %s28
    %p37 = scmp.eq.s32.totalorder %s20, 1
    %p38 = por %p36, %p37
    %p39 = scmp.ne.s32.totalorder %s28, %s29
    %p40 = scmp.eq.s32.totalorder %s20, 0
    %p41 = por %p39, %p40
    %p42 = scmp.ne.s32.totalorder %s28, %s29
    %p43 = scmp.eq.s32.totalorder %s21, 1
    %p44 = por %p42, %p43
    %p46 = scmp.ne.s32.totalorder %s29, %s45
    %p47 = scmp.eq.s32.totalorder %s21, 0
    %p48 = por %p46, %p47
    %s50 = sadd.s32 %s49, 1
    %p53 = scmp.eq.s32.totalorder %s15, 1
    %p54 = scmp.ne.s32.totalorder %s49, %s51
    %p55 = scmp.eq.s32.totalorder %s15, 0
    %p56 = por %p54, %p55
    %p57 = scmp.ne.s32.totalorder %s49, %s51
    %p58 = scmp.eq.s32.totalorder %s20, 1
    %p59 = por %p57, %p58
    %p60 = scmp.ne.s32.totalorder %s51, %s52
    %p61 = scmp.eq.s32.totalorder %s20, 0
    %p62 = por %p60, %p61
    %p63 = scmp.ne.s32.totalorder %s51, %s52
    %p64 = scmp.eq.s32.totalorder %s21, 1
    %p65 = por %p63, %p64
    %p67 = scmp.ne.s32.totalorder %s52, %s66
    %p68 = scmp.eq.s32.totalorder %s21, 0
    %p69 = por %p67, %p68
    %s71 = sadd.s32 %s70, 1
    %p74 = scmp.eq.s32.totalorder %s15, 1
    %p75 = scmp.ne.s32.totalorder %s70, %s72
    %p76 = scmp.eq.s32.totalorder %s15, 0
    %p77 = por %p75, %p76
    %p78 = scmp.ne.s32.totalorder %s70, %s72
    %p79 = scmp.eq.s32.totalorder %s20, 1
    %p80 = por %p78, %p79
    %p81 = scmp.ne.s32.totalorder %s72, %s73
    %p82 = scmp.eq.s32.totalorder %s20, 0
    %p83 = por %p81, %p82
    %p84 = scmp.ne.s32.totalorder %s72, %s73
    %p85 = scmp.eq.s32.totalorder %s21, 1
    %p86 = por %p84, %p85
    %p88 = scmp.ne.s32.totalorder %s73, %s87
    %p89 = scmp.eq.s32.totalorder %s21, 0
    %p90 = por %p88, %p89
    %s92 = sadd.s32 %s91, 1
    %p95 = scmp.eq.s32.totalorder %s15, 1
    %p96 = scmp.ne.s32.totalorder %s91, %s93
    %p97 = scmp.eq.s32.totalorder %s15, 0
    %p98 = por %p96, %p97
    %p99 = scmp.ne.s32.totalorder %s91, %s93
    %p100 = scmp.eq.s32.totalorder %s20, 1
    %p101 = por %p99, %p100
    %p102 = scmp.ne.s32.totalorder %s93, %s94
    %p103 = scmp.eq.s32.totalorder %s20, 0
    %p104 = por %p102, %p103
    %p105 = scmp.ne.s32.totalorder %s93, %s94
    %p106 = scmp.eq.s32.totalorder %s21, 1
    %p107 = por %p105, %p106
    %p109 = scmp.ne.s32.totalorder %s94, %s108
    %p110 = scmp.eq.s32.totalorder %s21, 0
    %p111 = por %p109, %p110
    %s113 = sadd.s32 %s112, 1
    %p116 = scmp.eq.s32.totalorder %s15, 1
    %p117 = scmp.ne.s32.totalorder %s112, %s114
    %p118 = scmp.eq.s32.totalorder %s15, 0
    %p119 = por %p117, %p118
    %p120 = scmp.ne.s32.totalorder %s112, %s114
    %p121 = scmp.eq.s32.totalorder %s20, 1
    %p122 = por %p120, %p121
    %p123 = scmp.ne.s32.totalorder %s114, %s115
    %p124 = scmp.eq.s32.totalorder %s20, 0
    %p125 = por %p123, %p124
    %p126 = scmp.ne.s32.totalorder %s114, %s115
    %p127 = scmp.eq.s32.totalorder %s21, 1
    %p128 = por %p126, %p127
    %p130 = scmp.ne.s32.totalorder %s115, %s129
    %p131 = scmp.eq.s32.totalorder %s21, 0
    %p132 = por %p130, %p131
    %s134 = sadd.s32 %s133, 1
    %p137 = scmp.eq.s32.totalorder %s15, 1
    %p138 = scmp.ne.s32.totalorder %s133, %s135
    %p139 = scmp.eq.s32.totalorder %s15, 0
    %p140 = por %p138, %p139
    %p141 = scmp.ne.s32.totalorder %s133, %s135
    %p142 = scmp.eq.s32.totalorder %s20, 1
    %p143 = por %p141, %p142
    %p144 = scmp.ne.s32.totalorder %s135, %s136
    %p145 = scmp.eq.s32.totalorder %s20, 0
    %p146 = por %p144, %p145
    %p147 = scmp.ne.s32.totalorder %s135, %s136
    %p148 = scmp.eq.s32.totalorder %s21, 1
    %p149 = por %p147, %p148
    %p151 = scmp.ne.s32.totalorder %s136, %s150
    %p152 = scmp.eq.s32.totalorder %s21, 0
    %p153 = por %p151, %p152
    %s155 = sadd.s32 %s154, 1
    %p158 = scmp.eq.s32.totalorder %s15, 1
    %p159 = scmp.ne.s32.totalorder %s154, %s156
    %p160 = scmp.eq.s32.totalorder %s15, 0
    %p161 = por %p159, %p160
    %p162 = scmp.ne.s32.totalorder %s154, %s156
    %p163 = scmp.eq.s32.totalorder %s20, 1
    %p164 = por %p162, %p163
    %p165 = scmp.ne.s32.totalorder %s156, %s157
    %p166 = scmp.eq.s32.totalorder %s20, 0
    %p167 = por %p165, %p166
    %p168 = scmp.ne.s32.totalorder %s156, %s157
    %p169 = scmp.eq.s32.totalorder %s21, 1
    %p170 = por %p168, %p169
    %p172 = scmp.ne.s32.totalorder %s157, %s171
    %p173 = scmp.eq.s32.totalorder %s21, 0
    %p174 = por %p172, %p173
    %s176 = sadd.s32 %s175, 1
    %p179 = scmp.eq.s32.totalorder %s15, 1
    %p180 = scmp.ne.s32.totalorder %s175, %s177
    %p181 = scmp.eq.s32.totalorder %s15, 0
    %p182 = por %p180, %p181
    %p183 = scmp.ne.s32.totalorder %s175, %s177
    %p184 = scmp.eq.s32.totalorder %s20, 1
    %p185 = por %p183, %p184
    %p186 = scmp.ne.s32.totalorder %s177, %s178
    %p187 = scmp.eq.s32.totalorder %s20, 0
    %p188 = por %p186, %p187
    %p189 = scmp.ne.s32.totalorder %s177, %s178
    %p190 = scmp.eq.s32.totalorder %s21, 1
    %p191 = por %p189, %p190
    %p193 = scmp.ne.s32.totalorder %s178, %s192
    %p194 = scmp.eq.s32.totalorder %s21, 0
    %p195 = por %p193, %p194
    %s197 = sadd.s32 %s196, 1
    %p200 = scmp.eq.s32.totalorder %s15, 1
    %p201 = scmp.ne.s32.totalorder %s196, %s198
    %p202 = scmp.eq.s32.totalorder %s15, 0
    %p203 = por %p201, %p202
    %p204 = scmp.ne.s32.totalorder %s196, %s198
    %p205 = scmp.eq.s32.totalorder %s20, 1
    %p206 = por %p204, %p205
    %p207 = scmp.ne.s32.totalorder %s198, %s199
    %p208 = scmp.eq.s32.totalorder %s20, 0
    %p209 = por %p207, %p208
    %p210 = scmp.ne.s32.totalorder %s198, %s199
    %p211 = scmp.eq.s32.totalorder %s21, 1
    %p212 = por %p210, %p211
    %p214 = scmp.ne.s32.totalorder %s199, %s213
    %p215 = scmp.eq.s32.totalorder %s21, 0
    %p216 = por %p214, %p215
    %s217 = ssub.s32 %s15, %s22
    %p218 = scmp.eq.s32.totalorder %s217, 0
    %s220 = sadd.s32 %s219, 1
    %s221 = scalar_select %p218, %s219, %s220
    %p224 = pneg %p218
    %p225 = scmp.eq.s32.totalorder %s15, 1
    %p226 = por %p224, %p225
    %p227 = scmp.ne.s32.totalorder %s219, %s222
    %p228 = scmp.eq.s32.totalorder %s15, 0
    %p229 = por %p227, %p228
    %p230 = scmp.ne.s32.totalorder %s219, %s222
    %p231 = scmp.eq.s32.totalorder %s20, 1
    %p232 = por %p230, %p231
    %p233 = scmp.ne.s32.totalorder %s222, %s223
    %p234 = scmp.eq.s32.totalorder %s20, 0
    %p235 = por %p233, %p234
    %p236 = scmp.ne.s32.totalorder %s222, %s223
    %p237 = scmp.eq.s32.totalorder %s21, 1
    %p238 = por %p236, %p237
    %p240 = scmp.ne.s32.totalorder %s223, %s239
    %p241 = scmp.eq.s32.totalorder %s21, 0
    %p242 = por %p240, %p241
    %p243 = scmp.le.s32.totalorder 1, %s15
    %p244 = scmp.lt.s32.totalorder %s15, 3
    %p245 = pnand %p243, %p244
    %p246 = pneg %p245
    // Predicated region
    $region9: #{cnn_forward.1} parent=5 // pred_check
      _
    $region10: #{cnn_forward.1} parent=5 // pred_check_branch
      %248 = sbr.rel (%p245) target = $region12
    $region11: #{cnn_forward.1} parent=5 // pred_region
      %s249 = ssub.s32 %s15, 1
      // Predicated region
      $region13: #{cnn_forward.1} parent=11 // pred_check
        %p250 = pneg %p62
      $region14: #{cnn_forward.1} parent=11 // pred_check_branch
        %252 = sbr.rel (%p250) target = $region16
      $region15: #{cnn_forward.1} parent=11 // pred_region
        _
      $region16: #{cnn_forward.1} parent=11 // pred_fallthru
        _
      // Predicated region
      $region17: #{cnn_forward.1} parent=11 // pred_check
        %p253 = pneg %p83
      $region18: #{cnn_forward.1} parent=11 // pred_check_branch
        %255 = sbr.rel (%p253) target = $region20
      $region19: #{cnn_forward.1} parent=11 // pred_region
        _
      $region20: #{cnn_forward.1} parent=11 // pred_fallthru
        _
      // Predicated region
      $region21: #{cnn_forward.1} parent=11 // pred_check
        %p256 = pneg %p104
      $region22: #{cnn_forward.1} parent=11 // pred_check_branch
        %258 = sbr.rel (%p256) target = $region24
      $region23: #{cnn_forward.1} parent=11 // pred_region
        _
      $region24: #{cnn_forward.1} parent=11 // pred_fallthru
        _
      // Predicated region
      $region25: #{cnn_forward.1} parent=11 // pred_check
        %p259 = pneg %p125
      $region26: #{cnn_forward.1} parent=11 // pred_check_branch
        %261 = sbr.rel (%p259) target = $region28
      $region27: #{cnn_forward.1} parent=11 // pred_region
        _
      $region28: #{cnn_forward.1} parent=11 // pred_fallthru
        _
      // Predicated region
      $region29: #{cnn_forward.1} parent=11 // pred_check
        %p262 = pneg %p146
      $region30: #{cnn_forward.1} parent=11 // pred_check_branch
        %264 = sbr.rel (%p262) target = $region32
      $region31: #{cnn_forward.1} parent=11 // pred_region
        _
      $region32: #{cnn_forward.1} parent=11 // pred_fallthru
        _
      // Predicated region
      $region33: #{cnn_forward.1} parent=11 // pred_check
        %p265 = pneg %p167
      $region34: #{cnn_forward.1} parent=11 // pred_check_branch
        %267 = sbr.rel (%p265) target = $region36
      $region35: #{cnn_forward.1} parent=11 // pred_region
        _
      $region36: #{cnn_forward.1} parent=11 // pred_fallthru
        _
      // Predicated region
      $region37: #{cnn_forward.1} parent=11 // pred_check
        %p268 = pneg %p188
      $region38: #{cnn_forward.1} parent=11 // pred_check_branch
        %270 = sbr.rel (%p268) target = $region40
      $region39: #{cnn_forward.1} parent=11 // pred_region
        _
      $region40: #{cnn_forward.1} parent=11 // pred_fallthru
        _
      // Predicated region
      $region41: #{cnn_forward.1} parent=11 // pred_check
        %p271 = pneg %p209
      $region42: #{cnn_forward.1} parent=11 // pred_check_branch
        %273 = sbr.rel (%p271) target = $region44
      $region43: #{cnn_forward.1} parent=11 // pred_region
        _
      $region44: #{cnn_forward.1} parent=11 // pred_fallthru
        _
    $region12: #{cnn_forward.1} parent=5 // pred_fallthru
      _
    %p274 = scmp.lt.s32.totalorder %s15, 2
    // Predicated region
    $region45: #{cnn_forward.1} parent=5 // pred_check
      %p275 = pneg %p274
    $region46: #{cnn_forward.1} parent=5 // pred_check_branch
      %277 = sbr.rel (%p275) target = $region48
    $region47: #{cnn_forward.1} parent=5 // pred_region
      // Predicated region
      $region49: #{cnn_forward.1} parent=47 // pred_check
        %p278 = pneg %p35
      $region50: #{cnn_forward.1} parent=47 // pred_check_branch
        %280 = sbr.rel (%p278) target = $region52
      $region51: #{cnn_forward.1} parent=47 // pred_region
        %p281 = scmp.lt.s32.totalorder %s15, 1
        %s282 = scalar_select %p281, %s15, 1
        %s283 = smul.addr %s282, 16
        %s284 = smul.addr %s283, 4
        %s285 = scalar_lea.vmem %s0, %s284
      $region52: #{cnn_forward.1} parent=47 // pred_fallthru
        _
    $region48: #{cnn_forward.1} parent=5 // pred_fallthru
      _
    %p286 = scmp.le.s32.totalorder 1, %s15
    %p287 = scmp.lt.s32.totalorder %s15, 3
    %p288 = pnand %p286, %p287
    %p289 = pneg %p288
    // Predicated region
    $region53: #{cnn_forward.1} parent=5 // pred_check
      _
    $region54: #{cnn_forward.1} parent=5 // pred_check_branch
      %291 = sbr.rel (%p288) target = $region56
    $region55: #{cnn_forward.1} parent=5 // pred_region
      %s292 = ssub.s32 %s15, 1
      %p293 = scmp.lt.s32.totalorder %s20, 1
      %s294 = scalar_select %p293, %s20, 1
      %s295 = smul.addr %s294, 16
      %s296 = smul.addr %s295, 4
      %s297 = scalar_lea.vmem %s0, %s296
      %p298 = pneg %p41
      %p299 = pneg %p38
      %p300 = pneg %p62
      %p301 = pneg %p59
      %p302 = pneg %p83
      %p303 = pneg %p80
      %p304 = pneg %p104
      %p305 = pneg %p101
      %p306 = pneg %p125
      %p307 = pneg %p122
      %p308 = pneg %p146
      %p309 = pneg %p143
      %p310 = pneg %p167
      %p311 = pneg %p164
      %p312 = pneg %p188
      %p313 = pneg %p185
      %p314 = pneg %p209
      %p315 = pneg %p206
      %p316 = pneg %p235
      %p317 = pneg %p232
      %p318 = scmp.lt.s32.totalorder %s20, 1
      %s319 = scalar_select %p318, %s20, 1
      %s320 = smul.addr %s319, 30
      %s321 = smul.addr %s320, 8
      %s322 = scalar_lea.vmem %s9, %s321
      %p323 = scmp.lt.s32.totalorder %s20, 1
      %s324 = scalar_select %p323, %s20, 1
      %s325 = smul.addr %s324, 16
      %s326 = smul.addr %s325, 4
      %s327 = scalar_lea.vmem %s0, %s326
      %p328 = scmp.lt.s32.totalorder %s20, 1
      %s329 = scalar_select %p328, %s20, 1
      %s330 = smul.addr %s329, 30
      %s331 = smul.addr %s330, 8
      %s332 = scalar_lea.vmem %s9, %s331
      %v333 = vld [vmem:[%s327] sm:$0xff]
      %v334 = vld [vmem:[%s327 + $0x8] sm:$0xff]
      %v335 = vld [vmem:[%s327 + $0x10] sm:$0xff]
      %v336 = vld [vmem:[%s327 + $0x18] sm:$0xff]
      %v337 = vld [vmem:[%s327 + $0x20] sm:$0xff]
      %v338 = vld [vmem:[%s327 + $0x28] sm:$0xff]
      %v339 = vld [vmem:[%s327 + $0x30] sm:$0xff]
      %v340 = vld [vmem:[%s327 + $0x38] sm:$0xff]
      %v349 = vcombine.high %v333, %v333
      %v350 = vcombine.high %v334, %v334
      %v351 = vcombine.high %v335, %v335
      %v352 = vcombine.high %v336, %v336
      %v353 = vcombine.high %v337, %v337
      %v354 = vcombine.high %v338, %v338
      %v355 = vcombine.high %v339, %v339
      %v356 = vcombine.high %v340, %v340
      %v365 = vcombine.low %v333, %v333
      %v366 = vcombine.low %v334, %v334
      %v367 = vcombine.low %v335, %v335
      %v368 = vcombine.low %v336, %v336
      %v369 = vcombine.low %v337, %v337
      %v370 = vcombine.low %v338, %v338
      %v371 = vcombine.low %v339, %v339
      %v372 = vcombine.low %v340, %v340
      %373 = vrot.lane.b32.xlu0 %v365, 127
      %v374 = vpop.permute.xlu0 %373
      %375 = vrot.lane.b32.xlu0 %v333, 127
      %v376 = vpop.permute.xlu0 %375
      %377 = vrot.lane.b32.xlu0 %v366, 127
      %v378 = vpop.permute.xlu0 %377
      %379 = vrot.lane.b32.xlu0 %v334, 127
      %v380 = vpop.permute.xlu0 %379
      %381 = vrot.lane.b32.xlu0 %v367, 127
      %v382 = vpop.permute.xlu0 %381
      %383 = vrot.lane.b32.xlu0 %v335, 127
      %v384 = vpop.permute.xlu0 %383
      %385 = vrot.lane.b32.xlu0 %v368, 127
      %v386 = vpop.permute.xlu0 %385
      %387 = vrot.lane.b32.xlu0 %v336, 127
      %v388 = vpop.permute.xlu0 %387
      %389 = vrot.lane.b32.xlu0 %v369, 127
      %v390 = vpop.permute.xlu0 %389
      %391 = vrot.lane.b32.xlu0 %v337, 127
      %v392 = vpop.permute.xlu0 %391
      %393 = vrot.lane.b32.xlu0 %v370, 127
      %v394 = vpop.permute.xlu0 %393
      %395 = vrot.lane.b32.xlu0 %v338, 127
      %v396 = vpop.permute.xlu0 %395
      %397 = vrot.lane.b32.xlu0 %v371, 127
      %v398 = vpop.permute.xlu0 %397
      %399 = vrot.lane.b32.xlu0 %v339, 127
      %v400 = vpop.permute.xlu0 %399
      %401 = vrot.lane.b32.xlu0 %v372, 127
      %v402 = vpop.permute.xlu0 %401
      %403 = vrot.lane.b32.xlu0 %v340, 127
      %v404 = vpop.permute.xlu0 %403
      %vm405 = vcmask 1039360
      %v406 = vsel %vm405, %v374, %v376
      %v407 = vsel %vm405, %v376, %v378
      %v408 = vsel %vm405, %v378, %v380
      %v409 = vsel %vm405, %v380, %v382
      %v410 = vsel %vm405, %v382, %v384
      %v411 = vsel %vm405, %v384, %v386
      %v412 = vsel %vm405, %v386, %v388
      %v413 = vsel %vm405, %v388, %v390
      %v414 = vsel %vm405, %v390, %v392
      %v415 = vsel %vm405, %v392, %v394
      %v416 = vsel %vm405, %v394, %v396
      %v417 = vsel %vm405, %v396, %v398
      %v418 = vsel %vm405, %v398, %v400
      %v419 = vsel %vm405, %v400, %v402
      %v420 = vsel %vm405, %v402, %v404
      %437 = vrot.lane.b32.xlu0 %v333, 126
      %v438 = vpop.permute.xlu0 %437
      %439 = vrot.lane.b32.xlu0 %v349, 126
      %v440 = vpop.permute.xlu0 %439
      %441 = vrot.lane.b32.xlu0 %v334, 126
      %v442 = vpop.permute.xlu0 %441
      %443 = vrot.lane.b32.xlu0 %v350, 126
      %v444 = vpop.permute.xlu0 %443
      %445 = vrot.lane.b32.xlu0 %v335, 126
      %v446 = vpop.permute.xlu0 %445
      %447 = vrot.lane.b32.xlu0 %v351, 126
      %v448 = vpop.permute.xlu0 %447
      %449 = vrot.lane.b32.xlu0 %v336, 126
      %v450 = vpop.permute.xlu0 %449
      %451 = vrot.lane.b32.xlu0 %v352, 126
      %v452 = vpop.permute.xlu0 %451
      %453 = vrot.lane.b32.xlu0 %v337, 126
      %v454 = vpop.permute.xlu0 %453
      %455 = vrot.lane.b32.xlu0 %v353, 126
      %v456 = vpop.permute.xlu0 %455
      %457 = vrot.lane.b32.xlu0 %v338, 126
      %v458 = vpop.permute.xlu0 %457
      %459 = vrot.lane.b32.xlu0 %v354, 126
      %v460 = vpop.permute.xlu0 %459
      %461 = vrot.lane.b32.xlu0 %v339, 126
      %v462 = vpop.permute.xlu0 %461
      %463 = vrot.lane.b32.xlu0 %v355, 126
      %v464 = vpop.permute.xlu0 %463
      %465 = vrot.lane.b32.xlu0 %v340, 126
      %v466 = vpop.permute.xlu0 %465
      %467 = vrot.lane.b32.xlu0 %v356, 126
      %v468 = vpop.permute.xlu0 %467
      %vm469 = vcmask 1031168
      %v470 = vsel %vm469, %v438, %v440
      %v471 = vsel %vm469, %v440, %v442
      %v472 = vsel %vm469, %v442, %v444
      %v473 = vsel %vm469, %v444, %v446
      %v474 = vsel %vm469, %v446, %v448
      %v475 = vsel %vm469, %v448, %v450
      %v476 = vsel %vm469, %v450, %v452
      %v477 = vsel %vm469, %v452, %v454
      %v478 = vsel %vm469, %v454, %v456
      %v479 = vsel %vm469, %v456, %v458
      %v480 = vsel %vm469, %v458, %v460
      %v481 = vsel %vm469, %v460, %v462
      %v482 = vsel %vm469, %v462, %v464
      %v483 = vsel %vm469, %v464, %v466
      %v484 = vsel %vm469, %v466, %v468
      %501 = vrot.lane.b32.xlu0 %v365, 112
      %v502 = vpop.permute.xlu0 %501
      %503 = vrot.lane.b32.xlu0 %v333, 112
      %v504 = vpop.permute.xlu0 %503
      %505 = vrot.lane.b32.xlu0 %v366, 112
      %v506 = vpop.permute.xlu0 %505
      %507 = vrot.lane.b32.xlu0 %v334, 112
      %v508 = vpop.permute.xlu0 %507
      %509 = vrot.lane.b32.xlu0 %v367, 112
      %v510 = vpop.permute.xlu0 %509
      %511 = vrot.lane.b32.xlu0 %v335, 112
      %v512 = vpop.permute.xlu0 %511
      %513 = vrot.lane.b32.xlu0 %v368, 112
      %v514 = vpop.permute.xlu0 %513
      %515 = vrot.lane.b32.xlu0 %v336, 112
      %v516 = vpop.permute.xlu0 %515
      %517 = vrot.lane.b32.xlu0 %v369, 112
      %v518 = vpop.permute.xlu0 %517
      %519 = vrot.lane.b32.xlu0 %v337, 112
      %v520 = vpop.permute.xlu0 %519
      %521 = vrot.lane.b32.xlu0 %v370, 112
      %v522 = vpop.permute.xlu0 %521
      %523 = vrot.lane.b32.xlu0 %v338, 112
      %v524 = vpop.permute.xlu0 %523
      %525 = vrot.lane.b32.xlu0 %v371, 112
      %v526 = vpop.permute.xlu0 %525
      %527 = vrot.lane.b32.xlu0 %v339, 112
      %v528 = vpop.permute.xlu0 %527
      %529 = vrot.lane.b32.xlu0 %v372, 112
      %v530 = vpop.permute.xlu0 %529
      %531 = vrot.lane.b32.xlu0 %v340, 112
      %v532 = vpop.permute.xlu0 %531
      %vm533 = vcmask 916480
      %v534 = vsel %vm533, %v502, %v504
      %v535 = vsel %vm533, %v504, %v506
      %v536 = vsel %vm533, %v506, %v508
      %v537 = vsel %vm533, %v508, %v510
      %v538 = vsel %vm533, %v510, %v512
      %v539 = vsel %vm533, %v512, %v514
      %v540 = vsel %vm533, %v514, %v516
      %v541 = vsel %vm533, %v516, %v518
      %v542 = vsel %vm533, %v518, %v520
      %v543 = vsel %vm533, %v520, %v522
      %v544 = vsel %vm533, %v522, %v524
      %v545 = vsel %vm533, %v524, %v526
      %v546 = vsel %vm533, %v526, %v528
      %v547 = vsel %vm533, %v528, %v530
      %v548 = vsel %vm533, %v530, %v532
      %565 = vrot.lane.b32.xlu0 %v333, 111
      %v566 = vpop.permute.xlu0 %565
      %567 = vrot.lane.b32.xlu0 %v349, 111
      %v568 = vpop.permute.xlu0 %567
      %569 = vrot.lane.b32.xlu0 %v334, 111
      %v570 = vpop.permute.xlu0 %569
      %571 = vrot.lane.b32.xlu0 %v350, 111
      %v572 = vpop.permute.xlu0 %571
      %573 = vrot.lane.b32.xlu0 %v335, 111
      %v574 = vpop.permute.xlu0 %573
      %575 = vrot.lane.b32.xlu0 %v351, 111
      %v576 = vpop.permute.xlu0 %575
      %577 = vrot.lane.b32.xlu0 %v336, 111
      %v578 = vpop.permute.xlu0 %577
      %579 = vrot.lane.b32.xlu0 %v352, 111
      %v580 = vpop.permute.xlu0 %579
      %581 = vrot.lane.b32.xlu0 %v337, 111
      %v582 = vpop.permute.xlu0 %581
      %583 = vrot.lane.b32.xlu0 %v353, 111
      %v584 = vpop.permute.xlu0 %583
      %585 = vrot.lane.b32.xlu0 %v338, 111
      %v586 = vpop.permute.xlu0 %585
      %587 = vrot.lane.b32.xlu0 %v354, 111
      %v588 = vpop.permute.xlu0 %587
      %589 = vrot.lane.b32.xlu0 %v339, 111
      %v590 = vpop.permute.xlu0 %589
      %591 = vrot.lane.b32.xlu0 %v355, 111
      %v592 = vpop.permute.xlu0 %591
      %593 = vrot.lane.b32.xlu0 %v340, 111
      %v594 = vpop.permute.xlu0 %593
      %595 = vrot.lane.b32.xlu0 %v356, 111
      %v596 = vpop.permute.xlu0 %595
      %vm597 = vcmask 908288
      %v598 = vsel %vm597, %v566, %v568
      %v599 = vsel %vm597, %v568, %v570
      %v600 = vsel %vm597, %v570, %v572
      %v601 = vsel %vm597, %v572, %v574
      %v602 = vsel %vm597, %v574, %v576
      %v603 = vsel %vm597, %v576, %v578
      %v604 = vsel %vm597, %v578, %v580
      %v605 = vsel %vm597, %v580, %v582
      %v606 = vsel %vm597, %v582, %v584
      %v607 = vsel %vm597, %v584, %v586
      %v608 = vsel %vm597, %v586, %v588
      %v609 = vsel %vm597, %v588, %v590
      %v610 = vsel %vm597, %v590, %v592
      %v611 = vsel %vm597, %v592, %v594
      %v612 = vsel %vm597, %v594, %v596
      %629 = vrot.lane.b32.xlu0 %v365, 110
      %v630 = vpop.permute.xlu0 %629
      %631 = vrot.lane.b32.xlu0 %v333, 110
      %v632 = vpop.permute.xlu0 %631
      %633 = vrot.lane.b32.xlu0 %v366, 110
      %v634 = vpop.permute.xlu0 %633
      %635 = vrot.lane.b32.xlu0 %v334, 110
      %v636 = vpop.permute.xlu0 %635
      %637 = vrot.lane.b32.xlu0 %v367, 110
      %v638 = vpop.permute.xlu0 %637
      %639 = vrot.lane.b32.xlu0 %v335, 110
      %v640 = vpop.permute.xlu0 %639
      %641 = vrot.lane.b32.xlu0 %v368, 110
      %v642 = vpop.permute.xlu0 %641
      %643 = vrot.lane.b32.xlu0 %v336, 110
      %v644 = vpop.permute.xlu0 %643
      %645 = vrot.lane.b32.xlu0 %v369, 110
      %v646 = vpop.permute.xlu0 %645
      %647 = vrot.lane.b32.xlu0 %v337, 110
      %v648 = vpop.permute.xlu0 %647
      %649 = vrot.lane.b32.xlu0 %v370, 110
      %v650 = vpop.permute.xlu0 %649
      %651 = vrot.lane.b32.xlu0 %v338, 110
      %v652 = vpop.permute.xlu0 %651
      %653 = vrot.lane.b32.xlu0 %v371, 110
      %v654 = vpop.permute.xlu0 %653
      %655 = vrot.lane.b32.xlu0 %v339, 110
      %v656 = vpop.permute.xlu0 %655
      %657 = vrot.lane.b32.xlu0 %v372, 110
      %v658 = vpop.permute.xlu0 %657
      %659 = vrot.lane.b32.xlu0 %v340, 110
      %v660 = vpop.permute.xlu0 %659
      %vm661 = vcmask 900096
      %v662 = vsel %vm661, %v630, %v632
      %v663 = vsel %vm661, %v632, %v634
      %v664 = vsel %vm661, %v634, %v636
      %v665 = vsel %vm661, %v636, %v638
      %v666 = vsel %vm661, %v638, %v640
      %v667 = vsel %vm661, %v640, %v642
      %v668 = vsel %vm661, %v642, %v644
      %v669 = vsel %vm661, %v644, %v646
      %v670 = vsel %vm661, %v646, %v648
      %v671 = vsel %vm661, %v648, %v650
      %v672 = vsel %vm661, %v650, %v652
      %v673 = vsel %vm661, %v652, %v654
      %v674 = vsel %vm661, %v654, %v656
      %v675 = vsel %vm661, %v656, %v658
      %v676 = vsel %vm661, %v658, %v660
      %693 = vrot.lane.b32.xlu0 %v333, 96
      %v694 = vpop.permute.xlu0 %693
      %695 = vrot.lane.b32.xlu0 %v349, 96
      %v696 = vpop.permute.xlu0 %695
      %697 = vrot.lane.b32.xlu0 %v334, 96
      %v698 = vpop.permute.xlu0 %697
      %699 = vrot.lane.b32.xlu0 %v350, 96
      %v700 = vpop.permute.xlu0 %699
      %701 = vrot.lane.b32.xlu0 %v335, 96
      %v702 = vpop.permute.xlu0 %701
      %703 = vrot.lane.b32.xlu0 %v351, 96
      %v704 = vpop.permute.xlu0 %703
      %705 = vrot.lane.b32.xlu0 %v336, 96
      %v706 = vpop.permute.xlu0 %705
      %707 = vrot.lane.b32.xlu0 %v352, 96
      %v708 = vpop.permute.xlu0 %707
      %709 = vrot.lane.b32.xlu0 %v337, 96
      %v710 = vpop.permute.xlu0 %709
      %711 = vrot.lane.b32.xlu0 %v353, 96
      %v712 = vpop.permute.xlu0 %711
      %713 = vrot.lane.b32.xlu0 %v338, 96
      %v714 = vpop.permute.xlu0 %713
      %715 = vrot.lane.b32.xlu0 %v354, 96
      %v716 = vpop.permute.xlu0 %715
      %717 = vrot.lane.b32.xlu0 %v339, 96
      %v718 = vpop.permute.xlu0 %717
      %719 = vrot.lane.b32.xlu0 %v355, 96
      %v720 = vpop.permute.xlu0 %719
      %721 = vrot.lane.b32.xlu0 %v340, 96
      %v722 = vpop.permute.xlu0 %721
      %723 = vrot.lane.b32.xlu0 %v356, 96
      %v724 = vpop.permute.xlu0 %723
      %vm725 = vcmask 785408
      %v726 = vsel %vm725, %v694, %v696
      %v727 = vsel %vm725, %v696, %v698
      %v728 = vsel %vm725, %v698, %v700
      %v729 = vsel %vm725, %v700, %v702
      %v730 = vsel %vm725, %v702, %v704
      %v731 = vsel %vm725, %v704, %v706
      %v732 = vsel %vm725, %v706, %v708
      %v733 = vsel %vm725, %v708, %v710
      %v734 = vsel %vm725, %v710, %v712
      %v735 = vsel %vm725, %v712, %v714
      %v736 = vsel %vm725, %v714, %v716
      %v737 = vsel %vm725, %v716, %v718
      %v738 = vsel %vm725, %v718, %v720
      %v739 = vsel %vm725, %v720, %v722
      %v740 = vsel %vm725, %v722, %v724
      %757 = vrot.lane.b32.xlu0 %v365, 95
      %v758 = vpop.permute.xlu0 %757
      %759 = vrot.lane.b32.xlu0 %v333, 95
      %v760 = vpop.permute.xlu0 %759
      %761 = vrot.lane.b32.xlu0 %v366, 95
      %v762 = vpop.permute.xlu0 %761
      %763 = vrot.lane.b32.xlu0 %v334, 95
      %v764 = vpop.permute.xlu0 %763
      %765 = vrot.lane.b32.xlu0 %v367, 95
      %v766 = vpop.permute.xlu0 %765
      %767 = vrot.lane.b32.xlu0 %v335, 95
      %v768 = vpop.permute.xlu0 %767
      %769 = vrot.lane.b32.xlu0 %v368, 95
      %v770 = vpop.permute.xlu0 %769
      %771 = vrot.lane.b32.xlu0 %v336, 95
      %v772 = vpop.permute.xlu0 %771
      %773 = vrot.lane.b32.xlu0 %v369, 95
      %v774 = vpop.permute.xlu0 %773
      %775 = vrot.lane.b32.xlu0 %v337, 95
      %v776 = vpop.permute.xlu0 %775
      %777 = vrot.lane.b32.xlu0 %v370, 95
      %v778 = vpop.permute.xlu0 %777
      %779 = vrot.lane.b32.xlu0 %v338, 95
      %v780 = vpop.permute.xlu0 %779
      %781 = vrot.lane.b32.xlu0 %v371, 95
      %v782 = vpop.permute.xlu0 %781
      %783 = vrot.lane.b32.xlu0 %v339, 95
      %v784 = vpop.permute.xlu0 %783
      %785 = vrot.lane.b32.xlu0 %v372, 95
      %v786 = vpop.permute.xlu0 %785
      %787 = vrot.lane.b32.xlu0 %v340, 95
      %v788 = vpop.permute.xlu0 %787
      %vm789 = vcmask 777216
      %v790 = vsel %vm789, %v758, %v760
      %v791 = vsel %vm789, %v760, %v762
      %v792 = vsel %vm789, %v762, %v764
      %v793 = vsel %vm789, %v764, %v766
      %v794 = vsel %vm789, %v766, %v768
      %v795 = vsel %vm789, %v768, %v770
      %v796 = vsel %vm789, %v770, %v772
      %v797 = vsel %vm789, %v772, %v774
      %v798 = vsel %vm789, %v774, %v776
      %v799 = vsel %vm789, %v776, %v778
      %v800 = vsel %vm789, %v778, %v780
      %v801 = vsel %vm789, %v780, %v782
      %v802 = vsel %vm789, %v782, %v784
      %v803 = vsel %vm789, %v784, %v786
      %v804 = vsel %vm789, %v786, %v788
      %821 = vrot.lane.b32.xlu0 %v333, 94
      %v822 = vpop.permute.xlu0 %821
      %823 = vrot.lane.b32.xlu0 %v349, 94
      %v824 = vpop.permute.xlu0 %823
      %825 = vrot.lane.b32.xlu0 %v334, 94
      %v826 = vpop.permute.xlu0 %825
      %827 = vrot.lane.b32.xlu0 %v350, 94
      %v828 = vpop.permute.xlu0 %827
      %829 = vrot.lane.b32.xlu0 %v335, 94
      %v830 = vpop.permute.xlu0 %829
      %831 = vrot.lane.b32.xlu0 %v351, 94
      %v832 = vpop.permute.xlu0 %831
      %833 = vrot.lane.b32.xlu0 %v336, 94
      %v834 = vpop.permute.xlu0 %833
      %835 = vrot.lane.b32.xlu0 %v352, 94
      %v836 = vpop.permute.xlu0 %835
      %837 = vrot.lane.b32.xlu0 %v337, 94
      %v838 = vpop.permute.xlu0 %837
      %839 = vrot.lane.b32.xlu0 %v353, 94
      %v840 = vpop.permute.xlu0 %839
      %841 = vrot.lane.b32.xlu0 %v338, 94
      %v842 = vpop.permute.xlu0 %841
      %843 = vrot.lane.b32.xlu0 %v354, 94
      %v844 = vpop.permute.xlu0 %843
      %845 = vrot.lane.b32.xlu0 %v339, 94
      %v846 = vpop.permute.xlu0 %845
      %847 = vrot.lane.b32.xlu0 %v355, 94
      %v848 = vpop.permute.xlu0 %847
      %849 = vrot.lane.b32.xlu0 %v340, 94
      %v850 = vpop.permute.xlu0 %849
      %851 = vrot.lane.b32.xlu0 %v356, 94
      %v852 = vpop.permute.xlu0 %851
      %vm853 = vcmask 769024
      %v854 = vsel %vm853, %v822, %v824
      %v855 = vsel %vm853, %v824, %v826
      %v856 = vsel %vm853, %v826, %v828
      %v857 = vsel %vm853, %v828, %v830
      %v858 = vsel %vm853, %v830, %v832
      %v859 = vsel %vm853, %v832, %v834
      %v860 = vsel %vm853, %v834, %v836
      %v861 = vsel %vm853, %v836, %v838
      %v862 = vsel %vm853, %v838, %v840
      %v863 = vsel %vm853, %v840, %v842
      %v864 = vsel %vm853, %v842, %v844
      %v865 = vsel %vm853, %v844, %v846
      %v866 = vsel %vm853, %v846, %v848
      %v867 = vsel %vm853, %v848, %v850
      %v868 = vsel %vm853, %v850, %v852
      %vm869 = vcmask 1043456
      %v870 = vsel %vm869, %v333, %v406
      %v871 = vsel %vm869, %v349, %v407
      %v872 = vsel %vm869, %v334, %v408
      %v873 = vsel %vm869, %v350, %v409
      %v874 = vsel %vm869, %v335, %v410
      %v875 = vsel %vm869, %v351, %v411
      %v876 = vsel %vm869, %v336, %v412
      %v877 = vsel %vm869, %v352, %v413
      %v878 = vsel %vm869, %v337, %v414
      %v879 = vsel %vm869, %v353, %v415
      %v880 = vsel %vm869, %v338, %v416
      %v881 = vsel %vm869, %v354, %v417
      %v882 = vsel %vm869, %v339, %v418
      %v883 = vsel %vm869, %v355, %v419
      %v884 = vsel %vm869, %v340, %v420
      %v885 = vsel %vm869, %v356, %v404
      %v886 = vsel %vm869, %v470, %v534
      %v887 = vsel %vm869, %v471, %v535
      %v888 = vsel %vm869, %v472, %v536
      %v889 = vsel %vm869, %v473, %v537
      %v890 = vsel %vm869, %v474, %v538
      %v891 = vsel %vm869, %v475, %v539
      %v892 = vsel %vm869, %v476, %v540
      %v893 = vsel %vm869, %v477, %v541
      %v894 = vsel %vm869, %v478, %v542
      %v895 = vsel %vm869, %v479, %v543
      %v896 = vsel %vm869, %v480, %v544
      %v897 = vsel %vm869, %v481, %v545
      %v898 = vsel %vm869, %v482, %v546
      %v899 = vsel %vm869, %v483, %v547
      %v900 = vsel %vm869, %v484, %v548
      %v901 = vsel %vm869, %v468, %v532
      %v902 = vsel %vm869, %v598, %v662
      %v903 = vsel %vm869, %v599, %v663
      %v904 = vsel %vm869, %v600, %v664
      %v905 = vsel %vm869, %v601, %v665
      %v906 = vsel %vm869, %v602, %v666
      %v907 = vsel %vm869, %v603, %v667
      %v908 = vsel %vm869, %v604, %v668
      %v909 = vsel %vm869, %v605, %v669
      %v910 = vsel %vm869, %v606, %v670
      %v911 = vsel %vm869, %v607, %v671
      %v912 = vsel %vm869, %v608, %v672
      %v913 = vsel %vm869, %v609, %v673
      %v914 = vsel %vm869, %v610, %v674
      %v915 = vsel %vm869, %v611, %v675
      %v916 = vsel %vm869, %v612, %v676
      %v917 = vsel %vm869, %v596, %v660
      %v918 = vsel %vm869, %v726, %v790
      %v919 = vsel %vm869, %v727, %v791
      %v920 = vsel %vm869, %v728, %v792
      %v921 = vsel %vm869, %v729, %v793
      %v922 = vsel %vm869, %v730, %v794
      %v923 = vsel %vm869, %v731, %v795
      %v924 = vsel %vm869, %v732, %v796
      %v925 = vsel %vm869, %v733, %v797
      %v926 = vsel %vm869, %v734, %v798
      %v927 = vsel %vm869, %v735, %v799
      %v928 = vsel %vm869, %v736, %v800
      %v929 = vsel %vm869, %v737, %v801
      %v930 = vsel %vm869, %v738, %v802
      %v931 = vsel %vm869, %v739, %v803
      %v932 = vsel %vm869, %v740, %v804
      %v933 = vsel %vm869, %v724, %v788
      %v934 = vld [vmem:[%s1] sm:$0xff]
      %v935 = vld [vmem:[%s2] sm:$0xff]
      %937 = vset.pattern.permute.xlu0 0
      %938 = vperm.xlu0 %937, %v935
      %v939 = vpop.permute.xlu0 %938
      %vm941 = vcmask 293888
      %v943 = vsel %vm941, %v934, 0
      %v945 = vsel %vm869, %v854, 0
      %v947 = vsel %vm869, %v855, 0
      %v949 = vsel %vm869, %v856, 0
      %v951 = vsel %vm869, %v857, 0
      %v953 = vsel %vm869, %v858, 0
      %v955 = vsel %vm869, %v859, 0
      %v957 = vsel %vm869, %v860, 0
      %v959 = vsel %vm869, %v861, 0
      %v961 = vsel %vm869, %v862, 0
      %v963 = vsel %vm869, %v863, 0
      %v965 = vsel %vm869, %v864, 0
      %v967 = vsel %vm869, %v865, 0
      %v969 = vsel %vm869, %v866, 0
      %v971 = vsel %vm869, %v867, 0
      %v973 = vsel %vm869, %v868, 0
      %v975 = vsel %vm869, %v852, 0
      %977 = vmatprep.subr.mxu0 %v871
      %978 = vmatpush1.msra.mxu0 %v870
      %979 = vmatprep.subr.mxu0 %v887
      %980 = vmatpush1.msra.mxu0 %v886
      %981 = vmatprep.subr.mxu0 %v903
      %982 = vmatpush1.msra.mxu0 %v902
      %983 = vmatprep.subr.mxu0 %v919
      %984 = vmatpush1.msra.mxu0 %v918
      %985 = vmatprep.subr.mxu0 %v947
      %986 = vmatpush1.msra.mxu0 %v945
      %987 = vmatprep.subr.mxu0 0.0
      %988 = vmatpush1.msra.mxu0 0.0
      %989 = vmatprep.subr.mxu0 0.0
      %990 = vmatpush1.msra.mxu0 0.0
      %991 = vmatprep.subr.mxu0 0.0
      %992 = vmatpush1.msra.mxu0 0.0
      %993 = vmatprep.subr.mxu0 0.0
      %994 = vmatpush1.msra.mxu0 0.0
      %995 = vmatprep.subr.mxu0 0.0
      %996 = vmatpush1.msra.mxu0 0.0
      %997 = vmatprep.subr.mxu0 0.0
      %998 = vmatpush1.msra.mxu0 0.0
      %999 = vmatprep.subr.mxu0 0.0
      %1000 = vmatpush1.msra.mxu0 0.0
      %1001 = vmatprep.subr.mxu0 0.0
      %1002 = vmatpush1.msra.mxu0 0.0
      %1003 = vmatprep.subr.mxu0 0.0
      %1004 = vmatpush1.msra.mxu0 0.0
      %1005 = vmatprep.subr.mxu0 0.0
      %1006 = vmatpush1.msra.mxu0 0.0
      %1007 = vmatprep.subr.mxu0 0.0
      %1008 = vmatpush1.msra.mxu0 0.0
      %1009 = vmatprep.subr.mxu0 0.0
      %1010 = vmatpush1.msra.mxu0 0.0
      %1011 = vmatprep.subr.mxu0 0.0
      %1012 = vmatpush1.msra.mxu0 0.0
      %1013 = vmatprep.subr.mxu0 0.0
      %1014 = vmatpush1.msra.mxu0 0.0
      %1015 = vmatprep.subr.mxu0 0.0
      %1016 = vmatpush1.msra.mxu0 0.0
      %1017 = vmatprep.subr.mxu0 0.0
      %1018 = vmatpush1.msra.mxu0 0.0
      %1019 = vmatprep.subr.mxu0 0.0
      %1020 = vmatpush1.msra.mxu0 0.0
      %1021 = vmatprep.subr.mxu0 0.0
      %1022 = vmatpush1.msra.mxu0 0.0
      %1023 = vmatprep.subr.mxu0 0.0
      %1024 = vmatpush1.msra.mxu0 0.0
      %1025 = vmatprep.subr.mxu0 0.0
      %1026 = vmatpush1.msra.mxu0 0.0
      %1027 = vmatprep.subr.mxu0 0.0
      %1028 = vmatpush1.msra.mxu0 0.0
      %1029 = vmatprep.subr.mxu0 0.0
      %1030 = vmatpush1.msra.mxu0 0.0
      %1031 = vmatprep.subr.mxu0 0.0
      %1032 = vmatpush1.msra.mxu0 0.0
      %1033 = vmatprep.subr.mxu0 0.0
      %1034 = vmatpush1.msra.mxu0 0.0
      %1035 = vmatprep.subr.mxu0 0.0
      %1036 = vmatpush1.msra.mxu0 0.0
      %1037 = vmatprep.subr.mxu0 0.0
      %1038 = vmatpush1.msra.mxu0 0.0
      %1039 = vmatprep.subr.mxu0 0.0
      %1040 = vmatpush1.msra.mxu0 0.0
      %1041 = vmatprep.mubr.f32.mxu0 0.0
      %1042 = vmatmul.mubr.f32.gmra.mrb[0].mxu0 %v943
      %v1043 = vpop.f32.mrb[0].mxu0
      %v1044 = vadd.f32 %v939, %v1043
      %v1045 = vpop.f32.mrb[0].mxu0
      %v1046 = vadd.f32 %v939, %v1045
      %1047 = vdwg.mxu0
      %1048 = vmatprep.subr.mxu0 %v873
      %1049 = vmatpush1.msra.mxu0 %v872
      %1050 = vmatprep.subr.mxu0 %v889
      %1051 = vmatpush1.msra.mxu0 %v888
      %1052 = vmatprep.subr.mxu0 %v905
      %1053 = vmatpush1.msra.mxu0 %v904
      %1054 = vmatprep.subr.mxu0 %v921
      %1055 = vmatpush1.msra.mxu0 %v920
      %1056 = vmatprep.subr.mxu0 %v951
      %1057 = vmatpush1.msra.mxu0 %v949
      %1058 = vmatprep.subr.mxu0 0.0
      %1059 = vmatpush1.msra.mxu0 0.0
      %1060 = vmatprep.subr.mxu0 0.0
      %1061 = vmatpush1.msra.mxu0 0.0
      %1062 = vmatprep.subr.mxu0 0.0
      %1063 = vmatpush1.msra.mxu0 0.0
      %1064 = vmatprep.subr.mxu0 0.0
      %1065 = vmatpush1.msra.mxu0 0.0
      %1066 = vmatprep.subr.mxu0 0.0
      %1067 = vmatpush1.msra.mxu0 0.0
      %1068 = vmatprep.subr.mxu0 0.0
      %1069 = vmatpush1.msra.mxu0 0.0
      %1070 = vmatprep.subr.mxu0 0.0
      %1071 = vmatpush1.msra.mxu0 0.0
      %1072 = vmatprep.subr.mxu0 0.0
      %1073 = vmatpush1.msra.mxu0 0.0
      %1074 = vmatprep.subr.mxu0 0.0
      %1075 = vmatpush1.msra.mxu0 0.0
      %1076 = vmatprep.subr.mxu0 0.0
      %1077 = vmatpush1.msra.mxu0 0.0
      %1078 = vmatprep.subr.mxu0 0.0
      %1079 = vmatpush1.msra.mxu0 0.0
      %1080 = vmatprep.subr.mxu0 0.0
      %1081 = vmatpush1.msra.mxu0 0.0
      %1082 = vmatprep.subr.mxu0 0.0
      %1083 = vmatpush1.msra.mxu0 0.0
      %1084 = vmatprep.subr.mxu0 0.0
      %1085 = vmatpush1.msra.mxu0 0.0
      %1086 = vmatprep.subr.mxu0 0.0
      %1087 = vmatpush1.msra.mxu0 0.0
      %1088 = vmatprep.subr.mxu0 0.0
      %1089 = vmatpush1.msra.mxu0 0.0
      %1090 = vmatprep.subr.mxu0 0.0
      %1091 = vmatpush1.msra.mxu0 0.0
      %1092 = vmatprep.subr.mxu0 0.0
      %1093 = vmatpush1.msra.mxu0 0.0
      %1094 = vmatprep.subr.mxu0 0.0
      %1095 = vmatpush1.msra.mxu0 0.0
      %1096 = vmatprep.subr.mxu0 0.0
      %1097 = vmatpush1.msra.mxu0 0.0
      %1098 = vmatprep.subr.mxu0 0.0
      %1099 = vmatpush1.msra.mxu0 0.0
      %1100 = vmatprep.subr.mxu0 0.0
      %1101 = vmatpush1.msra.mxu0 0.0
      %1102 = vmatprep.subr.mxu0 0.0
      %1103 = vmatpush1.msra.mxu0 0.0
      %1104 = vmatprep.subr.mxu0 0.0
      %1105 = vmatpush1.msra.mxu0 0.0
      %1106 = vmatprep.subr.mxu0 0.0
      %1107 = vmatpush1.msra.mxu0 0.0
      %1108 = vmatprep.subr.mxu0 0.0
      %1109 = vmatpush1.msra.mxu0 0.0
      %1110 = vmatprep.subr.mxu0 0.0
      %1111 = vmatpush1.msra.mxu0 0.0
      %1112 = vmatprep.mubr.f32.mxu0 0.0
      %1113 = vmatmul.mubr.f32.gmra.mrb[0].mxu0 %v943
      %v1114 = vpop.f32.mrb[0].mxu0
      %v1115 = vadd.f32 %v939, %v1114
      %v1116 = vpop.f32.mrb[0].mxu0
      %v1117 = vadd.f32 %v939, %v1116
      %1118 = vdwg.mxu0
      %1119 = vmatprep.subr.mxu0 %v875
      %1120 = vmatpush1.msra.mxu0 %v874
      %1121 = vmatprep.subr.mxu0 %v891
      %1122 = vmatpush1.msra.mxu0 %v890
      %1123 = vmatprep.subr.mxu0 %v907
      %1124 = vmatpush1.msra.mxu0 %v906
      %1125 = vmatprep.subr.mxu0 %v923
      %1126 = vmatpush1.msra.mxu0 %v922
      %1127 = vmatprep.subr.mxu0 %v955
      %1128 = vmatpush1.msra.mxu0 %v953
      %1129 = vmatprep.subr.mxu0 0.0
      %1130 = vmatpush1.msra.mxu0 0.0
      %1131 = vmatprep.subr.mxu0 0.0
      %1132 = vmatpush1.msra.mxu0 0.0
      %1133 = vmatprep.subr.mxu0 0.0
      %1134 = vmatpush1.msra.mxu0 0.0
      %1135 = vmatprep.subr.mxu0 0.0
      %1136 = vmatpush1.msra.mxu0 0.0
      %1137 = vmatprep.subr.mxu0 0.0
      %1138 = vmatpush1.msra.mxu0 0.0
      %1139 = vmatprep.subr.mxu0 0.0
      %1140 = vmatpush1.msra.mxu0 0.0
      %1141 = vmatprep.subr.mxu0 0.0
      %1142 = vmatpush1.msra.mxu0 0.0
      %1143 = vmatprep.subr.mxu0 0.0
      %1144 = vmatpush1.msra.mxu0 0.0
      %1145 = vmatprep.subr.mxu0 0.0
      %1146 = vmatpush1.msra.mxu0 0.0
      %1147 = vmatprep.subr.mxu0 0.0
      %1148 = vmatpush1.msra.mxu0 0.0
      %1149 = vmatprep.subr.mxu0 0.0
      %1150 = vmatpush1.msra.mxu0 0.0
      %1151 = vmatprep.subr.mxu0 0.0
      %1152 = vmatpush1.msra.mxu0 0.0
      %1153 = vmatprep.subr.mxu0 0.0
      %1154 = vmatpush1.msra.mxu0 0.0
      %1155 = vmatprep.subr.mxu0 0.0
      %1156 = vmatpush1.msra.mxu0 0.0
      %1157 = vmatprep.subr.mxu0 0.0
      %1158 = vmatpush1.msra.mxu0 0.0
      %1159 = vmatprep.subr.mxu0 0.0
      %1160 = vmatpush1.msra.mxu0 0.0
      %1161 = vmatprep.subr.mxu0 0.0
      %1162 = vmatpush1.msra.mxu0 0.0
      %1163 = vmatprep.subr.mxu0 0.0
      %1164 = vmatpush1.msra.mxu0 0.0
      %1165 = vmatprep.subr.mxu0 0.0
      %1166 = vmatpush1.msra.mxu0 0.0
      %1167 = vmatprep.subr.mxu0 0.0
      %1168 = vmatpush1.msra.mxu0 0.0
      %1169 = vmatprep.subr.mxu0 0.0
      %1170 = vmatpush1.msra.mxu0 0.0
      %1171 = vmatprep.subr.mxu0 0.0
      %1172 = vmatpush1.msra.mxu0 0.0
      %1173 = vmatprep.subr.mxu0 0.0
      %1174 = vmatpush1.msra.mxu0 0.0
      %1175 = vmatprep.subr.mxu0 0.0
      %1176 = vmatpush1.msra.mxu0 0.0
      %1177 = vmatprep.subr.mxu0 0.0
      %1178 = vmatpush1.msra.mxu0 0.0
      %1179 = vmatprep.subr.mxu0 0.0
      %1180 = vmatpush1.msra.mxu0 0.0
      %1181 = vmatprep.subr.mxu0 0.0
      %1182 = vmatpush1.msra.mxu0 0.0
      %1183 = vmatprep.mubr.f32.mxu0 0.0
      %1184 = vmatmul.mubr.f32.gmra.mrb[0].mxu0 %v943
      %v1185 = vpop.f32.mrb[0].mxu0
      %v1186 = vadd.f32 %v939, %v1185
      %v1187 = vpop.f32.mrb[0].mxu0
      %v1188 = vadd.f32 %v939, %v1187
      %1189 = vdwg.mxu0
      %1190 = vmatprep.subr.mxu0 %v877
      %1191 = vmatpush1.msra.mxu0 %v876
      %1192 = vmatprep.subr.mxu0 %v893
      %1193 = vmatpush1.msra.mxu0 %v892
      %1194 = vmatprep.subr.mxu0 %v909
      %1195 = vmatpush1.msra.mxu0 %v908
      %1196 = vmatprep.subr.mxu0 %v925
      %1197 = vmatpush1.msra.mxu0 %v924
      %1198 = vmatprep.subr.mxu0 %v959
      %1199 = vmatpush1.msra.mxu0 %v957
      %1200 = vmatprep.subr.mxu0 0.0
      %1201 = vmatpush1.msra.mxu0 0.0
      %1202 = vmatprep.subr.mxu0 0.0
      %1203 = vmatpush1.msra.mxu0 0.0
      %1204 = vmatprep.subr.mxu0 0.0
      %1205 = vmatpush1.msra.mxu0 0.0
      %1206 = vmatprep.subr.mxu0 0.0
      %1207 = vmatpush1.msra.mxu0 0.0
      %1208 = vmatprep.subr.mxu0 0.0
      %1209 = vmatpush1.msra.mxu0 0.0
      %1210 = vmatprep.subr.mxu0 0.0
      %1211 = vmatpush1.msra.mxu0 0.0
      %1212 = vmatprep.subr.mxu0 0.0
      %1213 = vmatpush1.msra.mxu0 0.0
      %1214 = vmatprep.subr.mxu0 0.0
      %1215 = vmatpush1.msra.mxu0 0.0
      %1216 = vmatprep.subr.mxu0 0.0
      %1217 = vmatpush1.msra.mxu0 0.0
      %1218 = vmatprep.subr.mxu0 0.0
      %1219 = vmatpush1.msra.mxu0 0.0
      %1220 = vmatprep.subr.mxu0 0.0
      %1221 = vmatpush1.msra.mxu0 0.0
      %1222 = vmatprep.subr.mxu0 0.0
      %1223 = vmatpush1.msra.mxu0 0.0
      %1224 = vmatprep.subr.mxu0 0.0
      %1225 = vmatpush1.msra.mxu0 0.0
      %1226 = vmatprep.subr.mxu0 0.0
      %1227 = vmatpush1.msra.mxu0 0.0
      %1228 = vmatprep.subr.mxu0 0.0
      %1229 = vmatpush1.msra.mxu0 0.0
      %1230 = vmatprep.subr.mxu0 0.0
      %1231 = vmatpush1.msra.mxu0 0.0
      %1232 = vmatprep.subr.mxu0 0.0
      %1233 = vmatpush1.msra.mxu0 0.0
      %1234 = vmatprep.subr.mxu0 0.0
      %1235 = vmatpush1.msra.mxu0 0.0
      %1236 = vmatprep.subr.mxu0 0.0
      %1237 = vmatpush1.msra.mxu0 0.0
      %1238 = vmatprep.subr.mxu0 0.0
      %1239 = vmatpush1.msra.mxu0 0.0
      %1240 = vmatprep.subr.mxu0 0.0
      %1241 = vmatpush1.msra.mxu0 0.0
      %1242 = vmatprep.subr.mxu0 0.0
      %1243 = vmatpush1.msra.mxu0 0.0
      %1244 = vmatprep.subr.mxu0 0.0
      %1245 = vmatpush1.msra.mxu0 0.0
      %1246 = vmatprep.subr.mxu0 0.0
      %1247 = vmatpush1.msra.mxu0 0.0
      %1248 = vmatprep.subr.mxu0 0.0
      %1249 = vmatpush1.msra.mxu0 0.0
      %1250 = vmatprep.subr.mxu0 0.0
      %1251 = vmatpush1.msra.mxu0 0.0
      %1252 = vmatprep.subr.mxu0 0.0
      %1253 = vmatpush1.msra.mxu0 0.0
      %1254 = vmatprep.mubr.f32.mxu0 0.0
      %1255 = vmatmul.mubr.f32.gmra.mrb[0].mxu0 %v943
      %v1256 = vpop.f32.mrb[0].mxu0
      %v1257 = vadd.f32 %v939, %v1256
      %v1258 = vpop.f32.mrb[0].mxu0
      %v1259 = vadd.f32 %v939, %v1258
      %1260 = vdwg.mxu0
      %1261 = vmatprep.subr.mxu0 %v879
      %1262 = vmatpush1.msra.mxu0 %v878
      %1263 = vmatprep.subr.mxu0 %v895
      %1264 = vmatpush1.msra.mxu0 %v894
      %1265 = vmatprep.subr.mxu0 %v911
      %1266 = vmatpush1.msra.mxu0 %v910
      %1267 = vmatprep.subr.mxu0 %v927
      %1268 = vmatpush1.msra.mxu0 %v926
      %1269 = vmatprep.subr.mxu0 %v963
      %1270 = vmatpush1.msra.mxu0 %v961
      %1271 = vmatprep.subr.mxu0 0.0
      %1272 = vmatpush1.msra.mxu0 0.0
      %1273 = vmatprep.subr.mxu0 0.0
      %1274 = vmatpush1.msra.mxu0 0.0
      %1275 = vmatprep.subr.mxu0 0.0
      %1276 = vmatpush1.msra.mxu0 0.0
      %1277 = vmatprep.subr.mxu0 0.0
      %1278 = vmatpush1.msra.mxu0 0.0
      %1279 = vmatprep.subr.mxu0 0.0
      %1280 = vmatpush1.msra.mxu0 0.0
      %1281 = vmatprep.subr.mxu0 0.0
      %1282 = vmatpush1.msra.mxu0 0.0
      %1283 = vmatprep.subr.mxu0 0.0
      %1284 = vmatpush1.msra.mxu0 0.0
      %1285 = vmatprep.subr.mxu0 0.0
      %1286 = vmatpush1.msra.mxu0 0.0
      %1287 = vmatprep.subr.mxu0 0.0
      %1288 = vmatpush1.msra.mxu0 0.0
      %1289 = vmatprep.subr.mxu0 0.0
      %1290 = vmatpush1.msra.mxu0 0.0
      %1291 = vmatprep.subr.mxu0 0.0
      %1292 = vmatpush1.msra.mxu0 0.0
      %1293 = vmatprep.subr.mxu0 0.0
      %1294 = vmatpush1.msra.mxu0 0.0
      %1295 = vmatprep.subr.mxu0 0.0
      %1296 = vmatpush1.msra.mxu0 0.0
      %1297 = vmatprep.subr.mxu0 0.0
      %1298 = vmatpush1.msra.mxu0 0.0
      %1299 = vmatprep.subr.mxu0 0.0
      %1300 = vmatpush1.msra.mxu0 0.0
      %1301 = vmatprep.subr.mxu0 0.0
      %1302 = vmatpush1.msra.mxu0 0.0
      %1303 = vmatprep.subr.mxu0 0.0
      %1304 = vmatpush1.msra.mxu0 0.0
      %1305 = vmatprep.subr.mxu0 0.0
      %1306 = vmatpush1.msra.mxu0 0.0
      %1307 = vmatprep.subr.mxu0 0.0
      %1308 = vmatpush1.msra.mxu0 0.0
      %1309 = vmatprep.subr.mxu0 0.0
      %1310 = vmatpush1.msra.mxu0 0.0
      %1311 = vmatprep.subr.mxu0 0.0
      %1312 = vmatpush1.msra.mxu0 0.0
      %1313 = vmatprep.subr.mxu0 0.0
      %1314 = vmatpush1.msra.mxu0 0.0
      %1315 = vmatprep.subr.mxu0 0.0
      %1316 = vmatpush1.msra.mxu0 0.0
      %1317 = vmatprep.subr.mxu0 0.0
      %1318 = vmatpush1.msra.mxu0 0.0
      %1319 = vmatprep.subr.mxu0 0.0
      %1320 = vmatpush1.msra.mxu0 0.0
      %1321 = vmatprep.subr.mxu0 0.0
      %1322 = vmatpush1.msra.mxu0 0.0
      %1323 = vmatprep.subr.mxu0 0.0
      %1324 = vmatpush1.msra.mxu0 0.0
      %1325 = vmatprep.mubr.f32.mxu0 0.0
      %1326 = vmatmul.mubr.f32.gmra.mrb[0].mxu0 %v943
      %v1327 = vpop.f32.mrb[0].mxu0
      %v1328 = vadd.f32 %v939, %v1327
      %v1329 = vpop.f32.mrb[0].mxu0
      %v1330 = vadd.f32 %v939, %v1329
      %1331 = vdwg.mxu0
      %1332 = vmatprep.subr.mxu0 %v881
      %1333 = vmatpush1.msra.mxu0 %v880
      %1334 = vmatprep.subr.mxu0 %v897
      %1335 = vmatpush1.msra.mxu0 %v896
      %1336 = vmatprep.subr.mxu0 %v913
      %1337 = vmatpush1.msra.mxu0 %v912
      %1338 = vmatprep.subr.mxu0 %v929
      %1339 = vmatpush1.msra.mxu0 %v928
      %1340 = vmatprep.subr.mxu0 %v967
      %1341 = vmatpush1.msra.mxu0 %v965
      %1342 = vmatprep.subr.mxu0 0.0
      %1343 = vmatpush1.msra.mxu0 0.0
      %1344 = vmatprep.subr.mxu0 0.0
      %1345 = vmatpush1.msra.mxu0 0.0
      %1346 = vmatprep.subr.mxu0 0.0
      %1347 = vmatpush1.msra.mxu0 0.0
      %1348 = vmatprep.subr.mxu0 0.0
      %1349 = vmatpush1.msra.mxu0 0.0
      %1350 = vmatprep.subr.mxu0 0.0
      %1351 = vmatpush1.msra.mxu0 0.0
      %1352 = vmatprep.subr.mxu0 0.0
      %1353 = vmatpush1.msra.mxu0 0.0
      %1354 = vmatprep.subr.mxu0 0.0
      %1355 = vmatpush1.msra.mxu0 0.0
      %1356 = vmatprep.subr.mxu0 0.0
      %1357 = vmatpush1.msra.mxu0 0.0
      %1358 = vmatprep.subr.mxu0 0.0
      %1359 = vmatpush1.msra.mxu0 0.0
      %1360 = vmatprep.subr.mxu0 0.0
      %1361 = vmatpush1.msra.mxu0 0.0
      %1362 = vmatprep.subr.mxu0 0.0
      %1363 = vmatpush1.msra.mxu0 0.0
      %1364 = vmatprep.subr.mxu0 0.0
      %1365 = vmatpush1.msra.mxu0 0.0
      %1366 = vmatprep.subr.mxu0 0.0
      %1367 = vmatpush1.msra.mxu0 0.0
      %1368 = vmatprep.subr.mxu0 0.0
      %1369 = vmatpush1.msra.mxu0 0.0
      %1370 = vmatprep.subr.mxu0 0.0
      %1371 = vmatpush1.msra.mxu0 0.0
      %1372 = vmatprep.subr.mxu0 0.0
      %1373 = vmatpush1.msra.mxu0 0.0
      %1374 = vmatprep.subr.mxu0 0.0
      %1375 = vmatpush1.msra.mxu0 0.0
      %1376 = vmatprep.subr.mxu0 0.0
      %1377 = vmatpush1.msra.mxu0 0.0
      %1378 = vmatprep.subr.mxu0 0.0
      %1379 = vmatpush1.msra.mxu0 0.0
      %1380 = vmatprep.subr.mxu0 0.0
      %1381 = vmatpush1.msra.mxu0 0.0
      %1382 = vmatprep.subr.mxu0 0.0
      %1383 = vmatpush1.msra.mxu0 0.0
      %1384 = vmatprep.subr.mxu0 0.0
      %1385 = vmatpush1.msra.mxu0 0.0
      %1386 = vmatprep.subr.mxu0 0.0
      %1387 = vmatpush1.msra.mxu0 0.0
      %1388 = vmatprep.subr.mxu0 0.0
      %1389 = vmatpush1.msra.mxu0 0.0
      %1390 = vmatprep.subr.mxu0 0.0
      %1391 = vmatpush1.msra.mxu0 0.0
      %1392 = vmatprep.subr.mxu0 0.0
      %1393 = vmatpush1.msra.mxu0 0.0
      %1394 = vmatprep.subr.mxu0 0.0
      %1395 = vmatpush1.msra.mxu0 0.0
      %1396 = vmatprep.mubr.f32.mxu0 0.0
      %1397 = vmatmul.mubr.f32.gmra.mrb[0].mxu0 %v943
      %v1398 = vpop.f32.mrb[0].mxu0
      %v1399 = vadd.f32 %v939, %v1398
      %v1400 = vpop.f32.mrb[0].mxu0
      %v1401 = vadd.f32 %v939, %v1400
      %1402 = vdwg.mxu0
      %1403 = vmatprep.subr.mxu0 %v883
      %1404 = vmatpush1.msra.mxu0 %v882
      %1405 = vmatprep.subr.mxu0 %v899
      %1406 = vmatpush1.msra.mxu0 %v898
      %1407 = vmatprep.subr.mxu0 %v915
      %1408 = vmatpush1.msra.mxu0 %v914
      %1409 = vmatprep.subr.mxu0 %v931
      %1410 = vmatpush1.msra.mxu0 %v930
      %1411 = vmatprep.subr.mxu0 %v971
      %1412 = vmatpush1.msra.mxu0 %v969
      %1413 = vmatprep.subr.mxu0 0.0
      %1414 = vmatpush1.msra.mxu0 0.0
      %1415 = vmatprep.subr.mxu0 0.0
      %1416 = vmatpush1.msra.mxu0 0.0
      %1417 = vmatprep.subr.mxu0 0.0
      %1418 = vmatpush1.msra.mxu0 0.0
      %1419 = vmatprep.subr.mxu0 0.0
      %1420 = vmatpush1.msra.mxu0 0.0
      %1421 = vmatprep.subr.mxu0 0.0
      %1422 = vmatpush1.msra.mxu0 0.0
      %1423 = vmatprep.subr.mxu0 0.0
      %1424 = vmatpush1.msra.mxu0 0.0
      %1425 = vmatprep.subr.mxu0 0.0
      %1426 = vmatpush1.msra.mxu0 0.0
      %1427 = vmatprep.subr.mxu0 0.0
      %1428 = vmatpush1.msra.mxu0 0.0
      %1429 = vmatprep.subr.mxu0 0.0
      %1430 = vmatpush1.msra.mxu0 0.0
      %1431 = vmatprep.subr.mxu0 0.0
      %1432 = vmatpush1.msra.mxu0 0.0
      %1433 = vmatprep.subr.mxu0 0.0
      %1434 = vmatpush1.msra.mxu0 0.0
      %1435 = vmatprep.subr.mxu0 0.0
      %1436 = vmatpush1.msra.mxu0 0.0
      %1437 = vmatprep.subr.mxu0 0.0
      %1438 = vmatpush1.msra.mxu0 0.0
      %1439 = vmatprep.subr.mxu0 0.0
      %1440 = vmatpush1.msra.mxu0 0.0
      %1441 = vmatprep.subr.mxu0 0.0
      %1442 = vmatpush1.msra.mxu0 0.0
      %1443 = vmatprep.subr.mxu0 0.0
      %1444 = vmatpush1.msra.mxu0 0.0
      %1445 = vmatprep.subr.mxu0 0.0
      %1446 = vmatpush1.msra.mxu0 0.0
      %1447 = vmatprep.subr.mxu0 0.0
      %1448 = vmatpush1.msra.mxu0 0.0
      %1449 = vmatprep.subr.mxu0 0.0
      %1450 = vmatpush1.msra.mxu0 0.0
      %1451 = vmatprep.subr.mxu0 0.0
      %1452 = vmatpush1.msra.mxu0 0.0
      %1453 = vmatprep.subr.mxu0 0.0
      %1454 = vmatpush1.msra.mxu0 0.0
      %1455 = vmatprep.subr.mxu0 0.0
      %1456 = vmatpush1.msra.mxu0 0.0
      %1457 = vmatprep.subr.mxu0 0.0
      %1458 = vmatpush1.msra.mxu0 0.0
      %1459 = vmatprep.subr.mxu0 0.0
      %1460 = vmatpush1.msra.mxu0 0.0
      %1461 = vmatprep.subr.mxu0 0.0
      %1462 = vmatpush1.msra.mxu0 0.0
      %1463 = vmatprep.subr.mxu0 0.0
      %1464 = vmatpush1.msra.mxu0 0.0
      %1465 = vmatprep.subr.mxu0 0.0
      %1466 = vmatpush1.msra.mxu0 0.0
      %1467 = vmatprep.mubr.f32.mxu0 0.0
      %1468 = vmatmul.mubr.f32.gmra.mrb[0].mxu0 %v943
      %v1469 = vpop.f32.mrb[0].mxu0
      %v1470 = vadd.f32 %v939, %v1469
      %v1471 = vpop.f32.mrb[0].mxu0
      %v1472 = vadd.f32 %v939, %v1471
      %1473 = vdwg.mxu0
      %1474 = vmatprep.subr.mxu0 %v885
      %1475 = vmatpush1.msra.mxu0 %v884
      %1476 = vmatprep.subr.mxu0 %v901
      %1477 = vmatpush1.msra.mxu0 %v900
      %1478 = vmatprep.subr.mxu0 %v917
      %1479 = vmatpush1.msra.mxu0 %v916
      %1480 = vmatprep.subr.mxu0 %v933
      %1481 = vmatpush1.msra.mxu0 %v932
      %1482 = vmatprep.subr.mxu0 %v975
      %1483 = vmatpush1.msra.mxu0 %v973
      %1484 = vmatprep.subr.mxu0 0.0
      %1485 = vmatpush1.msra.mxu0 0.0
      %1486 = vmatprep.subr.mxu0 0.0
      %1487 = vmatpush1.msra.mxu0 0.0
      %1488 = vmatprep.subr.mxu0 0.0
      %1489 = vmatpush1.msra.mxu0 0.0
      %1490 = vmatprep.subr.mxu0 0.0
      %1491 = vmatpush1.msra.mxu0 0.0
      %1492 = vmatprep.subr.mxu0 0.0
      %1493 = vmatpush1.msra.mxu0 0.0
      %1494 = vmatprep.subr.mxu0 0.0
      %1495 = vmatpush1.msra.mxu0 0.0
      %1496 = vmatprep.subr.mxu0 0.0
      %1497 = vmatpush1.msra.mxu0 0.0
      %1498 = vmatprep.subr.mxu0 0.0
      %1499 = vmatpush1.msra.mxu0 0.0
      %1500 = vmatprep.subr.mxu0 0.0
      %1501 = vmatpush1.msra.mxu0 0.0
      %1502 = vmatprep.subr.mxu0 0.0
      %1503 = vmatpush1.msra.mxu0 0.0
      %1504 = vmatprep.subr.mxu0 0.0
      %1505 = vmatpush1.msra.mxu0 0.0
      %1506 = vmatprep.subr.mxu0 0.0
      %1507 = vmatpush1.msra.mxu0 0.0
      %1508 = vmatprep.subr.mxu0 0.0
      %1509 = vmatpush1.msra.mxu0 0.0
      %1510 = vmatprep.subr.mxu0 0.0
      %1511 = vmatpush1.msra.mxu0 0.0
      %1512 = vmatprep.subr.mxu0 0.0
      %1513 = vmatpush1.msra.mxu0 0.0
      %1514 = vmatprep.subr.mxu0 0.0
      %1515 = vmatpush1.msra.mxu0 0.0
      %1516 = vmatprep.subr.mxu0 0.0
      %1517 = vmatpush1.msra.mxu0 0.0
      %1518 = vmatprep.subr.mxu0 0.0
      %1519 = vmatpush1.msra.mxu0 0.0
      %1520 = vmatprep.subr.mxu0 0.0
      %1521 = vmatpush1.msra.mxu0 0.0
      %1522 = vmatprep.subr.mxu0 0.0
      %1523 = vmatpush1.msra.mxu0 0.0
      %1524 = vmatprep.subr.mxu0 0.0
      %1525 = vmatpush1.msra.mxu0 0.0
      %1526 = vmatprep.subr.mxu0 0.0
      %1527 = vmatpush1.msra.mxu0 0.0
      %1528 = vmatprep.subr.mxu0 0.0
      %1529 = vmatpush1.msra.mxu0 0.0
      %1530 = vmatprep.subr.mxu0 0.0
      %1531 = vmatpush1.msra.mxu0 0.0
      %1532 = vmatprep.subr.mxu0 0.0
      %1533 = vmatpush1.msra.mxu0 0.0
      %1534 = vmatprep.subr.mxu0 0.0
      %1535 = vmatpush1.msra.mxu0 0.0
      %1536 = vmatprep.subr.mxu0 0.0
      %1537 = vmatpush1.msra.mxu0 0.0
      %1538 = vmatprep.mubr.f32.mxu0 0.0
      %1539 = vmatmul.mubr.f32.gmra.mrb[0].mxu0 %v943
      %v1540 = vpop.f32.mrb[0].mxu0
      %v1541 = vadd.f32 %v939, %v1540
      %v1542 = vpop.f32.mrb[0].mxu0
      %v1543 = vadd.f32 %v939, %v1542
      %1544 = vdwg.mxu0
      %v1545 = vmax.f32 %v1044, 0.0
      %v1546 = vmax.f32 %v1046, 0.0
      %v1547 = vmax.f32 %v1115, 0.0
      %v1548 = vmax.f32 %v1117, 0.0
      %v1549 = vmax.f32 %v1186, 0.0
      %v1550 = vmax.f32 %v1188, 0.0
      %v1551 = vmax.f32 %v1257, 0.0
      %v1552 = vmax.f32 %v1259, 0.0
      %v1553 = vmax.f32 %v1328, 0.0
      %v1554 = vmax.f32 %v1330, 0.0
      %v1555 = vmax.f32 %v1399, 0.0
      %v1556 = vmax.f32 %v1401, 0.0
      %v1557 = vmax.f32 %v1470, 0.0
      %v1558 = vmax.f32 %v1472, 0.0
      %v1559 = vmax.f32 %v1541, 0.0
      %v1560 = vmax.f32 %v1543, 0.0
      %1577 = vrot.lane.b32.xlu0 %v1545, 127
      %v1578 = vpop.permute.xlu0 %1577
      %1579 = vrot.lane.b32.xlu0 %v1546, 127
      %v1580 = vpop.permute.xlu0 %1579
      %1581 = vrot.lane.b32.xlu0 %v1547, 127
      %v1582 = vpop.permute.xlu0 %1581
      %1583 = vrot.lane.b32.xlu0 %v1548, 127
      %v1584 = vpop.permute.xlu0 %1583
      %1585 = vrot.lane.b32.xlu0 %v1549, 127
      %v1586 = vpop.permute.xlu0 %1585
      %1587 = vrot.lane.b32.xlu0 %v1550, 127
      %v1588 = vpop.permute.xlu0 %1587
      %1589 = vrot.lane.b32.xlu0 %v1551, 127
      %v1590 = vpop.permute.xlu0 %1589
      %1591 = vrot.lane.b32.xlu0 %v1552, 127
      %v1592 = vpop.permute.xlu0 %1591
      %1593 = vrot.lane.b32.xlu0 %v1553, 127
      %v1594 = vpop.permute.xlu0 %1593
      %1595 = vrot.lane.b32.xlu0 %v1554, 127
      %v1596 = vpop.permute.xlu0 %1595
      %1597 = vrot.lane.b32.xlu0 %v1555, 127
      %v1598 = vpop.permute.xlu0 %1597
      %1599 = vrot.lane.b32.xlu0 %v1556, 127
      %v1600 = vpop.permute.xlu0 %1599
      %1601 = vrot.lane.b32.xlu0 %v1557, 127
      %v1602 = vpop.permute.xlu0 %1601
      %1603 = vrot.lane.b32.xlu0 %v1558, 127
      %v1604 = vpop.permute.xlu0 %1603
      %1605 = vrot.lane.b32.xlu0 %v1559, 127
      %v1606 = vpop.permute.xlu0 %1605
      %1607 = vrot.lane.b32.xlu0 %v1560, 127
      %v1608 = vpop.permute.xlu0 %1607
      %v1609 = vsel %vm405, %v1578, %v1580
      %v1610 = vsel %vm405, %v1580, %v1582
      %v1611 = vsel %vm405, %v1582, %v1584
      %v1612 = vsel %vm405, %v1584, %v1586
      %v1613 = vsel %vm405, %v1586, %v1588
      %v1614 = vsel %vm405, %v1588, %v1590
      %v1615 = vsel %vm405, %v1590, %v1592
      %v1616 = vsel %vm405, %v1592, %v1594
      %v1617 = vsel %vm405, %v1594, %v1596
      %v1618 = vsel %vm405, %v1596, %v1598
      %v1619 = vsel %vm405, %v1598, %v1600
      %v1620 = vsel %vm405, %v1600, %v1602
      %v1621 = vsel %vm405, %v1602, %v1604
      %v1622 = vsel %vm405, %v1604, %v1606
      %v1623 = vsel %vm405, %v1606, %v1608
      %v1640 = vmax.f32 %v1545, %v1609
      %v1641 = vmax.f32 %v1546, %v1610
      %v1642 = vmax.f32 %v1547, %v1611
      %v1643 = vmax.f32 %v1548, %v1612
      %v1644 = vmax.f32 %v1549, %v1613
      %v1645 = vmax.f32 %v1550, %v1614
      %v1646 = vmax.f32 %v1551, %v1615
      %v1647 = vmax.f32 %v1552, %v1616
      %v1648 = vmax.f32 %v1553, %v1617
      %v1649 = vmax.f32 %v1554, %v1618
      %v1650 = vmax.f32 %v1555, %v1619
      %v1651 = vmax.f32 %v1556, %v1620
      %v1652 = vmax.f32 %v1557, %v1621
      %v1653 = vmax.f32 %v1558, %v1622
      %v1654 = vmax.f32 %v1559, %v1623
      %v1655 = vmax.f32 %v1560, %v1608
      %1656 = vrot.lane.b32.xlu0 %v1545, 112
      %v1657 = vpop.permute.xlu0 %1656
      %1658 = vrot.lane.b32.xlu0 %v1546, 112
      %v1659 = vpop.permute.xlu0 %1658
      %1660 = vrot.lane.b32.xlu0 %v1547, 112
      %v1661 = vpop.permute.xlu0 %1660
      %1662 = vrot.lane.b32.xlu0 %v1548, 112
      %v1663 = vpop.permute.xlu0 %1662
      %1664 = vrot.lane.b32.xlu0 %v1549, 112
      %v1665 = vpop.permute.xlu0 %1664
      %1666 = vrot.lane.b32.xlu0 %v1550, 112
      %v1667 = vpop.permute.xlu0 %1666
      %1668 = vrot.lane.b32.xlu0 %v1551, 112
      %v1669 = vpop.permute.xlu0 %1668
      %1670 = vrot.lane.b32.xlu0 %v1552, 112
      %v1671 = vpop.permute.xlu0 %1670
      %1672 = vrot.lane.b32.xlu0 %v1553, 112
      %v1673 = vpop.permute.xlu0 %1672
      %1674 = vrot.lane.b32.xlu0 %v1554, 112
      %v1675 = vpop.permute.xlu0 %1674
      %1676 = vrot.lane.b32.xlu0 %v1555, 112
      %v1677 = vpop.permute.xlu0 %1676
      %1678 = vrot.lane.b32.xlu0 %v1556, 112
      %v1679 = vpop.permute.xlu0 %1678
      %1680 = vrot.lane.b32.xlu0 %v1557, 112
      %v1681 = vpop.permute.xlu0 %1680
      %1682 = vrot.lane.b32.xlu0 %v1558, 112
      %v1683 = vpop.permute.xlu0 %1682
      %1684 = vrot.lane.b32.xlu0 %v1559, 112
      %v1685 = vpop.permute.xlu0 %1684
      %1686 = vrot.lane.b32.xlu0 %v1560, 112
      %v1687 = vpop.permute.xlu0 %1686
      %v1688 = vsel %vm533, %v1657, %v1659
      %v1689 = vsel %vm533, %v1659, %v1661
      %v1690 = vsel %vm533, %v1661, %v1663
      %v1691 = vsel %vm533, %v1663, %v1665
      %v1692 = vsel %vm533, %v1665, %v1667
      %v1693 = vsel %vm533, %v1667, %v1669
      %v1694 = vsel %vm533, %v1669, %v1671
      %v1695 = vsel %vm533, %v1671, %v1673
      %v1696 = vsel %vm533, %v1673, %v1675
      %v1697 = vsel %vm533, %v1675, %v1677
      %v1698 = vsel %vm533, %v1677, %v1679
      %v1699 = vsel %vm533, %v1679, %v1681
      %v1700 = vsel %vm533, %v1681, %v1683
      %v1701 = vsel %vm533, %v1683, %v1685
      %v1702 = vsel %vm533, %v1685, %v1687
      %v1719 = vmax.f32 %v1640, %v1688
      %v1720 = vmax.f32 %v1641, %v1689
      %v1721 = vmax.f32 %v1642, %v1690
      %v1722 = vmax.f32 %v1643, %v1691
      %v1723 = vmax.f32 %v1644, %v1692
      %v1724 = vmax.f32 %v1645, %v1693
      %v1725 = vmax.f32 %v1646, %v1694
      %v1726 = vmax.f32 %v1647, %v1695
      %v1727 = vmax.f32 %v1648, %v1696
      %v1728 = vmax.f32 %v1649, %v1697
      %v1729 = vmax.f32 %v1650, %v1698
      %v1730 = vmax.f32 %v1651, %v1699
      %v1731 = vmax.f32 %v1652, %v1700
      %v1732 = vmax.f32 %v1653, %v1701
      %v1733 = vmax.f32 %v1654, %v1702
      %v1734 = vmax.f32 %v1655, %v1687
      %1735 = vrot.lane.b32.xlu0 %v1545, 111
      %v1736 = vpop.permute.xlu0 %1735
      %1737 = vrot.lane.b32.xlu0 %v1546, 111
      %v1738 = vpop.permute.xlu0 %1737
      %1739 = vrot.lane.b32.xlu0 %v1547, 111
      %v1740 = vpop.permute.xlu0 %1739
      %1741 = vrot.lane.b32.xlu0 %v1548, 111
      %v1742 = vpop.permute.xlu0 %1741
      %1743 = vrot.lane.b32.xlu0 %v1549, 111
      %v1744 = vpop.permute.xlu0 %1743
      %1745 = vrot.lane.b32.xlu0 %v1550, 111
      %v1746 = vpop.permute.xlu0 %1745
      %1747 = vrot.lane.b32.xlu0 %v1551, 111
      %v1748 = vpop.permute.xlu0 %1747
      %1749 = vrot.lane.b32.xlu0 %v1552, 111
      %v1750 = vpop.permute.xlu0 %1749
      %1751 = vrot.lane.b32.xlu0 %v1553, 111
      %v1752 = vpop.permute.xlu0 %1751
      %1753 = vrot.lane.b32.xlu0 %v1554, 111
      %v1754 = vpop.permute.xlu0 %1753
      %1755 = vrot.lane.b32.xlu0 %v1555, 111
      %v1756 = vpop.permute.xlu0 %1755
      %1757 = vrot.lane.b32.xlu0 %v1556, 111
      %v1758 = vpop.permute.xlu0 %1757
      %1759 = vrot.lane.b32.xlu0 %v1557, 111
      %v1760 = vpop.permute.xlu0 %1759
      %1761 = vrot.lane.b32.xlu0 %v1558, 111
      %v1762 = vpop.permute.xlu0 %1761
      %1763 = vrot.lane.b32.xlu0 %v1559, 111
      %v1764 = vpop.permute.xlu0 %1763
      %1765 = vrot.lane.b32.xlu0 %v1560, 111
      %v1766 = vpop.permute.xlu0 %1765
      %v1767 = vsel %vm597, %v1736, %v1738
      %v1768 = vsel %vm597, %v1738, %v1740
      %v1769 = vsel %vm597, %v1740, %v1742
      %v1770 = vsel %vm597, %v1742, %v1744
      %v1771 = vsel %vm597, %v1744, %v1746
      %v1772 = vsel %vm597, %v1746, %v1748
      %v1773 = vsel %vm597, %v1748, %v1750
      %v1774 = vsel %vm597, %v1750, %v1752
      %v1775 = vsel %vm597, %v1752, %v1754
      %v1776 = vsel %vm597, %v1754, %v1756
      %v1777 = vsel %vm597, %v1756, %v1758
      %v1778 = vsel %vm597, %v1758, %v1760
      %v1779 = vsel %vm597, %v1760, %v1762
      %v1780 = vsel %vm597, %v1762, %v1764
      %v1781 = vsel %vm597, %v1764, %v1766
      %v1798 = vmax.f32 %v1719, %v1767
      %v1799 = vmax.f32 %v1720, %v1768
      %v1800 = vmax.f32 %v1721, %v1769
      %v1801 = vmax.f32 %v1722, %v1770
      %v1802 = vmax.f32 %v1723, %v1771
      %v1803 = vmax.f32 %v1724, %v1772
      %v1804 = vmax.f32 %v1725, %v1773
      %v1805 = vmax.f32 %v1726, %v1774
      %v1806 = vmax.f32 %v1727, %v1775
      %v1807 = vmax.f32 %v1728, %v1776
      %v1808 = vmax.f32 %v1729, %v1777
      %v1809 = vmax.f32 %v1730, %v1778
      %v1810 = vmax.f32 %v1731, %v1779
      %v1811 = vmax.f32 %v1732, %v1780
      %v1812 = vmax.f32 %v1733, %v1781
      %v1813 = vmax.f32 %v1734, %v1766
      %1830 = vrot.lane.b32.xlu0 %v1798, 126
      %v1831 = vpop.permute.xlu0 %1830
      %1832 = vrot.lane.b32.xlu0 %v1799, 126
      %v1833 = vpop.permute.xlu0 %1832
      %1834 = vrot.lane.b32.xlu0 %v1800, 126
      %v1835 = vpop.permute.xlu0 %1834
      %1836 = vrot.lane.b32.xlu0 %v1801, 126
      %v1837 = vpop.permute.xlu0 %1836
      %1838 = vrot.lane.b32.xlu0 %v1802, 126
      %v1839 = vpop.permute.xlu0 %1838
      %1840 = vrot.lane.b32.xlu0 %v1803, 126
      %v1841 = vpop.permute.xlu0 %1840
      %1842 = vrot.lane.b32.xlu0 %v1804, 126
      %v1843 = vpop.permute.xlu0 %1842
      %1844 = vrot.lane.b32.xlu0 %v1805, 126
      %v1845 = vpop.permute.xlu0 %1844
      %1846 = vrot.lane.b32.xlu0 %v1806, 126
      %v1847 = vpop.permute.xlu0 %1846
      %1848 = vrot.lane.b32.xlu0 %v1807, 126
      %v1849 = vpop.permute.xlu0 %1848
      %1850 = vrot.lane.b32.xlu0 %v1808, 126
      %v1851 = vpop.permute.xlu0 %1850
      %1852 = vrot.lane.b32.xlu0 %v1809, 126
      %v1853 = vpop.permute.xlu0 %1852
      %1854 = vrot.lane.b32.xlu0 %v1810, 126
      %v1855 = vpop.permute.xlu0 %1854
      %1856 = vrot.lane.b32.xlu0 %v1811, 126
      %v1857 = vpop.permute.xlu0 %1856
      %1858 = vrot.lane.b32.xlu0 %v1812, 126
      %v1859 = vpop.permute.xlu0 %1858
      %1860 = vrot.lane.b32.xlu0 %v1813, 126
      %v1861 = vpop.permute.xlu0 %1860
      %v1862 = vsel %vm469, %v1831, %v1833
      %v1863 = vsel %vm469, %v1833, %v1835
      %v1864 = vsel %vm469, %v1835, %v1837
      %v1865 = vsel %vm469, %v1837, %v1839
      %v1866 = vsel %vm469, %v1839, %v1841
      %v1867 = vsel %vm469, %v1841, %v1843
      %v1868 = vsel %vm469, %v1843, %v1845
      %v1869 = vsel %vm469, %v1845, %v1847
      %v1870 = vsel %vm469, %v1847, %v1849
      %v1871 = vsel %vm469, %v1849, %v1851
      %v1872 = vsel %vm469, %v1851, %v1853
      %v1873 = vsel %vm469, %v1853, %v1855
      %v1874 = vsel %vm469, %v1855, %v1857
      %v1875 = vsel %vm469, %v1857, %v1859
      %v1876 = vsel %vm469, %v1859, %v1861
      %1893 = vrot.lane.b32.xlu0 %v1798, 124
      %v1894 = vpop.permute.xlu0 %1893
      %1895 = vrot.lane.b32.xlu0 %v1799, 124
      %v1896 = vpop.permute.xlu0 %1895
      %1897 = vrot.lane.b32.xlu0 %v1800, 124
      %v1898 = vpop.permute.xlu0 %1897
      %1899 = vrot.lane.b32.xlu0 %v1801, 124
      %v1900 = vpop.permute.xlu0 %1899
      %1901 = vrot.lane.b32.xlu0 %v1802, 124
      %v1902 = vpop.permute.xlu0 %1901
      %1903 = vrot.lane.b32.xlu0 %v1803, 124
      %v1904 = vpop.permute.xlu0 %1903
      %1905 = vrot.lane.b32.xlu0 %v1804, 124
      %v1906 = vpop.permute.xlu0 %1905
      %1907 = vrot.lane.b32.xlu0 %v1805, 124
      %v1908 = vpop.permute.xlu0 %1907
      %1909 = vrot.lane.b32.xlu0 %v1806, 124
      %v1910 = vpop.permute.xlu0 %1909
      %1911 = vrot.lane.b32.xlu0 %v1807, 124
      %v1912 = vpop.permute.xlu0 %1911
      %1913 = vrot.lane.b32.xlu0 %v1808, 124
      %v1914 = vpop.permute.xlu0 %1913
      %1915 = vrot.lane.b32.xlu0 %v1809, 124
      %v1916 = vpop.permute.xlu0 %1915
      %1917 = vrot.lane.b32.xlu0 %v1810, 124
      %v1918 = vpop.permute.xlu0 %1917
      %1919 = vrot.lane.b32.xlu0 %v1811, 124
      %v1920 = vpop.permute.xlu0 %1919
      %1921 = vrot.lane.b32.xlu0 %v1812, 124
      %v1922 = vpop.permute.xlu0 %1921
      %1923 = vrot.lane.b32.xlu0 %v1813, 124
      %v1924 = vpop.permute.xlu0 %1923
      %vm1925 = vcmask 1014784
      %v1926 = vsel %vm1925, %v1894, %v1896
      %v1927 = vsel %vm1925, %v1896, %v1898
      %v1928 = vsel %vm1925, %v1898, %v1900
      %v1929 = vsel %vm1925, %v1900, %v1902
      %v1930 = vsel %vm1925, %v1902, %v1904
      %v1931 = vsel %vm1925, %v1904, %v1906
      %v1932 = vsel %vm1925, %v1906, %v1908
      %v1933 = vsel %vm1925, %v1908, %v1910
      %v1934 = vsel %vm1925, %v1910, %v1912
      %v1935 = vsel %vm1925, %v1912, %v1914
      %v1936 = vsel %vm1925, %v1914, %v1916
      %v1937 = vsel %vm1925, %v1916, %v1918
      %v1938 = vsel %vm1925, %v1918, %v1920
      %v1939 = vsel %vm1925, %v1920, %v1922
      %v1940 = vsel %vm1925, %v1922, %v1924
      %1957 = vrot.lane.b32.xlu0 %v1798, 96
      %v1958 = vpop.permute.xlu0 %1957
      %1959 = vrot.lane.b32.xlu0 %v1799, 96
      %v1960 = vpop.permute.xlu0 %1959
      %1961 = vrot.lane.b32.xlu0 %v1800, 96
      %v1962 = vpop.permute.xlu0 %1961
      %1963 = vrot.lane.b32.xlu0 %v1801, 96
      %v1964 = vpop.permute.xlu0 %1963
      %1965 = vrot.lane.b32.xlu0 %v1802, 96
      %v1966 = vpop.permute.xlu0 %1965
      %1967 = vrot.lane.b32.xlu0 %v1803, 96
      %v1968 = vpop.permute.xlu0 %1967
      %1969 = vrot.lane.b32.xlu0 %v1804, 96
      %v1970 = vpop.permute.xlu0 %1969
      %1971 = vrot.lane.b32.xlu0 %v1805, 96
      %v1972 = vpop.permute.xlu0 %1971
      %1973 = vrot.lane.b32.xlu0 %v1806, 96
      %v1974 = vpop.permute.xlu0 %1973
      %1975 = vrot.lane.b32.xlu0 %v1807, 96
      %v1976 = vpop.permute.xlu0 %1975
      %1977 = vrot.lane.b32.xlu0 %v1808, 96
      %v1978 = vpop.permute.xlu0 %1977
      %1979 = vrot.lane.b32.xlu0 %v1809, 96
      %v1980 = vpop.permute.xlu0 %1979
      %1981 = vrot.lane.b32.xlu0 %v1810, 96
      %v1982 = vpop.permute.xlu0 %1981
      %1983 = vrot.lane.b32.xlu0 %v1811, 96
      %v1984 = vpop.permute.xlu0 %1983
      %1985 = vrot.lane.b32.xlu0 %v1812, 96
      %v1986 = vpop.permute.xlu0 %1985
      %1987 = vrot.lane.b32.xlu0 %v1813, 96
      %v1988 = vpop.permute.xlu0 %1987
      %v1989 = vsel %vm725, %v1958, %v1960
      %v1990 = vsel %vm725, %v1960, %v1962
      %v1991 = vsel %vm725, %v1962, %v1964
      %v1992 = vsel %vm725, %v1964, %v1966
      %v1993 = vsel %vm725, %v1966, %v1968
      %v1994 = vsel %vm725, %v1968, %v1970
      %v1995 = vsel %vm725, %v1970, %v1972
      %v1996 = vsel %vm725, %v1972, %v1974
      %v1997 = vsel %vm725, %v1974, %v1976
      %v1998 = vsel %vm725, %v1976, %v1978
      %v1999 = vsel %vm725, %v1978, %v1980
      %v2000 = vsel %vm725, %v1980, %v1982
      %v2001 = vsel %vm725, %v1982, %v1984
      %v2002 = vsel %vm725, %v1984, %v1986
      %v2003 = vsel %vm725, %v1986, %v1988
      %2020 = vrot.lane.b32.xlu0 %v1798, 94
      %v2021 = vpop.permute.xlu0 %2020
      %2022 = vrot.lane.b32.xlu0 %v1799, 94
      %v2023 = vpop.permute.xlu0 %2022
      %2024 = vrot.lane.b32.xlu0 %v1800, 94
      %v2025 = vpop.permute.xlu0 %2024
      %2026 = vrot.lane.b32.xlu0 %v1801, 94
      %v2027 = vpop.permute.xlu0 %2026
      %2028 = vrot.lane.b32.xlu0 %v1802, 94
      %v2029 = vpop.permute.xlu0 %2028
      %2030 = vrot.lane.b32.xlu0 %v1803, 94
      %v2031 = vpop.permute.xlu0 %2030
      %2032 = vrot.lane.b32.xlu0 %v1804, 94
      %v2033 = vpop.permute.xlu0 %2032
      %2034 = vrot.lane.b32.xlu0 %v1805, 94
      %v2035 = vpop.permute.xlu0 %2034
      %2036 = vrot.lane.b32.xlu0 %v1806, 94
      %v2037 = vpop.permute.xlu0 %2036
      %2038 = vrot.lane.b32.xlu0 %v1807, 94
      %v2039 = vpop.permute.xlu0 %2038
      %2040 = vrot.lane.b32.xlu0 %v1808, 94
      %v2041 = vpop.permute.xlu0 %2040
      %2042 = vrot.lane.b32.xlu0 %v1809, 94
      %v2043 = vpop.permute.xlu0 %2042
      %2044 = vrot.lane.b32.xlu0 %v1810, 94
      %v2045 = vpop.permute.xlu0 %2044
      %2046 = vrot.lane.b32.xlu0 %v1811, 94
      %v2047 = vpop.permute.xlu0 %2046
      %2048 = vrot.lane.b32.xlu0 %v1812, 94
      %v2049 = vpop.permute.xlu0 %2048
      %2050 = vrot.lane.b32.xlu0 %v1813, 94
      %v2051 = vpop.permute.xlu0 %2050
      %v2052 = vsel %vm853, %v2021, %v2023
      %v2053 = vsel %vm853, %v2023, %v2025
      %v2054 = vsel %vm853, %v2025, %v2027
      %v2055 = vsel %vm853, %v2027, %v2029
      %v2056 = vsel %vm853, %v2029, %v2031
      %v2057 = vsel %vm853, %v2031, %v2033
      %v2058 = vsel %vm853, %v2033, %v2035
      %v2059 = vsel %vm853, %v2035, %v2037
      %v2060 = vsel %vm853, %v2037, %v2039
      %v2061 = vsel %vm853, %v2039, %v2041
      %v2062 = vsel %vm853, %v2041, %v2043
      %v2063 = vsel %vm853, %v2043, %v2045
      %v2064 = vsel %vm853, %v2045, %v2047
      %v2065 = vsel %vm853, %v2047, %v2049
      %v2066 = vsel %vm853, %v2049, %v2051
      %2083 = vrot.lane.b32.xlu0 %v1798, 92
      %v2084 = vpop.permute.xlu0 %2083
      %2085 = vrot.lane.b32.xlu0 %v1799, 92
      %v2086 = vpop.permute.xlu0 %2085
      %2087 = vrot.lane.b32.xlu0 %v1800, 92
      %v2088 = vpop.permute.xlu0 %2087
      %2089 = vrot.lane.b32.xlu0 %v1801, 92
      %v2090 = vpop.permute.xlu0 %2089
      %2091 = vrot.lane.b32.xlu0 %v1802, 92
      %v2092 = vpop.permute.xlu0 %2091
      %2093 = vrot.lane.b32.xlu0 %v1803, 92
      %v2094 = vpop.permute.xlu0 %2093
      %2095 = vrot.lane.b32.xlu0 %v1804, 92
      %v2096 = vpop.permute.xlu0 %2095
      %2097 = vrot.lane.b32.xlu0 %v1805, 92
      %v2098 = vpop.permute.xlu0 %2097
      %2099 = vrot.lane.b32.xlu0 %v1806, 92
      %v2100 = vpop.permute.xlu0 %2099
      %2101 = vrot.lane.b32.xlu0 %v1807, 92
      %v2102 = vpop.permute.xlu0 %2101
      %2103 = vrot.lane.b32.xlu0 %v1808, 92
      %v2104 = vpop.permute.xlu0 %2103
      %2105 = vrot.lane.b32.xlu0 %v1809, 92
      %v2106 = vpop.permute.xlu0 %2105
      %2107 = vrot.lane.b32.xlu0 %v1810, 92
      %v2108 = vpop.permute.xlu0 %2107
      %2109 = vrot.lane.b32.xlu0 %v1811, 92
      %v2110 = vpop.permute.xlu0 %2109
      %2111 = vrot.lane.b32.xlu0 %v1812, 92
      %v2112 = vpop.permute.xlu0 %2111
      %2113 = vrot.lane.b32.xlu0 %v1813, 92
      %v2114 = vpop.permute.xlu0 %2113
      %vm2115 = vcmask 752640
      %v2116 = vsel %vm2115, %v2084, %v2086
      %v2117 = vsel %vm2115, %v2086, %v2088
      %v2118 = vsel %vm2115, %v2088, %v2090
      %v2119 = vsel %vm2115, %v2090, %v2092
      %v2120 = vsel %vm2115, %v2092, %v2094
      %v2121 = vsel %vm2115, %v2094, %v2096
      %v2122 = vsel %vm2115, %v2096, %v2098
      %v2123 = vsel %vm2115, %v2098, %v2100
      %v2124 = vsel %vm2115, %v2100, %v2102
      %v2125 = vsel %vm2115, %v2102, %v2104
      %v2126 = vsel %vm2115, %v2104, %v2106
      %v2127 = vsel %vm2115, %v2106, %v2108
      %v2128 = vsel %vm2115, %v2108, %v2110
      %v2129 = vsel %vm2115, %v2110, %v2112
      %v2130 = vsel %vm2115, %v2112, %v2114
      %2147 = vrot.lane.b32.xlu0 %v1798, 64
      %v2148 = vpop.permute.xlu0 %2147
      %2149 = vrot.lane.b32.xlu0 %v1799, 64
      %v2150 = vpop.permute.xlu0 %2149
      %2151 = vrot.lane.b32.xlu0 %v1800, 64
      %v2152 = vpop.permute.xlu0 %2151
      %2153 = vrot.lane.b32.xlu0 %v1801, 64
      %v2154 = vpop.permute.xlu0 %2153
      %2155 = vrot.lane.b32.xlu0 %v1802, 64
      %v2156 = vpop.permute.xlu0 %2155
      %2157 = vrot.lane.b32.xlu0 %v1803, 64
      %v2158 = vpop.permute.xlu0 %2157
      %2159 = vrot.lane.b32.xlu0 %v1804, 64
      %v2160 = vpop.permute.xlu0 %2159
      %2161 = vrot.lane.b32.xlu0 %v1805, 64
      %v2162 = vpop.permute.xlu0 %2161
      %2163 = vrot.lane.b32.xlu0 %v1806, 64
      %v2164 = vpop.permute.xlu0 %2163
      %2165 = vrot.lane.b32.xlu0 %v1807, 64
      %v2166 = vpop.permute.xlu0 %2165
      %2167 = vrot.lane.b32.xlu0 %v1808, 64
      %v2168 = vpop.permute.xlu0 %2167
      %2169 = vrot.lane.b32.xlu0 %v1809, 64
      %v2170 = vpop.permute.xlu0 %2169
      %2171 = vrot.lane.b32.xlu0 %v1810, 64
      %v2172 = vpop.permute.xlu0 %2171
      %2173 = vrot.lane.b32.xlu0 %v1811, 64
      %v2174 = vpop.permute.xlu0 %2173
      %2175 = vrot.lane.b32.xlu0 %v1812, 64
      %v2176 = vpop.permute.xlu0 %2175
      %2177 = vrot.lane.b32.xlu0 %v1813, 64
      %v2178 = vpop.permute.xlu0 %2177
      %vm2179 = vcmask 523264
      %v2180 = vsel %vm2179, %v2148, %v2150
      %v2181 = vsel %vm2179, %v2150, %v2152
      %v2182 = vsel %vm2179, %v2152, %v2154
      %v2183 = vsel %vm2179, %v2154, %v2156
      %v2184 = vsel %vm2179, %v2156, %v2158
      %v2185 = vsel %vm2179, %v2158, %v2160
      %v2186 = vsel %vm2179, %v2160, %v2162
      %v2187 = vsel %vm2179, %v2162, %v2164
      %v2188 = vsel %vm2179, %v2164, %v2166
      %v2189 = vsel %vm2179, %v2166, %v2168
      %v2190 = vsel %vm2179, %v2168, %v2170
      %v2191 = vsel %vm2179, %v2170, %v2172
      %v2192 = vsel %vm2179, %v2172, %v2174
      %v2193 = vsel %vm2179, %v2174, %v2176
      %v2194 = vsel %vm2179, %v2176, %v2178
      %2211 = vrot.lane.b32.xlu0 %v1798, 62
      %v2212 = vpop.permute.xlu0 %2211
      %2213 = vrot.lane.b32.xlu0 %v1799, 62
      %v2214 = vpop.permute.xlu0 %2213
      %2215 = vrot.lane.b32.xlu0 %v1800, 62
      %v2216 = vpop.permute.xlu0 %2215
      %2217 = vrot.lane.b32.xlu0 %v1801, 62
      %v2218 = vpop.permute.xlu0 %2217
      %2219 = vrot.lane.b32.xlu0 %v1802, 62
      %v2220 = vpop.permute.xlu0 %2219
      %2221 = vrot.lane.b32.xlu0 %v1803, 62
      %v2222 = vpop.permute.xlu0 %2221
      %2223 = vrot.lane.b32.xlu0 %v1804, 62
      %v2224 = vpop.permute.xlu0 %2223
      %2225 = vrot.lane.b32.xlu0 %v1805, 62
      %v2226 = vpop.permute.xlu0 %2225
      %2227 = vrot.lane.b32.xlu0 %v1806, 62
      %v2228 = vpop.permute.xlu0 %2227
      %2229 = vrot.lane.b32.xlu0 %v1807, 62
      %v2230 = vpop.permute.xlu0 %2229
      %2231 = vrot.lane.b32.xlu0 %v1808, 62
      %v2232 = vpop.permute.xlu0 %2231
      %2233 = vrot.lane.b32.xlu0 %v1809, 62
      %v2234 = vpop.permute.xlu0 %2233
      %2235 = vrot.lane.b32.xlu0 %v1810, 62
      %v2236 = vpop.permute.xlu0 %2235
      %2237 = vrot.lane.b32.xlu0 %v1811, 62
      %v2238 = vpop.permute.xlu0 %2237
      %2239 = vrot.lane.b32.xlu0 %v1812, 62
      %v2240 = vpop.permute.xlu0 %2239
      %2241 = vrot.lane.b32.xlu0 %v1813, 62
      %v2242 = vpop.permute.xlu0 %2241
      %vm2243 = vcmask 506880
      %v2244 = vsel %vm2243, %v2212, %v2214
      %v2245 = vsel %vm2243, %v2214, %v2216
      %v2246 = vsel %vm2243, %v2216, %v2218
      %v2247 = vsel %vm2243, %v2218, %v2220
      %v2248 = vsel %vm2243, %v2220, %v2222
      %v2249 = vsel %vm2243, %v2222, %v2224
      %v2250 = vsel %vm2243, %v2224, %v2226
      %v2251 = vsel %vm2243, %v2226, %v2228
      %v2252 = vsel %vm2243, %v2228, %v2230
      %v2253 = vsel %vm2243, %v2230, %v2232
      %v2254 = vsel %vm2243, %v2232, %v2234
      %v2255 = vsel %vm2243, %v2234, %v2236
      %v2256 = vsel %vm2243, %v2236, %v2238
      %v2257 = vsel %vm2243, %v2238, %v2240
      %v2258 = vsel %vm2243, %v2240, %v2242
      %2275 = vrot.lane.b32.xlu0 %v1798, 60
      %v2276 = vpop.permute.xlu0 %2275
      %2277 = vrot.lane.b32.xlu0 %v1799, 60
      %v2278 = vpop.permute.xlu0 %2277
      %2279 = vrot.lane.b32.xlu0 %v1800, 60
      %v2280 = vpop.permute.xlu0 %2279
      %2281 = vrot.lane.b32.xlu0 %v1801, 60
      %v2282 = vpop.permute.xlu0 %2281
      %2283 = vrot.lane.b32.xlu0 %v1802, 60
      %v2284 = vpop.permute.xlu0 %2283
      %2285 = vrot.lane.b32.xlu0 %v1803, 60
      %v2286 = vpop.permute.xlu0 %2285
      %2287 = vrot.lane.b32.xlu0 %v1804, 60
      %v2288 = vpop.permute.xlu0 %2287
      %2289 = vrot.lane.b32.xlu0 %v1805, 60
      %v2290 = vpop.permute.xlu0 %2289
      %2291 = vrot.lane.b32.xlu0 %v1806, 60
      %v2292 = vpop.permute.xlu0 %2291
      %2293 = vrot.lane.b32.xlu0 %v1807, 60
      %v2294 = vpop.permute.xlu0 %2293
      %2295 = vrot.lane.b32.xlu0 %v1808, 60
      %v2296 = vpop.permute.xlu0 %2295
      %2297 = vrot.lane.b32.xlu0 %v1809, 60
      %v2298 = vpop.permute.xlu0 %2297
      %2299 = vrot.lane.b32.xlu0 %v1810, 60
      %v2300 = vpop.permute.xlu0 %2299
      %2301 = vrot.lane.b32.xlu0 %v1811, 60
      %v2302 = vpop.permute.xlu0 %2301
      %2303 = vrot.lane.b32.xlu0 %v1812, 60
      %v2304 = vpop.permute.xlu0 %2303
      %2305 = vrot.lane.b32.xlu0 %v1813, 60
      %v2306 = vpop.permute.xlu0 %2305
      %vm2307 = vcmask 490496
      %v2308 = vsel %vm2307, %v2276, %v2278
      %v2309 = vsel %vm2307, %v2278, %v2280
      %v2310 = vsel %vm2307, %v2280, %v2282
      %v2311 = vsel %vm2307, %v2282, %v2284
      %v2312 = vsel %vm2307, %v2284, %v2286
      %v2313 = vsel %vm2307, %v2286, %v2288
      %v2314 = vsel %vm2307, %v2288, %v2290
      %v2315 = vsel %vm2307, %v2290, %v2292
      %v2316 = vsel %vm2307, %v2292, %v2294
      %v2317 = vsel %vm2307, %v2294, %v2296
      %v2318 = vsel %vm2307, %v2296, %v2298
      %v2319 = vsel %vm2307, %v2298, %v2300
      %v2320 = vsel %vm2307, %v2300, %v2302
      %v2321 = vsel %vm2307, %v2302, %v2304
      %v2322 = vsel %vm2307, %v2304, %v2306
      %v2339 = vld [vmem:[%s3] sm:$0xff]
      %v2340 = vld [vmem:[%s3 + $0x8] sm:$0xff]
      %v2341 = vld [vmem:[%s4] sm:$0xff]
      %v2342 = vld [vmem:[%s4 + $0x8] sm:$0xff]
      %2344 = vset.pattern.permute.xlu0 0
      %2345 = vperm.xlu0 %2344, %v2341
      %v2346 = vpop.permute.xlu0 %2345
      %2349 = vset.pattern.permute.xlu0 0
      %2350 = vperm.xlu0 %2349, %v2342
      %v2351 = vpop.permute.xlu0 %2350
      %vm2353 = vcmask 588800
      %v2355 = vsel %vm2353, %v2339, 0
      %v2358 = vsel %vm2353, %v2340, 0
      %2360 = vmatprep.subr.mxu0 %v1799
      %2361 = vmatpush1.msra.mxu0 %v1798
      %2362 = vmatprep.subr.mxu0 %v1863
      %2363 = vmatpush1.msra.mxu0 %v1862
      %2364 = vmatprep.subr.mxu0 %v1927
      %2365 = vmatpush1.msra.mxu0 %v1926
      %2366 = vmatprep.subr.mxu0 %v1990
      %2367 = vmatpush1.msra.mxu0 %v1989
      %2368 = vmatprep.subr.mxu0 %v2053
      %2369 = vmatpush1.msra.mxu0 %v2052
      %2370 = vmatprep.subr.mxu0 %v2117
      %2371 = vmatpush1.msra.mxu0 %v2116
      %2372 = vmatprep.subr.mxu0 %v2181
      %2373 = vmatpush1.msra.mxu0 %v2180
      %2374 = vmatprep.subr.mxu0 %v2245
      %2375 = vmatpush1.msra.mxu0 %v2244
      %2376 = vmatprep.subr.mxu0 %v2309
      %2377 = vmatpush1.msra.mxu0 %v2308
      %2378 = vmatprep.subr.mxu0 0.0
      %2379 = vmatpush1.msra.mxu0 0.0
      %2380 = vmatprep.subr.mxu0 0.0
      %2381 = vmatpush1.msra.mxu0 0.0
      %2382 = vmatprep.subr.mxu0 0.0
      %2383 = vmatpush1.msra.mxu0 0.0
      %2384 = vmatprep.subr.mxu0 0.0
      %2385 = vmatpush1.msra.mxu0 0.0
      %2386 = vmatprep.subr.mxu0 0.0
      %2387 = vmatpush1.msra.mxu0 0.0
      %2388 = vmatprep.subr.mxu0 0.0
      %2389 = vmatpush1.msra.mxu0 0.0
      %2390 = vmatprep.subr.mxu0 0.0
      %2391 = vmatpush1.msra.mxu0 0.0
      %2392 = vmatprep.subr.mxu0 0.0
      %2393 = vmatpush1.msra.mxu0 0.0
      %2394 = vmatprep.subr.mxu0 0.0
      %2395 = vmatpush1.msra.mxu0 0.0
      %2396 = vmatprep.subr.mxu0 0.0
      %2397 = vmatpush1.msra.mxu0 0.0
      %2398 = vmatprep.subr.mxu0 0.0
      %2399 = vmatpush1.msra.mxu0 0.0
      %2400 = vmatprep.subr.mxu0 0.0
      %2401 = vmatpush1.msra.mxu0 0.0
      %2402 = vmatprep.subr.mxu0 0.0
      %2403 = vmatpush1.msra.mxu0 0.0
      %2404 = vmatprep.subr.mxu0 0.0
      %2405 = vmatpush1.msra.mxu0 0.0
      %2406 = vmatprep.subr.mxu0 0.0
      %2407 = vmatpush1.msra.mxu0 0.0
      %2408 = vmatprep.subr.mxu0 0.0
      %2409 = vmatpush1.msra.mxu0 0.0
      %2410 = vmatprep.subr.mxu0 0.0
      %2411 = vmatpush1.msra.mxu0 0.0
      %2412 = vmatprep.subr.mxu0 0.0
      %2413 = vmatpush1.msra.mxu0 0.0
      %2414 = vmatprep.subr.mxu0 0.0
      %2415 = vmatpush1.msra.mxu0 0.0
      %2416 = vmatprep.subr.mxu0 0.0
      %2417 = vmatpush1.msra.mxu0 0.0
      %2418 = vmatprep.subr.mxu0 0.0
      %2419 = vmatpush1.msra.mxu0 0.0
      %2420 = vmatprep.subr.mxu0 0.0
      %2421 = vmatpush1.msra.mxu0 0.0
      %2422 = vmatprep.subr.mxu0 0.0
      %2423 = vmatpush1.msra.mxu0 0.0
      %2424 = vmatprep.mubr.f32.mxu0 0.0
      %2425 = vmatmul.mubr.f32.gmra.mrb[0].mxu0 %v2355
      %v2426 = vpop.f32.mrb[0].mxu0
      %v2427 = vadd.f32 %v2346, %v2426
      %v2428 = vpop.f32.mrb[0].mxu0
      %v2429 = vadd.f32 %v2346, %v2428
      %2430 = vmatprep.mubr.f32.mxu0 0.0
      %2431 = vmatmul.mubr.f32.gmra.mrb[0].mxu0 %v2358
      %v2432 = vpop.f32.mrb[0].mxu0
      %v2433 = vadd.f32 %v2351, %v2432
      %v2434 = vpop.f32.mrb[0].mxu0
      %v2435 = vadd.f32 %v2351, %v2434
      %2436 = vdwg.mxu0
      %2437 = vmatprep.subr.mxu0 %v1801
      %2438 = vmatpush1.msra.mxu0 %v1800
      %2439 = vmatprep.subr.mxu0 %v1865
      %2440 = vmatpush1.msra.mxu0 %v1864
      %2441 = vmatprep.subr.mxu0 %v1929
      %2442 = vmatpush1.msra.mxu0 %v1928
      %2443 = vmatprep.subr.mxu0 %v1992
      %2444 = vmatpush1.msra.mxu0 %v1991
      %2445 = vmatprep.subr.mxu0 %v2055
      %2446 = vmatpush1.msra.mxu0 %v2054
      %2447 = vmatprep.subr.mxu0 %v2119
      %2448 = vmatpush1.msra.mxu0 %v2118
      %2449 = vmatprep.subr.mxu0 %v2183
      %2450 = vmatpush1.msra.mxu0 %v2182
      %2451 = vmatprep.subr.mxu0 %v2247
      %2452 = vmatpush1.msra.mxu0 %v2246
      %2453 = vmatprep.subr.mxu0 %v2311
      %2454 = vmatpush1.msra.mxu0 %v2310
      %2455 = vmatprep.subr.mxu0 0.0
      %2456 = vmatpush1.msra.mxu0 0.0
      %2457 = vmatprep.subr.mxu0 0.0
      %2458 = vmatpush1.msra.mxu0 0.0
      %2459 = vmatprep.subr.mxu0 0.0
      %2460 = vmatpush1.msra.mxu0 0.0
      %2461 = vmatprep.subr.mxu0 0.0
      %2462 = vmatpush1.msra.mxu0 0.0
      %2463 = vmatprep.subr.mxu0 0.0
      %2464 = vmatpush1.msra.mxu0 0.0
      %2465 = vmatprep.subr.mxu0 0.0
      %2466 = vmatpush1.msra.mxu0 0.0
      %2467 = vmatprep.subr.mxu0 0.0
      %2468 = vmatpush1.msra.mxu0 0.0
      %2469 = vmatprep.subr.mxu0 0.0
      %2470 = vmatpush1.msra.mxu0 0.0
      %2471 = vmatprep.subr.mxu0 0.0
      %2472 = vmatpush1.msra.mxu0 0.0
      %2473 = vmatprep.subr.mxu0 0.0
      %2474 = vmatpush1.msra.mxu0 0.0
      %2475 = vmatprep.subr.mxu0 0.0
      %2476 = vmatpush1.msra.mxu0 0.0
      %2477 = vmatprep.subr.mxu0 0.0
      %2478 = vmatpush1.msra.mxu0 0.0
      %2479 = vmatprep.subr.mxu0 0.0
      %2480 = vmatpush1.msra.mxu0 0.0
      %2481 = vmatprep.subr.mxu0 0.0
      %2482 = vmatpush1.msra.mxu0 0.0
      %2483 = vmatprep.subr.mxu0 0.0
      %2484 = vmatpush1.msra.mxu0 0.0
      %2485 = vmatprep.subr.mxu0 0.0
      %2486 = vmatpush1.msra.mxu0 0.0
      %2487 = vmatprep.subr.mxu0 0.0
      %2488 = vmatpush1.msra.mxu0 0.0
      %2489 = vmatprep.subr.mxu0 0.0
      %2490 = vmatpush1.msra.mxu0 0.0
      %2491 = vmatprep.subr.mxu0 0.0
      %2492 = vmatpush1.msra.mxu0 0.0
      %2493 = vmatprep.subr.mxu0 0.0
      %2494 = vmatpush1.msra.mxu0 0.0
      %2495 = vmatprep.subr.mxu0 0.0
      %2496 = vmatpush1.msra.mxu0 0.0
      %2497 = vmatprep.subr.mxu0 0.0
      %2498 = vmatpush1.msra.mxu0 0.0
      %2499 = vmatprep.subr.mxu0 0.0
      %2500 = vmatpush1.msra.mxu0 0.0
      %2501 = vmatprep.mubr.f32.mxu0 0.0
      %2502 = vmatmul.mubr.f32.gmra.mrb[0].mxu0 %v2355
      %v2503 = vpop.f32.mrb[0].mxu0
      %v2504 = vadd.f32 %v2346, %v2503
      %v2505 = vpop.f32.mrb[0].mxu0
      %v2506 = vadd.f32 %v2346, %v2505
      %2507 = vmatprep.mubr.f32.mxu0 0.0
      %2508 = vmatmul.mubr.f32.gmra.mrb[0].mxu0 %v2358
      %v2509 = vpop.f32.mrb[0].mxu0
      %v2510 = vadd.f32 %v2351, %v2509
      %v2511 = vpop.f32.mrb[0].mxu0
      %v2512 = vadd.f32 %v2351, %v2511
      %2513 = vdwg.mxu0
      %2514 = vmatprep.subr.mxu0 %v1803
      %2515 = vmatpush1.msra.mxu0 %v1802
      %2516 = vmatprep.subr.mxu0 %v1867
      %2517 = vmatpush1.msra.mxu0 %v1866
      %2518 = vmatprep.subr.mxu0 %v1931
      %2519 = vmatpush1.msra.mxu0 %v1930
      %2520 = vmatprep.subr.mxu0 %v1994
      %2521 = vmatpush1.msra.mxu0 %v1993
      %2522 = vmatprep.subr.mxu0 %v2057
      %2523 = vmatpush1.msra.mxu0 %v2056
      %2524 = vmatprep.subr.mxu0 %v2121
      %2525 = vmatpush1.msra.mxu0 %v2120
      %2526 = vmatprep.subr.mxu0 %v2185
      %2527 = vmatpush1.msra.mxu0 %v2184
      %2528 = vmatprep.subr.mxu0 %v2249
      %2529 = vmatpush1.msra.mxu0 %v2248
      %2530 = vmatprep.subr.mxu0 %v2313
      %2531 = vmatpush1.msra.mxu0 %v2312
      %2532 = vmatprep.subr.mxu0 0.0
      %2533 = vmatpush1.msra.mxu0 0.0
      %2534 = vmatprep.subr.mxu0 0.0
      %2535 = vmatpush1.msra.mxu0 0.0
      %2536 = vmatprep.subr.mxu0 0.0
      %2537 = vmatpush1.msra.mxu0 0.0
      %2538 = vmatprep.subr.mxu0 0.0
      %2539 = vmatpush1.msra.mxu0 0.0
      %2540 = vmatprep.subr.mxu0 0.0
      %2541 = vmatpush1.msra.mxu0 0.0
      %2542 = vmatprep.subr.mxu0 0.0
      %2543 = vmatpush1.msra.mxu0 0.0
      %2544 = vmatprep.subr.mxu0 0.0
      %2545 = vmatpush1.msra.mxu0 0.0
      %2546 = vmatprep.subr.mxu0 0.0
      %2547 = vmatpush1.msra.mxu0 0.0
      %2548 = vmatprep.subr.mxu0 0.0
      %2549 = vmatpush1.msra.mxu0 0.0
      %2550 = vmatprep.subr.mxu0 0.0
      %2551 = vmatpush1.msra.mxu0 0.0
      %2552 = vmatprep.subr.mxu0 0.0
      %2553 = vmatpush1.msra.mxu0 0.0
      %2554 = vmatprep.subr.mxu0 0.0
      %2555 = vmatpush1.msra.mxu0 0.0
      %2556 = vmatprep.subr.mxu0 0.0
      %2557 = vmatpush1.msra.mxu0 0.0
      %2558 = vmatprep.subr.mxu0 0.0
      %2559 = vmatpush1.msra.mxu0 0.0
      %2560 = vmatprep.subr.mxu0 0.0
      %2561 = vmatpush1.msra.mxu0 0.0
      %2562 = vmatprep.subr.mxu0 0.0
      %2563 = vmatpush1.msra.mxu0 0.0
      %2564 = vmatprep.subr.mxu0 0.0
      %2565 = vmatpush1.msra.mxu0 0.0
      %2566 = vmatprep.subr.mxu0 0.0
      %2567 = vmatpush1.msra.mxu0 0.0
      %2568 = vmatprep.subr.mxu0 0.0
      %2569 = vmatpush1.msra.mxu0 0.0
      %2570 = vmatprep.subr.mxu0 0.0
      %2571 = vmatpush1.msra.mxu0 0.0
      %2572 = vmatprep.subr.mxu0 0.0
      %2573 = vmatpush1.msra.mxu0 0.0
      %2574 = vmatprep.subr.mxu0 0.0
      %2575 = vmatpush1.msra.mxu0 0.0
      %2576 = vmatprep.subr.mxu0 0.0
      %2577 = vmatpush1.msra.mxu0 0.0
      %2578 = vmatprep.mubr.f32.mxu0 0.0
      %2579 = vmatmul.mubr.f32.gmra.mrb[0].mxu0 %v2355
      %v2580 = vpop.f32.mrb[0].mxu0
      %v2581 = vadd.f32 %v2346, %v2580
      %v2582 = vpop.f32.mrb[0].mxu0
      %v2583 = vadd.f32 %v2346, %v2582
      %2584 = vmatprep.mubr.f32.mxu0 0.0
      %2585 = vmatmul.mubr.f32.gmra.mrb[0].mxu0 %v2358
      %v2586 = vpop.f32.mrb[0].mxu0
      %v2587 = vadd.f32 %v2351, %v2586
      %v2588 = vpop.f32.mrb[0].mxu0
      %v2589 = vadd.f32 %v2351, %v2588
      %2590 = vdwg.mxu0
      %2591 = vmatprep.subr.mxu0 %v1805
      %2592 = vmatpush1.msra.mxu0 %v1804
      %2593 = vmatprep.subr.mxu0 %v1869
      %2594 = vmatpush1.msra.mxu0 %v1868
      %2595 = vmatprep.subr.mxu0 %v1933
      %2596 = vmatpush1.msra.mxu0 %v1932
      %2597 = vmatprep.subr.mxu0 %v1996
      %2598 = vmatpush1.msra.mxu0 %v1995
      %2599 = vmatprep.subr.mxu0 %v2059
      %2600 = vmatpush1.msra.mxu0 %v2058
      %2601 = vmatprep.subr.mxu0 %v2123
      %2602 = vmatpush1.msra.mxu0 %v2122
      %2603 = vmatprep.subr.mxu0 %v2187
      %2604 = vmatpush1.msra.mxu0 %v2186
      %2605 = vmatprep.subr.mxu0 %v2251
      %2606 = vmatpush1.msra.mxu0 %v2250
      %2607 = vmatprep.subr.mxu0 %v2315
      %2608 = vmatpush1.msra.mxu0 %v2314
      %2609 = vmatprep.subr.mxu0 0.0
      %2610 = vmatpush1.msra.mxu0 0.0
      %2611 = vmatprep.subr.mxu0 0.0
      %2612 = vmatpush1.msra.mxu0 0.0
      %2613 = vmatprep.subr.mxu0 0.0
      %2614 = vmatpush1.msra.mxu0 0.0
      %2615 = vmatprep.subr.mxu0 0.0
      %2616 = vmatpush1.msra.mxu0 0.0
      %2617 = vmatprep.subr.mxu0 0.0
      %2618 = vmatpush1.msra.mxu0 0.0
      %2619 = vmatprep.subr.mxu0 0.0
      %2620 = vmatpush1.msra.mxu0 0.0
      %2621 = vmatprep.subr.mxu0 0.0
      %2622 = vmatpush1.msra.mxu0 0.0
      %2623 = vmatprep.subr.mxu0 0.0
      %2624 = vmatpush1.msra.mxu0 0.0
      %2625 = vmatprep.subr.mxu0 0.0
      %2626 = vmatpush1.msra.mxu0 0.0
      %2627 = vmatprep.subr.mxu0 0.0
      %2628 = vmatpush1.msra.mxu0 0.0
      %2629 = vmatprep.subr.mxu0 0.0
      %2630 = vmatpush1.msra.mxu0 0.0
      %2631 = vmatprep.subr.mxu0 0.0
      %2632 = vmatpush1.msra.mxu0 0.0
      %2633 = vmatprep.subr.mxu0 0.0
      %2634 = vmatpush1.msra.mxu0 0.0
      %2635 = vmatprep.subr.mxu0 0.0
      %2636 = vmatpush1.msra.mxu0 0.0
      %2637 = vmatprep.subr.mxu0 0.0
      %2638 = vmatpush1.msra.mxu0 0.0
      %2639 = vmatprep.subr.mxu0 0.0
      %2640 = vmatpush1.msra.mxu0 0.0
      %2641 = vmatprep.subr.mxu0 0.0
      %2642 = vmatpush1.msra.mxu0 0.0
      %2643 = vmatprep.subr.mxu0 0.0
      %2644 = vmatpush1.msra.mxu0 0.0
      %2645 = vmatprep.subr.mxu0 0.0
      %2646 = vmatpush1.msra.mxu0 0.0
      %2647 = vmatprep.subr.mxu0 0.0
      %2648 = vmatpush1.msra.mxu0 0.0
      %2649 = vmatprep.subr.mxu0 0.0
      %2650 = vmatpush1.msra.mxu0 0.0
      %2651 = vmatprep.subr.mxu0 0.0
      %2652 = vmatpush1.msra.mxu0 0.0
      %2653 = vmatprep.subr.mxu0 0.0
      %2654 = vmatpush1.msra.mxu0 0.0
      %2655 = vmatprep.mubr.f32.mxu0 0.0
      %2656 = vmatmul.mubr.f32.gmra.mrb[0].mxu0 %v2355
      %v2657 = vpop.f32.mrb[0].mxu0
      %v2658 = vadd.f32 %v2346, %v2657
      %v2659 = vpop.f32.mrb[0].mxu0
      %v2660 = vadd.f32 %v2346, %v2659
      %2661 = vmatprep.mubr.f32.mxu0 0.0
      %2662 = vmatmul.mubr.f32.gmra.mrb[0].mxu0 %v2358
      %v2663 = vpop.f32.mrb[0].mxu0
      %v2664 = vadd.f32 %v2351, %v2663
      %v2665 = vpop.f32.mrb[0].mxu0
      %v2666 = vadd.f32 %v2351, %v2665
      %2667 = vdwg.mxu0
      %2668 = vmatprep.subr.mxu0 %v1807
      %2669 = vmatpush1.msra.mxu0 %v1806
      %2670 = vmatprep.subr.mxu0 %v1871
      %2671 = vmatpush1.msra.mxu0 %v1870
      %2672 = vmatprep.subr.mxu0 %v1935
      %2673 = vmatpush1.msra.mxu0 %v1934
      %2674 = vmatprep.subr.mxu0 %v1998
      %2675 = vmatpush1.msra.mxu0 %v1997
      %2676 = vmatprep.subr.mxu0 %v2061
      %2677 = vmatpush1.msra.mxu0 %v2060
      %2678 = vmatprep.subr.mxu0 %v2125
      %2679 = vmatpush1.msra.mxu0 %v2124
      %2680 = vmatprep.subr.mxu0 %v2189
      %2681 = vmatpush1.msra.mxu0 %v2188
      %2682 = vmatprep.subr.mxu0 %v2253
      %2683 = vmatpush1.msra.mxu0 %v2252
      %2684 = vmatprep.subr.mxu0 %v2317
      %2685 = vmatpush1.msra.mxu0 %v2316
      %2686 = vmatprep.subr.mxu0 0.0
      %2687 = vmatpush1.msra.mxu0 0.0
      %2688 = vmatprep.subr.mxu0 0.0
      %2689 = vmatpush1.msra.mxu0 0.0
      %2690 = vmatprep.subr.mxu0 0.0
      %2691 = vmatpush1.msra.mxu0 0.0
      %2692 = vmatprep.subr.mxu0 0.0
      %2693 = vmatpush1.msra.mxu0 0.0
      %2694 = vmatprep.subr.mxu0 0.0
      %2695 = vmatpush1.msra.mxu0 0.0
      %2696 = vmatprep.subr.mxu0 0.0
      %2697 = vmatpush1.msra.mxu0 0.0
      %2698 = vmatprep.subr.mxu0 0.0
      %2699 = vmatpush1.msra.mxu0 0.0
      %2700 = vmatprep.subr.mxu0 0.0
      %2701 = vmatpush1.msra.mxu0 0.0
      %2702 = vmatprep.subr.mxu0 0.0
      %2703 = vmatpush1.msra.mxu0 0.0
      %2704 = vmatprep.subr.mxu0 0.0
      %2705 = vmatpush1.msra.mxu0 0.0
      %2706 = vmatprep.subr.mxu0 0.0
      %2707 = vmatpush1.msra.mxu0 0.0
      %2708 = vmatprep.subr.mxu0 0.0
      %2709 = vmatpush1.msra.mxu0 0.0
      %2710 = vmatprep.subr.mxu0 0.0
      %2711 = vmatpush1.msra.mxu0 0.0
      %2712 = vmatprep.subr.mxu0 0.0
      %2713 = vmatpush1.msra.mxu0 0.0
      %2714 = vmatprep.subr.mxu0 0.0
      %2715 = vmatpush1.msra.mxu0 0.0
      %2716 = vmatprep.subr.mxu0 0.0
      %2717 = vmatpush1.msra.mxu0 0.0
      %2718 = vmatprep.subr.mxu0 0.0
      %2719 = vmatpush1.msra.mxu0 0.0
      %2720 = vmatprep.subr.mxu0 0.0
      %2721 = vmatpush1.msra.mxu0 0.0
      %2722 = vmatprep.subr.mxu0 0.0
      %2723 = vmatpush1.msra.mxu0 0.0
      %2724 = vmatprep.subr.mxu0 0.0
      %2725 = vmatpush1.msra.mxu0 0.0
      %2726 = vmatprep.subr.mxu0 0.0
      %2727 = vmatpush1.msra.mxu0 0.0
      %2728 = vmatprep.subr.mxu0 0.0
      %2729 = vmatpush1.msra.mxu0 0.0
      %2730 = vmatprep.subr.mxu0 0.0
      %2731 = vmatpush1.msra.mxu0 0.0
      %2732 = vmatprep.mubr.f32.mxu0 0.0
      %2733 = vmatmul.mubr.f32.gmra.mrb[0].mxu0 %v2355
      %v2734 = vpop.f32.mrb[0].mxu0
      %v2735 = vadd.f32 %v2346, %v2734
      %v2736 = vpop.f32.mrb[0].mxu0
      %v2737 = vadd.f32 %v2346, %v2736
      %2738 = vmatprep.mubr.f32.mxu0 0.0
      %2739 = vmatmul.mubr.f32.gmra.mrb[0].mxu0 %v2358
      %v2740 = vpop.f32.mrb[0].mxu0
      %v2741 = vadd.f32 %v2351, %v2740
      %v2742 = vpop.f32.mrb[0].mxu0
      %v2743 = vadd.f32 %v2351, %v2742
      %2744 = vdwg.mxu0
      %2745 = vmatprep.subr.mxu0 %v1809
      %2746 = vmatpush1.msra.mxu0 %v1808
      %2747 = vmatprep.subr.mxu0 %v1873
      %2748 = vmatpush1.msra.mxu0 %v1872
      %2749 = vmatprep.subr.mxu0 %v1937
      %2750 = vmatpush1.msra.mxu0 %v1936
      %2751 = vmatprep.subr.mxu0 %v2000
      %2752 = vmatpush1.msra.mxu0 %v1999
      %2753 = vmatprep.subr.mxu0 %v2063
      %2754 = vmatpush1.msra.mxu0 %v2062
      %2755 = vmatprep.subr.mxu0 %v2127
      %2756 = vmatpush1.msra.mxu0 %v2126
      %2757 = vmatprep.subr.mxu0 %v2191
      %2758 = vmatpush1.msra.mxu0 %v2190
      %2759 = vmatprep.subr.mxu0 %v2255
      %2760 = vmatpush1.msra.mxu0 %v2254
      %2761 = vmatprep.subr.mxu0 %v2319
      %2762 = vmatpush1.msra.mxu0 %v2318
      %2763 = vmatprep.subr.mxu0 0.0
      %2764 = vmatpush1.msra.mxu0 0.0
      %2765 = vmatprep.subr.mxu0 0.0
      %2766 = vmatpush1.msra.mxu0 0.0
      %2767 = vmatprep.subr.mxu0 0.0
      %2768 = vmatpush1.msra.mxu0 0.0
      %2769 = vmatprep.subr.mxu0 0.0
      %2770 = vmatpush1.msra.mxu0 0.0
      %2771 = vmatprep.subr.mxu0 0.0
      %2772 = vmatpush1.msra.mxu0 0.0
      %2773 = vmatprep.subr.mxu0 0.0
      %2774 = vmatpush1.msra.mxu0 0.0
      %2775 = vmatprep.subr.mxu0 0.0
      %2776 = vmatpush1.msra.mxu0 0.0
      %2777 = vmatprep.subr.mxu0 0.0
      %2778 = vmatpush1.msra.mxu0 0.0
      %2779 = vmatprep.subr.mxu0 0.0
      %2780 = vmatpush1.msra.mxu0 0.0
      %2781 = vmatprep.subr.mxu0 0.0
      %2782 = vmatpush1.msra.mxu0 0.0
      %2783 = vmatprep.subr.mxu0 0.0
      %2784 = vmatpush1.msra.mxu0 0.0
      %2785 = vmatprep.subr.mxu0 0.0
      %2786 = vmatpush1.msra.mxu0 0.0
      %2787 = vmatprep.subr.mxu0 0.0
      %2788 = vmatpush1.msra.mxu0 0.0
      %2789 = vmatprep.subr.mxu0 0.0
      %2790 = vmatpush1.msra.mxu0 0.0
      %2791 = vmatprep.subr.mxu0 0.0
      %2792 = vmatpush1.msra.mxu0 0.0
      %2793 = vmatprep.subr.mxu0 0.0
      %2794 = vmatpush1.msra.mxu0 0.0
      %2795 = vmatprep.subr.mxu0 0.0
      %2796 = vmatpush1.msra.mxu0 0.0
      %2797 = vmatprep.subr.mxu0 0.0
      %2798 = vmatpush1.msra.mxu0 0.0
      %2799 = vmatprep.subr.mxu0 0.0
      %2800 = vmatpush1.msra.mxu0 0.0
      %2801 = vmatprep.subr.mxu0 0.0
      %2802 = vmatpush1.msra.mxu0 0.0
      %2803 = vmatprep.subr.mxu0 0.0
      %2804 = vmatpush1.msra.mxu0 0.0
      %2805 = vmatprep.subr.mxu0 0.0
      %2806 = vmatpush1.msra.mxu0 0.0
      %2807 = vmatprep.subr.mxu0 0.0
      %2808 = vmatpush1.msra.mxu0 0.0
      %2809 = vmatprep.mubr.f32.mxu0 0.0
      %2810 = vmatmul.mubr.f32.gmra.mrb[0].mxu0 %v2355
      %v2811 = vpop.f32.mrb[0].mxu0
      %v2812 = vadd.f32 %v2346, %v2811
      %v2813 = vpop.f32.mrb[0].mxu0
      %v2814 = vadd.f32 %v2346, %v2813
      %2815 = vmatprep.mubr.f32.mxu0 0.0
      %2816 = vmatmul.mubr.f32.gmra.mrb[0].mxu0 %v2358
      %v2817 = vpop.f32.mrb[0].mxu0
      %v2818 = vadd.f32 %v2351, %v2817
      %v2819 = vpop.f32.mrb[0].mxu0
      %v2820 = vadd.f32 %v2351, %v2819
      %2821 = vdwg.mxu0
      %2822 = vmatprep.subr.mxu0 %v1811
      %2823 = vmatpush1.msra.mxu0 %v1810
      %2824 = vmatprep.subr.mxu0 %v1875
      %2825 = vmatpush1.msra.mxu0 %v1874
      %2826 = vmatprep.subr.mxu0 %v1939
      %2827 = vmatpush1.msra.mxu0 %v1938
      %2828 = vmatprep.subr.mxu0 %v2002
      %2829 = vmatpush1.msra.mxu0 %v2001
      %2830 = vmatprep.subr.mxu0 %v2065
      %2831 = vmatpush1.msra.mxu0 %v2064
      %2832 = vmatprep.subr.mxu0 %v2129
      %2833 = vmatpush1.msra.mxu0 %v2128
      %2834 = vmatprep.subr.mxu0 %v2193
      %2835 = vmatpush1.msra.mxu0 %v2192
      %2836 = vmatprep.subr.mxu0 %v2257
      %2837 = vmatpush1.msra.mxu0 %v2256
      %2838 = vmatprep.subr.mxu0 %v2321
      %2839 = vmatpush1.msra.mxu0 %v2320
      %2840 = vmatprep.subr.mxu0 0.0
      %2841 = vmatpush1.msra.mxu0 0.0
      %2842 = vmatprep.subr.mxu0 0.0
      %2843 = vmatpush1.msra.mxu0 0.0
      %2844 = vmatprep.subr.mxu0 0.0
      %2845 = vmatpush1.msra.mxu0 0.0
      %2846 = vmatprep.subr.mxu0 0.0
      %2847 = vmatpush1.msra.mxu0 0.0
      %2848 = vmatprep.subr.mxu0 0.0
      %2849 = vmatpush1.msra.mxu0 0.0
      %2850 = vmatprep.subr.mxu0 0.0
      %2851 = vmatpush1.msra.mxu0 0.0
      %2852 = vmatprep.subr.mxu0 0.0
      %2853 = vmatpush1.msra.mxu0 0.0
      %2854 = vmatprep.subr.mxu0 0.0
      %2855 = vmatpush1.msra.mxu0 0.0
      %2856 = vmatprep.subr.mxu0 0.0
      %2857 = vmatpush1.msra.mxu0 0.0
      %2858 = vmatprep.subr.mxu0 0.0
      %2859 = vmatpush1.msra.mxu0 0.0
      %2860 = vmatprep.subr.mxu0 0.0
      %2861 = vmatpush1.msra.mxu0 0.0
      %2862 = vmatprep.subr.mxu0 0.0
      %2863 = vmatpush1.msra.mxu0 0.0
      %2864 = vmatprep.subr.mxu0 0.0
      %2865 = vmatpush1.msra.mxu0 0.0
      %2866 = vmatprep.subr.mxu0 0.0
      %2867 = vmatpush1.msra.mxu0 0.0
      %2868 = vmatprep.subr.mxu0 0.0
      %2869 = vmatpush1.msra.mxu0 0.0
      %2870 = vmatprep.subr.mxu0 0.0
      %2871 = vmatpush1.msra.mxu0 0.0
      %2872 = vmatprep.subr.mxu0 0.0
      %2873 = vmatpush1.msra.mxu0 0.0
      %2874 = vmatprep.subr.mxu0 0.0
      %2875 = vmatpush1.msra.mxu0 0.0
      %2876 = vmatprep.subr.mxu0 0.0
      %2877 = vmatpush1.msra.mxu0 0.0
      %2878 = vmatprep.subr.mxu0 0.0
      %2879 = vmatpush1.msra.mxu0 0.0
      %2880 = vmatprep.subr.mxu0 0.0
      %2881 = vmatpush1.msra.mxu0 0.0
      %2882 = vmatprep.subr.mxu0 0.0
      %2883 = vmatpush1.msra.mxu0 0.0
      %2884 = vmatprep.subr.mxu0 0.0
      %2885 = vmatpush1.msra.mxu0 0.0
      %2886 = vmatprep.mubr.f32.mxu0 0.0
      %2887 = vmatmul.mubr.f32.gmra.mrb[0].mxu0 %v2355
      %v2888 = vpop.f32.mrb[0].mxu0
      %v2889 = vadd.f32 %v2346, %v2888
      %v2890 = vpop.f32.mrb[0].mxu0
      %v2891 = vadd.f32 %v2346, %v2890
      %2892 = vmatprep.mubr.f32.mxu0 0.0
      %2893 = vmatmul.mubr.f32.gmra.mrb[0].mxu0 %v2358
      %v2894 = vpop.f32.mrb[0].mxu0
      %v2895 = vadd.f32 %v2351, %v2894
      %v2896 = vpop.f32.mrb[0].mxu0
      %v2897 = vadd.f32 %v2351, %v2896
      %2898 = vdwg.mxu0
      %2899 = vmatprep.subr.mxu0 %v1813
      %2900 = vmatpush1.msra.mxu0 %v1812
      %2901 = vmatprep.subr.mxu0 %v1861
      %2902 = vmatpush1.msra.mxu0 %v1876
      %2903 = vmatprep.subr.mxu0 %v1924
      %2904 = vmatpush1.msra.mxu0 %v1940
      %2905 = vmatprep.subr.mxu0 %v1988
      %2906 = vmatpush1.msra.mxu0 %v2003
      %2907 = vmatprep.subr.mxu0 %v2051
      %2908 = vmatpush1.msra.mxu0 %v2066
      %2909 = vmatprep.subr.mxu0 %v2114
      %2910 = vmatpush1.msra.mxu0 %v2130
      %2911 = vmatprep.subr.mxu0 %v2178
      %2912 = vmatpush1.msra.mxu0 %v2194
      %2913 = vmatprep.subr.mxu0 %v2242
      %2914 = vmatpush1.msra.mxu0 %v2258
      %2915 = vmatprep.subr.mxu0 %v2306
      %2916 = vmatpush1.msra.mxu0 %v2322
      %2917 = vmatprep.subr.mxu0 0.0
      %2918 = vmatpush1.msra.mxu0 0.0
      %2919 = vmatprep.subr.mxu0 0.0
      %2920 = vmatpush1.msra.mxu0 0.0
      %2921 = vmatprep.subr.mxu0 0.0
      %2922 = vmatpush1.msra.mxu0 0.0
      %2923 = vmatprep.subr.mxu0 0.0
      %2924 = vmatpush1.msra.mxu0 0.0
      %2925 = vmatprep.subr.mxu0 0.0
      %2926 = vmatpush1.msra.mxu0 0.0
      %2927 = vmatprep.subr.mxu0 0.0
      %2928 = vmatpush1.msra.mxu0 0.0
      %2929 = vmatprep.subr.mxu0 0.0
      %2930 = vmatpush1.msra.mxu0 0.0
      %2931 = vmatprep.subr.mxu0 0.0
      %2932 = vmatpush1.msra.mxu0 0.0
      %2933 = vmatprep.subr.mxu0 0.0
      %2934 = vmatpush1.msra.mxu0 0.0
      %2935 = vmatprep.subr.mxu0 0.0
      %2936 = vmatpush1.msra.mxu0 0.0
      %2937 = vmatprep.subr.mxu0 0.0
      %2938 = vmatpush1.msra.mxu0 0.0
      %2939 = vmatprep.subr.mxu0 0.0
      %2940 = vmatpush1.msra.mxu0 0.0
      %2941 = vmatprep.subr.mxu0 0.0
      %2942 = vmatpush1.msra.mxu0 0.0
      %2943 = vmatprep.subr.mxu0 0.0
      %2944 = vmatpush1.msra.mxu0 0.0
      %2945 = vmatprep.subr.mxu0 0.0
      %2946 = vmatpush1.msra.mxu0 0.0
      %2947 = vmatprep.subr.mxu0 0.0
      %2948 = vmatpush1.msra.mxu0 0.0
      %2949 = vmatprep.subr.mxu0 0.0
      %2950 = vmatpush1.msra.mxu0 0.0
      %2951 = vmatprep.subr.mxu0 0.0
      %2952 = vmatpush1.msra.mxu0 0.0
      %2953 = vmatprep.subr.mxu0 0.0
      %2954 = vmatpush1.msra.mxu0 0.0
      %2955 = vmatprep.subr.mxu0 0.0
      %2956 = vmatpush1.msra.mxu0 0.0
      %2957 = vmatprep.subr.mxu0 0.0
      %2958 = vmatpush1.msra.mxu0 0.0
      %2959 = vmatprep.subr.mxu0 0.0
      %2960 = vmatpush1.msra.mxu0 0.0
      %2961 = vmatprep.subr.mxu0 0.0
      %2962 = vmatpush1.msra.mxu0 0.0
      %2963 = vmatprep.mubr.f32.mxu0 0.0
      %2964 = vmatmul.mubr.f32.gmra.mrb[0].mxu0 %v2355
      %v2965 = vpop.f32.mrb[0].mxu0
      %v2966 = vadd.f32 %v2346, %v2965
      %v2967 = vpop.f32.mrb[0].mxu0
      %v2968 = vadd.f32 %v2346, %v2967
      %2969 = vmatprep.mubr.f32.mxu0 0.0
      %2970 = vmatmul.mubr.f32.gmra.mrb[0].mxu0 %v2358
      %v2971 = vpop.f32.mrb[0].mxu0
      %v2972 = vadd.f32 %v2351, %v2971
      %v2973 = vpop.f32.mrb[0].mxu0
      %v2974 = vadd.f32 %v2351, %v2973
      %2975 = vdwg.mxu0
      %v2976 = vmax.f32 %v2427, 0.0
      %v2977 = vmax.f32 %v2429, 0.0
      %v2978 = vmax.f32 %v2504, 0.0
      %v2979 = vmax.f32 %v2506, 0.0
      %v2980 = vmax.f32 %v2581, 0.0
      %v2981 = vmax.f32 %v2583, 0.0
      %v2982 = vmax.f32 %v2658, 0.0
      %v2983 = vmax.f32 %v2660, 0.0
      %v2984 = vmax.f32 %v2735, 0.0
      %v2985 = vmax.f32 %v2737, 0.0
      %v2986 = vmax.f32 %v2812, 0.0
      %v2987 = vmax.f32 %v2814, 0.0
      %v2988 = vmax.f32 %v2889, 0.0
      %v2989 = vmax.f32 %v2891, 0.0
      %v2990 = vmax.f32 %v2966, 0.0
      %v2991 = vmax.f32 %v2968, 0.0
      %v2992 = vmax.f32 %v2433, 0.0
      %v2993 = vmax.f32 %v2435, 0.0
      %v2994 = vmax.f32 %v2510, 0.0
      %v2995 = vmax.f32 %v2512, 0.0
      %v2996 = vmax.f32 %v2587, 0.0
      %v2997 = vmax.f32 %v2589, 0.0
      %v2998 = vmax.f32 %v2664, 0.0
      %v2999 = vmax.f32 %v2666, 0.0
      %v3000 = vmax.f32 %v2741, 0.0
      %v3001 = vmax.f32 %v2743, 0.0
      %v3002 = vmax.f32 %v2818, 0.0
      %v3003 = vmax.f32 %v2820, 0.0
      %v3004 = vmax.f32 %v2895, 0.0
      %v3005 = vmax.f32 %v2897, 0.0
      %v3006 = vmax.f32 %v2972, 0.0
      %v3007 = vmax.f32 %v2974, 0.0
      %3038 = vrot.lane.b32.xlu0 %v2976, 126
      %v3039 = vpop.permute.xlu0 %3038
      %3040 = vrot.lane.b32.xlu0 %v2977, 126
      %v3041 = vpop.permute.xlu0 %3040
      %3042 = vrot.lane.b32.xlu0 %v2978, 126
      %v3043 = vpop.permute.xlu0 %3042
      %3044 = vrot.lane.b32.xlu0 %v2979, 126
      %v3045 = vpop.permute.xlu0 %3044
      %3046 = vrot.lane.b32.xlu0 %v2980, 126
      %v3047 = vpop.permute.xlu0 %3046
      %3048 = vrot.lane.b32.xlu0 %v2981, 126
      %v3049 = vpop.permute.xlu0 %3048
      %3050 = vrot.lane.b32.xlu0 %v2982, 126
      %v3051 = vpop.permute.xlu0 %3050
      %3052 = vrot.lane.b32.xlu0 %v2983, 126
      %v3053 = vpop.permute.xlu0 %3052
      %3054 = vrot.lane.b32.xlu0 %v2984, 126
      %v3055 = vpop.permute.xlu0 %3054
      %3056 = vrot.lane.b32.xlu0 %v2985, 126
      %v3057 = vpop.permute.xlu0 %3056
      %3058 = vrot.lane.b32.xlu0 %v2986, 126
      %v3059 = vpop.permute.xlu0 %3058
      %3060 = vrot.lane.b32.xlu0 %v2987, 126
      %v3061 = vpop.permute.xlu0 %3060
      %3062 = vrot.lane.b32.xlu0 %v2988, 126
      %v3063 = vpop.permute.xlu0 %3062
      %3064 = vrot.lane.b32.xlu0 %v2989, 126
      %v3065 = vpop.permute.xlu0 %3064
      %3066 = vrot.lane.b32.xlu0 %v2990, 126
      %v3067 = vpop.permute.xlu0 %3066
      %3068 = vrot.lane.b32.xlu0 %v2992, 126
      %v3069 = vpop.permute.xlu0 %3068
      %3070 = vrot.lane.b32.xlu0 %v2993, 126
      %v3071 = vpop.permute.xlu0 %3070
      %3072 = vrot.lane.b32.xlu0 %v2994, 126
      %v3073 = vpop.permute.xlu0 %3072
      %3074 = vrot.lane.b32.xlu0 %v2995, 126
      %v3075 = vpop.permute.xlu0 %3074
      %3076 = vrot.lane.b32.xlu0 %v2996, 126
      %v3077 = vpop.permute.xlu0 %3076
      %3078 = vrot.lane.b32.xlu0 %v2997, 126
      %v3079 = vpop.permute.xlu0 %3078
      %3080 = vrot.lane.b32.xlu0 %v2998, 126
      %v3081 = vpop.permute.xlu0 %3080
      %3082 = vrot.lane.b32.xlu0 %v2999, 126
      %v3083 = vpop.permute.xlu0 %3082
      %3084 = vrot.lane.b32.xlu0 %v3000, 126
      %v3085 = vpop.permute.xlu0 %3084
      %3086 = vrot.lane.b32.xlu0 %v3001, 126
      %v3087 = vpop.permute.xlu0 %3086
      %3088 = vrot.lane.b32.xlu0 %v3002, 126
      %v3089 = vpop.permute.xlu0 %3088
      %3090 = vrot.lane.b32.xlu0 %v3003, 126
      %v3091 = vpop.permute.xlu0 %3090
      %3092 = vrot.lane.b32.xlu0 %v3004, 126
      %v3093 = vpop.permute.xlu0 %3092
      %3094 = vrot.lane.b32.xlu0 %v3005, 126
      %v3095 = vpop.permute.xlu0 %3094
      %3096 = vrot.lane.b32.xlu0 %v3006, 126
      %v3097 = vpop.permute.xlu0 %3096
      %v3098 = vsel %vm469, %v3039, %v3041
      %v3099 = vsel %vm469, %v3041, %v3043
      %v3100 = vsel %vm469, %v3043, %v3045
      %v3101 = vsel %vm469, %v3045, %v3047
      %v3102 = vsel %vm469, %v3047, %v3049
      %v3103 = vsel %vm469, %v3049, %v3051
      %v3104 = vsel %vm469, %v3051, %v3053
      %v3105 = vsel %vm469, %v3053, %v3055
      %v3106 = vsel %vm469, %v3055, %v3057
      %v3107 = vsel %vm469, %v3057, %v3059
      %v3108 = vsel %vm469, %v3059, %v3061
      %v3109 = vsel %vm469, %v3061, %v3063
      %v3110 = vsel %vm469, %v3063, %v3065
      %v3111 = vsel %vm469, %v3065, %v3067
      %v3112 = vsel %vm469, %v3069, %v3071
      %v3113 = vsel %vm469, %v3071, %v3073
      %v3114 = vsel %vm469, %v3073, %v3075
      %v3115 = vsel %vm469, %v3075, %v3077
      %v3116 = vsel %vm469, %v3077, %v3079
      %v3117 = vsel %vm469, %v3079, %v3081
      %v3118 = vsel %vm469, %v3081, %v3083
      %v3119 = vsel %vm469, %v3083, %v3085
      %v3120 = vsel %vm469, %v3085, %v3087
      %v3121 = vsel %vm469, %v3087, %v3089
      %v3122 = vsel %vm469, %v3089, %v3091
      %v3123 = vsel %vm469, %v3091, %v3093
      %v3124 = vsel %vm469, %v3093, %v3095
      %v3125 = vsel %vm469, %v3095, %v3097
      %v3156 = vmax.f32 %v2976, %v3098
      %v3157 = vmax.f32 %v2977, %v3099
      %v3158 = vmax.f32 %v2978, %v3100
      %v3159 = vmax.f32 %v2979, %v3101
      %v3160 = vmax.f32 %v2980, %v3102
      %v3161 = vmax.f32 %v2981, %v3103
      %v3162 = vmax.f32 %v2982, %v3104
      %v3163 = vmax.f32 %v2983, %v3105
      %v3164 = vmax.f32 %v2984, %v3106
      %v3165 = vmax.f32 %v2985, %v3107
      %v3166 = vmax.f32 %v2986, %v3108
      %v3167 = vmax.f32 %v2987, %v3109
      %v3168 = vmax.f32 %v2988, %v3110
      %v3169 = vmax.f32 %v2989, %v3111
      %v3170 = vmax.f32 %v2990, %v3067
      %v3171 = vmax.f32 %v2992, %v3112
      %v3172 = vmax.f32 %v2993, %v3113
      %v3173 = vmax.f32 %v2994, %v3114
      %v3174 = vmax.f32 %v2995, %v3115
      %v3175 = vmax.f32 %v2996, %v3116
      %v3176 = vmax.f32 %v2997, %v3117
      %v3177 = vmax.f32 %v2998, %v3118
      %v3178 = vmax.f32 %v2999, %v3119
      %v3179 = vmax.f32 %v3000, %v3120
      %v3180 = vmax.f32 %v3001, %v3121
      %v3181 = vmax.f32 %v3002, %v3122
      %v3182 = vmax.f32 %v3003, %v3123
      %v3183 = vmax.f32 %v3004, %v3124
      %v3184 = vmax.f32 %v3005, %v3125
      %v3185 = vmax.f32 %v3006, %v3097
      %3188 = vrot.lane.b32.xlu0 %v2976, 96
      %v3189 = vpop.permute.xlu0 %3188
      %3190 = vrot.lane.b32.xlu0 %v2977, 96
      %v3191 = vpop.permute.xlu0 %3190
      %3192 = vrot.lane.b32.xlu0 %v2978, 96
      %v3193 = vpop.permute.xlu0 %3192
      %3194 = vrot.lane.b32.xlu0 %v2979, 96
      %v3195 = vpop.permute.xlu0 %3194
      %3196 = vrot.lane.b32.xlu0 %v2980, 96
      %v3197 = vpop.permute.xlu0 %3196
      %3198 = vrot.lane.b32.xlu0 %v2981, 96
      %v3199 = vpop.permute.xlu0 %3198
      %3200 = vrot.lane.b32.xlu0 %v2982, 96
      %v3201 = vpop.permute.xlu0 %3200
      %3202 = vrot.lane.b32.xlu0 %v2983, 96
      %v3203 = vpop.permute.xlu0 %3202
      %3204 = vrot.lane.b32.xlu0 %v2984, 96
      %v3205 = vpop.permute.xlu0 %3204
      %3206 = vrot.lane.b32.xlu0 %v2985, 96
      %v3207 = vpop.permute.xlu0 %3206
      %3208 = vrot.lane.b32.xlu0 %v2986, 96
      %v3209 = vpop.permute.xlu0 %3208
      %3210 = vrot.lane.b32.xlu0 %v2987, 96
      %v3211 = vpop.permute.xlu0 %3210
      %3212 = vrot.lane.b32.xlu0 %v2988, 96
      %v3213 = vpop.permute.xlu0 %3212
      %3214 = vrot.lane.b32.xlu0 %v2989, 96
      %v3215 = vpop.permute.xlu0 %3214
      %3216 = vrot.lane.b32.xlu0 %v2990, 96
      %v3217 = vpop.permute.xlu0 %3216
      %3218 = vrot.lane.b32.xlu0 %v2991, 96
      %v3219 = vpop.permute.xlu0 %3218
      %3220 = vrot.lane.b32.xlu0 %v2992, 96
      %v3221 = vpop.permute.xlu0 %3220
      %3222 = vrot.lane.b32.xlu0 %v2993, 96
      %v3223 = vpop.permute.xlu0 %3222
      %3224 = vrot.lane.b32.xlu0 %v2994, 96
      %v3225 = vpop.permute.xlu0 %3224
      %3226 = vrot.lane.b32.xlu0 %v2995, 96
      %v3227 = vpop.permute.xlu0 %3226
      %3228 = vrot.lane.b32.xlu0 %v2996, 96
      %v3229 = vpop.permute.xlu0 %3228
      %3230 = vrot.lane.b32.xlu0 %v2997, 96
      %v3231 = vpop.permute.xlu0 %3230
      %3232 = vrot.lane.b32.xlu0 %v2998, 96
      %v3233 = vpop.permute.xlu0 %3232
      %3234 = vrot.lane.b32.xlu0 %v2999, 96
      %v3235 = vpop.permute.xlu0 %3234
      %3236 = vrot.lane.b32.xlu0 %v3000, 96
      %v3237 = vpop.permute.xlu0 %3236
      %3238 = vrot.lane.b32.xlu0 %v3001, 96
      %v3239 = vpop.permute.xlu0 %3238
      %3240 = vrot.lane.b32.xlu0 %v3002, 96
      %v3241 = vpop.permute.xlu0 %3240
      %3242 = vrot.lane.b32.xlu0 %v3003, 96
      %v3243 = vpop.permute.xlu0 %3242
      %3244 = vrot.lane.b32.xlu0 %v3004, 96
      %v3245 = vpop.permute.xlu0 %3244
      %3246 = vrot.lane.b32.xlu0 %v3005, 96
      %v3247 = vpop.permute.xlu0 %3246
      %3248 = vrot.lane.b32.xlu0 %v3006, 96
      %v3249 = vpop.permute.xlu0 %3248
      %3250 = vrot.lane.b32.xlu0 %v3007, 96
      %v3251 = vpop.permute.xlu0 %3250
      %v3252 = vsel %vm725, %v3189, %v3191
      %v3253 = vsel %vm725, %v3191, %v3193
      %v3254 = vsel %vm725, %v3193, %v3195
      %v3255 = vsel %vm725, %v3195, %v3197
      %v3256 = vsel %vm725, %v3197, %v3199
      %v3257 = vsel %vm725, %v3199, %v3201
      %v3258 = vsel %vm725, %v3201, %v3203
      %v3259 = vsel %vm725, %v3203, %v3205
      %v3260 = vsel %vm725, %v3205, %v3207
      %v3261 = vsel %vm725, %v3207, %v3209
      %v3262 = vsel %vm725, %v3209, %v3211
      %v3263 = vsel %vm725, %v3211, %v3213
      %v3264 = vsel %vm725, %v3213, %v3215
      %v3265 = vsel %vm725, %v3215, %v3217
      %v3266 = vsel %vm725, %v3217, %v3219
      %v3267 = vsel %vm725, %v3221, %v3223
      %v3268 = vsel %vm725, %v3223, %v3225
      %v3269 = vsel %vm725, %v3225, %v3227
      %v3270 = vsel %vm725, %v3227, %v3229
      %v3271 = vsel %vm725, %v3229, %v3231
      %v3272 = vsel %vm725, %v3231, %v3233
      %v3273 = vsel %vm725, %v3233, %v3235
      %v3274 = vsel %vm725, %v3235, %v3237
      %v3275 = vsel %vm725, %v3237, %v3239
      %v3276 = vsel %vm725, %v3239, %v3241
      %v3277 = vsel %vm725, %v3241, %v3243
      %v3278 = vsel %vm725, %v3243, %v3245
      %v3279 = vsel %vm725, %v3245, %v3247
      %v3280 = vsel %vm725, %v3247, %v3249
      %v3281 = vsel %vm725, %v3249, %v3251
      %v3312 = vmax.f32 %v3156, %v3252
      %v3313 = vmax.f32 %v3157, %v3253
      %v3314 = vmax.f32 %v3158, %v3254
      %v3315 = vmax.f32 %v3159, %v3255
      %v3316 = vmax.f32 %v3160, %v3256
      %v3317 = vmax.f32 %v3161, %v3257
      %v3318 = vmax.f32 %v3162, %v3258
      %v3319 = vmax.f32 %v3163, %v3259
      %v3320 = vmax.f32 %v3164, %v3260
      %v3321 = vmax.f32 %v3165, %v3261
      %v3322 = vmax.f32 %v3166, %v3262
      %v3323 = vmax.f32 %v3167, %v3263
      %v3324 = vmax.f32 %v3168, %v3264
      %v3325 = vmax.f32 %v3169, %v3265
      %v3326 = vmax.f32 %v3170, %v3266
      %v3327 = vmax.f32 %v3171, %v3267
      %v3328 = vmax.f32 %v3172, %v3268
      %v3329 = vmax.f32 %v3173, %v3269
      %v3330 = vmax.f32 %v3174, %v3270
      %v3331 = vmax.f32 %v3175, %v3271
      %v3332 = vmax.f32 %v3176, %v3272
      %v3333 = vmax.f32 %v3177, %v3273
      %v3334 = vmax.f32 %v3178, %v3274
      %v3335 = vmax.f32 %v3179, %v3275
      %v3336 = vmax.f32 %v3180, %v3276
      %v3337 = vmax.f32 %v3181, %v3277
      %v3338 = vmax.f32 %v3182, %v3278
      %v3339 = vmax.f32 %v3183, %v3279
      %v3340 = vmax.f32 %v3184, %v3280
      %v3341 = vmax.f32 %v3185, %v3281
      %3342 = vrot.lane.b32.xlu0 %v2976, 94
      %v3343 = vpop.permute.xlu0 %3342
      %3344 = vrot.lane.b32.xlu0 %v2977, 94
      %v3345 = vpop.permute.xlu0 %3344
      %3346 = vrot.lane.b32.xlu0 %v2978, 94
      %v3347 = vpop.permute.xlu0 %3346
      %3348 = vrot.lane.b32.xlu0 %v2979, 94
      %v3349 = vpop.permute.xlu0 %3348
      %3350 = vrot.lane.b32.xlu0 %v2980, 94
      %v3351 = vpop.permute.xlu0 %3350
      %3352 = vrot.lane.b32.xlu0 %v2981, 94
      %v3353 = vpop.permute.xlu0 %3352
      %3354 = vrot.lane.b32.xlu0 %v2982, 94
      %v3355 = vpop.permute.xlu0 %3354
      %3356 = vrot.lane.b32.xlu0 %v2983, 94
      %v3357 = vpop.permute.xlu0 %3356
      %3358 = vrot.lane.b32.xlu0 %v2984, 94
      %v3359 = vpop.permute.xlu0 %3358
      %3360 = vrot.lane.b32.xlu0 %v2985, 94
      %v3361 = vpop.permute.xlu0 %3360
      %3362 = vrot.lane.b32.xlu0 %v2986, 94
      %v3363 = vpop.permute.xlu0 %3362
      %3364 = vrot.lane.b32.xlu0 %v2987, 94
      %v3365 = vpop.permute.xlu0 %3364
      %3366 = vrot.lane.b32.xlu0 %v2988, 94
      %v3367 = vpop.permute.xlu0 %3366
      %3368 = vrot.lane.b32.xlu0 %v2989, 94
      %v3369 = vpop.permute.xlu0 %3368
      %3370 = vrot.lane.b32.xlu0 %v2990, 94
      %v3371 = vpop.permute.xlu0 %3370
      %3372 = vrot.lane.b32.xlu0 %v2991, 94
      %v3373 = vpop.permute.xlu0 %3372
      %3374 = vrot.lane.b32.xlu0 %v2992, 94
      %v3375 = vpop.permute.xlu0 %3374
      %3376 = vrot.lane.b32.xlu0 %v2993, 94
      %v3377 = vpop.permute.xlu0 %3376
      %3378 = vrot.lane.b32.xlu0 %v2994, 94
      %v3379 = vpop.permute.xlu0 %3378
      %3380 = vrot.lane.b32.xlu0 %v2995, 94
      %v3381 = vpop.permute.xlu0 %3380
      %3382 = vrot.lane.b32.xlu0 %v2996, 94
      %v3383 = vpop.permute.xlu0 %3382
      %3384 = vrot.lane.b32.xlu0 %v2997, 94
      %v3385 = vpop.permute.xlu0 %3384
      %3386 = vrot.lane.b32.xlu0 %v2998, 94
      %v3387 = vpop.permute.xlu0 %3386
      %3388 = vrot.lane.b32.xlu0 %v2999, 94
      %v3389 = vpop.permute.xlu0 %3388
      %3390 = vrot.lane.b32.xlu0 %v3000, 94
      %v3391 = vpop.permute.xlu0 %3390
      %3392 = vrot.lane.b32.xlu0 %v3001, 94
      %v3393 = vpop.permute.xlu0 %3392
      %3394 = vrot.lane.b32.xlu0 %v3002, 94
      %v3395 = vpop.permute.xlu0 %3394
      %3396 = vrot.lane.b32.xlu0 %v3003, 94
      %v3397 = vpop.permute.xlu0 %3396
      %3398 = vrot.lane.b32.xlu0 %v3004, 94
      %v3399 = vpop.permute.xlu0 %3398
      %3400 = vrot.lane.b32.xlu0 %v3005, 94
      %v3401 = vpop.permute.xlu0 %3400
      %3402 = vrot.lane.b32.xlu0 %v3006, 94
      %v3403 = vpop.permute.xlu0 %3402
      %3404 = vrot.lane.b32.xlu0 %v3007, 94
      %v3405 = vpop.permute.xlu0 %3404
      %v3406 = vsel %vm853, %v3343, %v3345
      %v3407 = vsel %vm853, %v3345, %v3347
      %v3408 = vsel %vm853, %v3347, %v3349
      %v3409 = vsel %vm853, %v3349, %v3351
      %v3410 = vsel %vm853, %v3351, %v3353
      %v3411 = vsel %vm853, %v3353, %v3355
      %v3412 = vsel %vm853, %v3355, %v3357
      %v3413 = vsel %vm853, %v3357, %v3359
      %v3414 = vsel %vm853, %v3359, %v3361
      %v3415 = vsel %vm853, %v3361, %v3363
      %v3416 = vsel %vm853, %v3363, %v3365
      %v3417 = vsel %vm853, %v3365, %v3367
      %v3418 = vsel %vm853, %v3367, %v3369
      %v3419 = vsel %vm853, %v3369, %v3371
      %v3420 = vsel %vm853, %v3371, %v3373
      %v3421 = vsel %vm853, %v3375, %v3377
      %v3422 = vsel %vm853, %v3377, %v3379
      %v3423 = vsel %vm853, %v3379, %v3381
      %v3424 = vsel %vm853, %v3381, %v3383
      %v3425 = vsel %vm853, %v3383, %v3385
      %v3426 = vsel %vm853, %v3385, %v3387
      %v3427 = vsel %vm853, %v3387, %v3389
      %v3428 = vsel %vm853, %v3389, %v3391
      %v3429 = vsel %vm853, %v3391, %v3393
      %v3430 = vsel %vm853, %v3393, %v3395
      %v3431 = vsel %vm853, %v3395, %v3397
      %v3432 = vsel %vm853, %v3397, %v3399
      %v3433 = vsel %vm853, %v3399, %v3401
      %v3434 = vsel %vm853, %v3401, %v3403
      %v3435 = vsel %vm853, %v3403, %v3405
      %v3466 = vmax.f32 %v3312, %v3406
      %v3467 = vmax.f32 %v3313, %v3407
      %v3468 = vmax.f32 %v3314, %v3408
      %v3469 = vmax.f32 %v3315, %v3409
      %v3470 = vmax.f32 %v3316, %v3410
      %v3471 = vmax.f32 %v3317, %v3411
      %v3472 = vmax.f32 %v3318, %v3412
      %v3473 = vmax.f32 %v3319, %v3413
      %v3474 = vmax.f32 %v3320, %v3414
      %v3475 = vmax.f32 %v3321, %v3415
      %v3476 = vmax.f32 %v3322, %v3416
      %v3477 = vmax.f32 %v3323, %v3417
      %v3478 = vmax.f32 %v3324, %v3418
      %v3479 = vmax.f32 %v3325, %v3419
      %v3480 = vmax.f32 %v3326, %v3420
      %v3481 = vmax.f32 %v3327, %v3421
      %v3482 = vmax.f32 %v3328, %v3422
      %v3483 = vmax.f32 %v3329, %v3423
      %v3484 = vmax.f32 %v3330, %v3424
      %v3485 = vmax.f32 %v3331, %v3425
      %v3486 = vmax.f32 %v3332, %v3426
      %v3487 = vmax.f32 %v3333, %v3427
      %v3488 = vmax.f32 %v3334, %v3428
      %v3489 = vmax.f32 %v3335, %v3429
      %v3490 = vmax.f32 %v3336, %v3430
      %v3491 = vmax.f32 %v3337, %v3431
      %v3492 = vmax.f32 %v3338, %v3432
      %v3493 = vmax.f32 %v3339, %v3433
      %v3494 = vmax.f32 %v3340, %v3434
      %v3495 = vmax.f32 %v3341, %v3435
      %3526 = vrot.lane.b32.xlu0 %v3466, 124
      %v3527 = vpop.permute.xlu0 %3526
      %3528 = vrot.lane.b32.xlu0 %v3467, 124
      %v3529 = vpop.permute.xlu0 %3528
      %3530 = vrot.lane.b32.xlu0 %v3468, 124
      %v3531 = vpop.permute.xlu0 %3530
      %3532 = vrot.lane.b32.xlu0 %v3469, 124
      %v3533 = vpop.permute.xlu0 %3532
      %3534 = vrot.lane.b32.xlu0 %v3470, 124
      %v3535 = vpop.permute.xlu0 %3534
      %3536 = vrot.lane.b32.xlu0 %v3471, 124
      %v3537 = vpop.permute.xlu0 %3536
      %3538 = vrot.lane.b32.xlu0 %v3472, 124
      %v3539 = vpop.permute.xlu0 %3538
      %3540 = vrot.lane.b32.xlu0 %v3473, 124
      %v3541 = vpop.permute.xlu0 %3540
      %3542 = vrot.lane.b32.xlu0 %v3474, 124
      %v3543 = vpop.permute.xlu0 %3542
      %3544 = vrot.lane.b32.xlu0 %v3475, 124
      %v3545 = vpop.permute.xlu0 %3544
      %3546 = vrot.lane.b32.xlu0 %v3476, 124
      %v3547 = vpop.permute.xlu0 %3546
      %3548 = vrot.lane.b32.xlu0 %v3477, 124
      %v3549 = vpop.permute.xlu0 %3548
      %3550 = vrot.lane.b32.xlu0 %v3478, 124
      %v3551 = vpop.permute.xlu0 %3550
      %3552 = vrot.lane.b32.xlu0 %v3479, 124
      %v3553 = vpop.permute.xlu0 %3552
      %3554 = vrot.lane.b32.xlu0 %v3480, 124
      %v3555 = vpop.permute.xlu0 %3554
      %3556 = vrot.lane.b32.xlu0 %v3481, 124
      %v3557 = vpop.permute.xlu0 %3556
      %3558 = vrot.lane.b32.xlu0 %v3482, 124
      %v3559 = vpop.permute.xlu0 %3558
      %3560 = vrot.lane.b32.xlu0 %v3483, 124
      %v3561 = vpop.permute.xlu0 %3560
      %3562 = vrot.lane.b32.xlu0 %v3484, 124
      %v3563 = vpop.permute.xlu0 %3562
      %3564 = vrot.lane.b32.xlu0 %v3485, 124
      %v3565 = vpop.permute.xlu0 %3564
      %3566 = vrot.lane.b32.xlu0 %v3486, 124
      %v3567 = vpop.permute.xlu0 %3566
      %3568 = vrot.lane.b32.xlu0 %v3487, 124
      %v3569 = vpop.permute.xlu0 %3568
      %3570 = vrot.lane.b32.xlu0 %v3488, 124
      %v3571 = vpop.permute.xlu0 %3570
      %3572 = vrot.lane.b32.xlu0 %v3489, 124
      %v3573 = vpop.permute.xlu0 %3572
      %3574 = vrot.lane.b32.xlu0 %v3490, 124
      %v3575 = vpop.permute.xlu0 %3574
      %3576 = vrot.lane.b32.xlu0 %v3491, 124
      %v3577 = vpop.permute.xlu0 %3576
      %3578 = vrot.lane.b32.xlu0 %v3492, 124
      %v3579 = vpop.permute.xlu0 %3578
      %3580 = vrot.lane.b32.xlu0 %v3493, 124
      %v3581 = vpop.permute.xlu0 %3580
      %3582 = vrot.lane.b32.xlu0 %v3494, 124
      %v3583 = vpop.permute.xlu0 %3582
      %3584 = vrot.lane.b32.xlu0 %v3495, 124
      %v3585 = vpop.permute.xlu0 %3584
      %v3586 = vsel %vm1925, %v3527, %v3529
      %v3587 = vsel %vm1925, %v3529, %v3531
      %v3588 = vsel %vm1925, %v3531, %v3533
      %v3589 = vsel %vm1925, %v3533, %v3535
      %v3590 = vsel %vm1925, %v3535, %v3537
      %v3591 = vsel %vm1925, %v3537, %v3539
      %v3592 = vsel %vm1925, %v3539, %v3541
      %v3593 = vsel %vm1925, %v3541, %v3543
      %v3594 = vsel %vm1925, %v3543, %v3545
      %v3595 = vsel %vm1925, %v3545, %v3547
      %v3596 = vsel %vm1925, %v3547, %v3549
      %v3597 = vsel %vm1925, %v3549, %v3551
      %v3598 = vsel %vm1925, %v3551, %v3553
      %v3599 = vsel %vm1925, %v3553, %v3555
      %v3600 = vsel %vm1925, %v3557, %v3559
      %v3601 = vsel %vm1925, %v3559, %v3561
      %v3602 = vsel %vm1925, %v3561, %v3563
      %v3603 = vsel %vm1925, %v3563, %v3565
      %v3604 = vsel %vm1925, %v3565, %v3567
      %v3605 = vsel %vm1925, %v3567, %v3569
      %v3606 = vsel %vm1925, %v3569, %v3571
      %v3607 = vsel %vm1925, %v3571, %v3573
      %v3608 = vsel %vm1925, %v3573, %v3575
      %v3609 = vsel %vm1925, %v3575, %v3577
      %v3610 = vsel %vm1925, %v3577, %v3579
      %v3611 = vsel %vm1925, %v3579, %v3581
      %v3612 = vsel %vm1925, %v3581, %v3583
      %v3613 = vsel %vm1925, %v3583, %v3585
      %3644 = vrot.lane.b32.xlu0 %v3466, 64
      %v3645 = vpop.permute.xlu0 %3644
      %3646 = vrot.lane.b32.xlu0 %v3467, 64
      %v3647 = vpop.permute.xlu0 %3646
      %3648 = vrot.lane.b32.xlu0 %v3468, 64
      %v3649 = vpop.permute.xlu0 %3648
      %3650 = vrot.lane.b32.xlu0 %v3469, 64
      %v3651 = vpop.permute.xlu0 %3650
      %3652 = vrot.lane.b32.xlu0 %v3470, 64
      %v3653 = vpop.permute.xlu0 %3652
      %3654 = vrot.lane.b32.xlu0 %v3471, 64
      %v3655 = vpop.permute.xlu0 %3654
      %3656 = vrot.lane.b32.xlu0 %v3472, 64
      %v3657 = vpop.permute.xlu0 %3656
      %3658 = vrot.lane.b32.xlu0 %v3473, 64
      %v3659 = vpop.permute.xlu0 %3658
      %3660 = vrot.lane.b32.xlu0 %v3474, 64
      %v3661 = vpop.permute.xlu0 %3660
      %3662 = vrot.lane.b32.xlu0 %v3475, 64
      %v3663 = vpop.permute.xlu0 %3662
      %3664 = vrot.lane.b32.xlu0 %v3476, 64
      %v3665 = vpop.permute.xlu0 %3664
      %3666 = vrot.lane.b32.xlu0 %v3477, 64
      %v3667 = vpop.permute.xlu0 %3666
      %3668 = vrot.lane.b32.xlu0 %v3478, 64
      %v3669 = vpop.permute.xlu0 %3668
      %3670 = vrot.lane.b32.xlu0 %v3479, 64
      %v3671 = vpop.permute.xlu0 %3670
      %3672 = vrot.lane.b32.xlu0 %v3480, 64
      %v3673 = vpop.permute.xlu0 %3672
      %3674 = vrot.lane.b32.xlu0 %v3481, 64
      %v3675 = vpop.permute.xlu0 %3674
      %3676 = vrot.lane.b32.xlu0 %v3482, 64
      %v3677 = vpop.permute.xlu0 %3676
      %3678 = vrot.lane.b32.xlu0 %v3483, 64
      %v3679 = vpop.permute.xlu0 %3678
      %3680 = vrot.lane.b32.xlu0 %v3484, 64
      %v3681 = vpop.permute.xlu0 %3680
      %3682 = vrot.lane.b32.xlu0 %v3485, 64
      %v3683 = vpop.permute.xlu0 %3682
      %3684 = vrot.lane.b32.xlu0 %v3486, 64
      %v3685 = vpop.permute.xlu0 %3684
      %3686 = vrot.lane.b32.xlu0 %v3487, 64
      %v3687 = vpop.permute.xlu0 %3686
      %3688 = vrot.lane.b32.xlu0 %v3488, 64
      %v3689 = vpop.permute.xlu0 %3688
      %3690 = vrot.lane.b32.xlu0 %v3489, 64
      %v3691 = vpop.permute.xlu0 %3690
      %3692 = vrot.lane.b32.xlu0 %v3490, 64
      %v3693 = vpop.permute.xlu0 %3692
      %3694 = vrot.lane.b32.xlu0 %v3491, 64
      %v3695 = vpop.permute.xlu0 %3694
      %3696 = vrot.lane.b32.xlu0 %v3492, 64
      %v3697 = vpop.permute.xlu0 %3696
      %3698 = vrot.lane.b32.xlu0 %v3493, 64
      %v3699 = vpop.permute.xlu0 %3698
      %3700 = vrot.lane.b32.xlu0 %v3494, 64
      %v3701 = vpop.permute.xlu0 %3700
      %3702 = vrot.lane.b32.xlu0 %v3495, 64
      %v3703 = vpop.permute.xlu0 %3702
      %v3704 = vsel %vm2179, %v3645, %v3647
      %v3705 = vsel %vm2179, %v3647, %v3649
      %v3706 = vsel %vm2179, %v3649, %v3651
      %v3707 = vsel %vm2179, %v3651, %v3653
      %v3708 = vsel %vm2179, %v3653, %v3655
      %v3709 = vsel %vm2179, %v3655, %v3657
      %v3710 = vsel %vm2179, %v3657, %v3659
      %v3711 = vsel %vm2179, %v3659, %v3661
      %v3712 = vsel %vm2179, %v3661, %v3663
      %v3713 = vsel %vm2179, %v3663, %v3665
      %v3714 = vsel %vm2179, %v3665, %v3667
      %v3715 = vsel %vm2179, %v3667, %v3669
      %v3716 = vsel %vm2179, %v3669, %v3671
      %v3717 = vsel %vm2179, %v3671, %v3673
      %v3718 = vsel %vm2179, %v3675, %v3677
      %v3719 = vsel %vm2179, %v3677, %v3679
      %v3720 = vsel %vm2179, %v3679, %v3681
      %v3721 = vsel %vm2179, %v3681, %v3683
      %v3722 = vsel %vm2179, %v3683, %v3685
      %v3723 = vsel %vm2179, %v3685, %v3687
      %v3724 = vsel %vm2179, %v3687, %v3689
      %v3725 = vsel %vm2179, %v3689, %v3691
      %v3726 = vsel %vm2179, %v3691, %v3693
      %v3727 = vsel %vm2179, %v3693, %v3695
      %v3728 = vsel %vm2179, %v3695, %v3697
      %v3729 = vsel %vm2179, %v3697, %v3699
      %v3730 = vsel %vm2179, %v3699, %v3701
      %v3731 = vsel %vm2179, %v3701, %v3703
      %3762 = vrot.lane.b32.xlu0 %v3466, 60
      %v3763 = vpop.permute.xlu0 %3762
      %3764 = vrot.lane.b32.xlu0 %v3467, 60
      %v3765 = vpop.permute.xlu0 %3764
      %3766 = vrot.lane.b32.xlu0 %v3468, 60
      %v3767 = vpop.permute.xlu0 %3766
      %3768 = vrot.lane.b32.xlu0 %v3469, 60
      %v3769 = vpop.permute.xlu0 %3768
      %3770 = vrot.lane.b32.xlu0 %v3470, 60
      %v3771 = vpop.permute.xlu0 %3770
      %3772 = vrot.lane.b32.xlu0 %v3471, 60
      %v3773 = vpop.permute.xlu0 %3772
      %3774 = vrot.lane.b32.xlu0 %v3472, 60
      %v3775 = vpop.permute.xlu0 %3774
      %3776 = vrot.lane.b32.xlu0 %v3473, 60
      %v3777 = vpop.permute.xlu0 %3776
      %3778 = vrot.lane.b32.xlu0 %v3474, 60
      %v3779 = vpop.permute.xlu0 %3778
      %3780 = vrot.lane.b32.xlu0 %v3475, 60
      %v3781 = vpop.permute.xlu0 %3780
      %3782 = vrot.lane.b32.xlu0 %v3476, 60
      %v3783 = vpop.permute.xlu0 %3782
      %3784 = vrot.lane.b32.xlu0 %v3477, 60
      %v3785 = vpop.permute.xlu0 %3784
      %3786 = vrot.lane.b32.xlu0 %v3478, 60
      %v3787 = vpop.permute.xlu0 %3786
      %3788 = vrot.lane.b32.xlu0 %v3479, 60
      %v3789 = vpop.permute.xlu0 %3788
      %3790 = vrot.lane.b32.xlu0 %v3480, 60
      %v3791 = vpop.permute.xlu0 %3790
      %3792 = vrot.lane.b32.xlu0 %v3481, 60
      %v3793 = vpop.permute.xlu0 %3792
      %3794 = vrot.lane.b32.xlu0 %v3482, 60
      %v3795 = vpop.permute.xlu0 %3794
      %3796 = vrot.lane.b32.xlu0 %v3483, 60
      %v3797 = vpop.permute.xlu0 %3796
      %3798 = vrot.lane.b32.xlu0 %v3484, 60
      %v3799 = vpop.permute.xlu0 %3798
      %3800 = vrot.lane.b32.xlu0 %v3485, 60
      %v3801 = vpop.permute.xlu0 %3800
      %3802 = vrot.lane.b32.xlu0 %v3486, 60
      %v3803 = vpop.permute.xlu0 %3802
      %3804 = vrot.lane.b32.xlu0 %v3487, 60
      %v3805 = vpop.permute.xlu0 %3804
      %3806 = vrot.lane.b32.xlu0 %v3488, 60
      %v3807 = vpop.permute.xlu0 %3806
      %3808 = vrot.lane.b32.xlu0 %v3489, 60
      %v3809 = vpop.permute.xlu0 %3808
      %3810 = vrot.lane.b32.xlu0 %v3490, 60
      %v3811 = vpop.permute.xlu0 %3810
      %3812 = vrot.lane.b32.xlu0 %v3491, 60
      %v3813 = vpop.permute.xlu0 %3812
      %3814 = vrot.lane.b32.xlu0 %v3492, 60
      %v3815 = vpop.permute.xlu0 %3814
      %3816 = vrot.lane.b32.xlu0 %v3493, 60
      %v3817 = vpop.permute.xlu0 %3816
      %3818 = vrot.lane.b32.xlu0 %v3494, 60
      %v3819 = vpop.permute.xlu0 %3818
      %3820 = vrot.lane.b32.xlu0 %v3495, 60
      %v3821 = vpop.permute.xlu0 %3820
      %v3822 = vsel %vm2307, %v3763, %v3765
      %v3823 = vsel %vm2307, %v3765, %v3767
      %v3824 = vsel %vm2307, %v3767, %v3769
      %v3825 = vsel %vm2307, %v3769, %v3771
      %v3826 = vsel %vm2307, %v3771, %v3773
      %v3827 = vsel %vm2307, %v3773, %v3775
      %v3828 = vsel %vm2307, %v3775, %v3777
      %v3829 = vsel %vm2307, %v3777, %v3779
      %v3830 = vsel %vm2307, %v3779, %v3781
      %v3831 = vsel %vm2307, %v3781, %v3783
      %v3832 = vsel %vm2307, %v3783, %v3785
      %v3833 = vsel %vm2307, %v3785, %v3787
      %v3834 = vsel %vm2307, %v3787, %v3789
      %v3835 = vsel %vm2307, %v3789, %v3791
      %v3836 = vsel %vm2307, %v3793, %v3795
      %v3837 = vsel %vm2307, %v3795, %v3797
      %v3838 = vsel %vm2307, %v3797, %v3799
      %v3839 = vsel %vm2307, %v3799, %v3801
      %v3840 = vsel %vm2307, %v3801, %v3803
      %v3841 = vsel %vm2307, %v3803, %v3805
      %v3842 = vsel %vm2307, %v3805, %v3807
      %v3843 = vsel %vm2307, %v3807, %v3809
      %v3844 = vsel %vm2307, %v3809, %v3811
      %v3845 = vsel %vm2307, %v3811, %v3813
      %v3846 = vsel %vm2307, %v3813, %v3815
      %v3847 = vsel %vm2307, %v3815, %v3817
      %v3848 = vsel %vm2307, %v3817, %v3819
      %v3849 = vsel %vm2307, %v3819, %v3821
      %v3880 = vld [vmem:[%s5] sm:$0xff]
      %v3881 = vld [vmem:[%s5 + $0x8] sm:$0xff]
      %v3882 = vld [vmem:[%s5 + $0x10] sm:$0xff]
      %v3883 = vld [vmem:[%s5 + $0x18] sm:$0xff]
      %v3884 = vld [vmem:[%s6] sm:$0xff]
      %v3885 = vld [vmem:[%s6 + $0x8] sm:$0xff]
      %v3886 = vld [vmem:[%s6 + $0x10] sm:$0xff]
      %v3887 = vld [vmem:[%s6 + $0x18] sm:$0xff]
      %3889 = vset.pattern.permute.xlu0 0
      %3890 = vperm.xlu0 %3889, %v3884
      %v3891 = vpop.permute.xlu0 %3890
      %3894 = vset.pattern.permute.xlu0 0
      %3895 = vperm.xlu0 %3894, %v3885
      %v3896 = vpop.permute.xlu0 %3895
      %3899 = vset.pattern.permute.xlu0 0
      %3900 = vperm.xlu0 %3899, %v3886
      %v3901 = vpop.permute.xlu0 %3900
      %3904 = vset.pattern.permute.xlu0 0
      %3905 = vperm.xlu0 %3904, %v3887
      %v3906 = vpop.permute.xlu0 %3905
      %v3909 = vsel %vm2179, %v3880, 0
      %v3912 = vsel %vm2179, %v3881, 0
      %v3915 = vsel %vm2179, %v3882, 0
      %v3918 = vsel %vm2179, %v3883, 0
      %3920 = vmatprep.subr.mxu0 %v3467
      %3921 = vmatpush1.msra.mxu0 %v3466
      %3922 = vmatprep.subr.mxu0 %v3482
      %3923 = vmatpush1.msra.mxu0 %v3481
      %3924 = vmatprep.subr.mxu0 %v3587
      %3925 = vmatpush1.msra.mxu0 %v3586
      %3926 = vmatprep.subr.mxu0 %v3601
      %3927 = vmatpush1.msra.mxu0 %v3600
      %3928 = vmatprep.subr.mxu0 %v3705
      %3929 = vmatpush1.msra.mxu0 %v3704
      %3930 = vmatprep.subr.mxu0 %v3719
      %3931 = vmatpush1.msra.mxu0 %v3718
      %3932 = vmatprep.subr.mxu0 %v3823
      %3933 = vmatpush1.msra.mxu0 %v3822
      %3934 = vmatprep.subr.mxu0 %v3837
      %3935 = vmatpush1.msra.mxu0 %v3836
      %3936 = vmatprep.subr.mxu0 0.0
      %3937 = vmatpush1.msra.mxu0 0.0
      %3938 = vmatprep.subr.mxu0 0.0
      %3939 = vmatpush1.msra.mxu0 0.0
      %3940 = vmatprep.subr.mxu0 0.0
      %3941 = vmatpush1.msra.mxu0 0.0
      %3942 = vmatprep.subr.mxu0 0.0
      %3943 = vmatpush1.msra.mxu0 0.0
      %3944 = vmatprep.subr.mxu0 0.0
      %3945 = vmatpush1.msra.mxu0 0.0
      %3946 = vmatprep.subr.mxu0 0.0
      %3947 = vmatpush1.msra.mxu0 0.0
      %3948 = vmatprep.subr.mxu0 0.0
      %3949 = vmatpush1.msra.mxu0 0.0
      %3950 = vmatprep.subr.mxu0 0.0
      %3951 = vmatpush1.msra.mxu0 0.0
      %3952 = vmatprep.subr.mxu0 0.0
      %3953 = vmatpush1.msra.mxu0 0.0
      %3954 = vmatprep.subr.mxu0 0.0
      %3955 = vmatpush1.msra.mxu0 0.0
      %3956 = vmatprep.subr.mxu0 0.0
      %3957 = vmatpush1.msra.mxu0 0.0
      %3958 = vmatprep.subr.mxu0 0.0
      %3959 = vmatpush1.msra.mxu0 0.0
      %3960 = vmatprep.subr.mxu0 0.0
      %3961 = vmatpush1.msra.mxu0 0.0
      %3962 = vmatprep.subr.mxu0 0.0
      %3963 = vmatpush1.msra.mxu0 0.0
      %3964 = vmatprep.subr.mxu0 0.0
      %3965 = vmatpush1.msra.mxu0 0.0
      %3966 = vmatprep.subr.mxu0 0.0
      %3967 = vmatpush1.msra.mxu0 0.0
      %3968 = vmatprep.subr.mxu0 0.0
      %3969 = vmatpush1.msra.mxu0 0.0
      %3970 = vmatprep.subr.mxu0 0.0
      %3971 = vmatpush1.msra.mxu0 0.0
      %3972 = vmatprep.subr.mxu0 0.0
      %3973 = vmatpush1.msra.mxu0 0.0
      %3974 = vmatprep.subr.mxu0 0.0
      %3975 = vmatpush1.msra.mxu0 0.0
      %3976 = vmatprep.subr.mxu0 0.0
      %3977 = vmatpush1.msra.mxu0 0.0
      %3978 = vmatprep.subr.mxu0 0.0
      %3979 = vmatpush1.msra.mxu0 0.0
      %3980 = vmatprep.subr.mxu0 0.0
      %3981 = vmatpush1.msra.mxu0 0.0
      %3982 = vmatprep.subr.mxu0 0.0
      %3983 = vmatpush1.msra.mxu0 0.0
      %3984 = vmatprep.mubr.f32.mxu0 0.0
      %3985 = vmatmul.mubr.f32.gmra.mrb[0].mxu0 %v3909
      %v3986 = vpop.f32.mrb[0].mxu0
      %v3987 = vadd.f32 %v3891, %v3986
      %v3988 = vpop.f32.mrb[0].mxu0
      %v3989 = vadd.f32 %v3891, %v3988
      %3990 = vmatprep.mubr.f32.mxu0 0.0
      %3991 = vmatmul.mubr.f32.gmra.mrb[0].mxu0 %v3912
      %v3992 = vpop.f32.mrb[0].mxu0
      %v3993 = vadd.f32 %v3896, %v3992
      %v3994 = vpop.f32.mrb[0].mxu0
      %v3995 = vadd.f32 %v3896, %v3994
      %3996 = vmatprep.mubr.f32.mxu0 0.0
      %3997 = vmatmul.mubr.f32.gmra.mrb[0].mxu0 %v3915
      %v3998 = vpop.f32.mrb[0].mxu0
      %v3999 = vadd.f32 %v3901, %v3998
      %v4000 = vpop.f32.mrb[0].mxu0
      %v4001 = vadd.f32 %v3901, %v4000
      %4002 = vmatprep.mubr.f32.mxu0 0.0
      %4003 = vmatmul.mubr.f32.gmra.mrb[0].mxu0 %v3918
      %v4004 = vpop.f32.mrb[0].mxu0
      %v4005 = vadd.f32 %v3906, %v4004
      %v4006 = vpop.f32.mrb[0].mxu0
      %v4007 = vadd.f32 %v3906, %v4006
      %4008 = vdwg.mxu0
      %4009 = vmatprep.subr.mxu0 %v3469
      %4010 = vmatpush1.msra.mxu0 %v3468
      %4011 = vmatprep.subr.mxu0 %v3484
      %4012 = vmatpush1.msra.mxu0 %v3483
      %4013 = vmatprep.subr.mxu0 %v3589
      %4014 = vmatpush1.msra.mxu0 %v3588
      %4015 = vmatprep.subr.mxu0 %v3603
      %4016 = vmatpush1.msra.mxu0 %v3602
      %4017 = vmatprep.subr.mxu0 %v3707
      %4018 = vmatpush1.msra.mxu0 %v3706
      %4019 = vmatprep.subr.mxu0 %v3721
      %4020 = vmatpush1.msra.mxu0 %v3720
      %4021 = vmatprep.subr.mxu0 %v3825
      %4022 = vmatpush1.msra.mxu0 %v3824
      %4023 = vmatprep.subr.mxu0 %v3839
      %4024 = vmatpush1.msra.mxu0 %v3838
      %4025 = vmatprep.subr.mxu0 0.0
      %4026 = vmatpush1.msra.mxu0 0.0
      %4027 = vmatprep.subr.mxu0 0.0
      %4028 = vmatpush1.msra.mxu0 0.0
      %4029 = vmatprep.subr.mxu0 0.0
      %4030 = vmatpush1.msra.mxu0 0.0
      %4031 = vmatprep.subr.mxu0 0.0
      %4032 = vmatpush1.msra.mxu0 0.0
      %4033 = vmatprep.subr.mxu0 0.0
      %4034 = vmatpush1.msra.mxu0 0.0
      %4035 = vmatprep.subr.mxu0 0.0
      %4036 = vmatpush1.msra.mxu0 0.0
      %4037 = vmatprep.subr.mxu0 0.0
      %4038 = vmatpush1.msra.mxu0 0.0
      %4039 = vmatprep.subr.mxu0 0.0
      %4040 = vmatpush1.msra.mxu0 0.0
      %4041 = vmatprep.subr.mxu0 0.0
      %4042 = vmatpush1.msra.mxu0 0.0
      %4043 = vmatprep.subr.mxu0 0.0
      %4044 = vmatpush1.msra.mxu0 0.0
      %4045 = vmatprep.subr.mxu0 0.0
      %4046 = vmatpush1.msra.mxu0 0.0
      %4047 = vmatprep.subr.mxu0 0.0
      %4048 = vmatpush1.msra.mxu0 0.0
      %4049 = vmatprep.subr.mxu0 0.0
      %4050 = vmatpush1.msra.mxu0 0.0
      %4051 = vmatprep.subr.mxu0 0.0
      %4052 = vmatpush1.msra.mxu0 0.0
      %4053 = vmatprep.subr.mxu0 0.0
      %4054 = vmatpush1.msra.mxu0 0.0
      %4055 = vmatprep.subr.mxu0 0.0
      %4056 = vmatpush1.msra.mxu0 0.0
      %4057 = vmatprep.subr.mxu0 0.0
      %4058 = vmatpush1.msra.mxu0 0.0
      %4059 = vmatprep.subr.mxu0 0.0
      %4060 = vmatpush1.msra.mxu0 0.0
      %4061 = vmatprep.subr.mxu0 0.0
      %4062 = vmatpush1.msra.mxu0 0.0
      %4063 = vmatprep.subr.mxu0 0.0
      %4064 = vmatpush1.msra.mxu0 0.0
      %4065 = vmatprep.subr.mxu0 0.0
      %4066 = vmatpush1.msra.mxu0 0.0
      %4067 = vmatprep.subr.mxu0 0.0
      %4068 = vmatpush1.msra.mxu0 0.0
      %4069 = vmatprep.subr.mxu0 0.0
      %4070 = vmatpush1.msra.mxu0 0.0
      %4071 = vmatprep.subr.mxu0 0.0
      %4072 = vmatpush1.msra.mxu0 0.0
      %4073 = vmatprep.mubr.f32.mxu0 0.0
      %4074 = vmatmul.mubr.f32.gmra.mrb[0].mxu0 %v3909
      %v4075 = vpop.f32.mrb[0].mxu0
      %v4076 = vadd.f32 %v3891, %v4075
      %v4077 = vpop.f32.mrb[0].mxu0
      %v4078 = vadd.f32 %v3891, %v4077
      %4079 = vmatprep.mubr.f32.mxu0 0.0
      %4080 = vmatmul.mubr.f32.gmra.mrb[0].mxu0 %v3912
      %v4081 = vpop.f32.mrb[0].mxu0
      %v4082 = vadd.f32 %v3896, %v4081
      %v4083 = vpop.f32.mrb[0].mxu0
      %v4084 = vadd.f32 %v3896, %v4083
      %4085 = vmatprep.mubr.f32.mxu0 0.0
      %4086 = vmatmul.mubr.f32.gmra.mrb[0].mxu0 %v3915
      %v4087 = vpop.f32.mrb[0].mxu0
      %v4088 = vadd.f32 %v3901, %v4087
      %v4089 = vpop.f32.mrb[0].mxu0
      %v4090 = vadd.f32 %v3901, %v4089
      %4091 = vmatprep.mubr.f32.mxu0 0.0
      %4092 = vmatmul.mubr.f32.gmra.mrb[0].mxu0 %v3918
      %v4093 = vpop.f32.mrb[0].mxu0
      %v4094 = vadd.f32 %v3906, %v4093
      %v4095 = vpop.f32.mrb[0].mxu0
      %v4096 = vadd.f32 %v3906, %v4095
      %4097 = vdwg.mxu0
      %4098 = vmatprep.subr.mxu0 %v3471
      %4099 = vmatpush1.msra.mxu0 %v3470
      %4100 = vmatprep.subr.mxu0 %v3486
      %4101 = vmatpush1.msra.mxu0 %v3485
      %4102 = vmatprep.subr.mxu0 %v3591
      %4103 = vmatpush1.msra.mxu0 %v3590
      %4104 = vmatprep.subr.mxu0 %v3605
      %4105 = vmatpush1.msra.mxu0 %v3604
      %4106 = vmatprep.subr.mxu0 %v3709
      %4107 = vmatpush1.msra.mxu0 %v3708
      %4108 = vmatprep.subr.mxu0 %v3723
      %4109 = vmatpush1.msra.mxu0 %v3722
      %4110 = vmatprep.subr.mxu0 %v3827
      %4111 = vmatpush1.msra.mxu0 %v3826
      %4112 = vmatprep.subr.mxu0 %v3841
      %4113 = vmatpush1.msra.mxu0 %v3840
      %4114 = vmatprep.subr.mxu0 0.0
      %4115 = vmatpush1.msra.mxu0 0.0
      %4116 = vmatprep.subr.mxu0 0.0
      %4117 = vmatpush1.msra.mxu0 0.0
      %4118 = vmatprep.subr.mxu0 0.0
      %4119 = vmatpush1.msra.mxu0 0.0
      %4120 = vmatprep.subr.mxu0 0.0
      %4121 = vmatpush1.msra.mxu0 0.0
      %4122 = vmatprep.subr.mxu0 0.0
      %4123 = vmatpush1.msra.mxu0 0.0
      %4124 = vmatprep.subr.mxu0 0.0
      %4125 = vmatpush1.msra.mxu0 0.0
      %4126 = vmatprep.subr.mxu0 0.0
      %4127 = vmatpush1.msra.mxu0 0.0
      %4128 = vmatprep.subr.mxu0 0.0
      %4129 = vmatpush1.msra.mxu0 0.0
      %4130 = vmatprep.subr.mxu0 0.0
      %4131 = vmatpush1.msra.mxu0 0.0
      %4132 = vmatprep.subr.mxu0 0.0
      %4133 = vmatpush1.msra.mxu0 0.0
      %4134 = vmatprep.subr.mxu0 0.0
      %4135 = vmatpush1.msra.mxu0 0.0
      %4136 = vmatprep.subr.mxu0 0.0
      %4137 = vmatpush1.msra.mxu0 0.0
      %4138 = vmatprep.subr.mxu0 0.0
      %4139 = vmatpush1.msra.mxu0 0.0
      %4140 = vmatprep.subr.mxu0 0.0
      %4141 = vmatpush1.msra.mxu0 0.0
      %4142 = vmatprep.subr.mxu0 0.0
      %4143 = vmatpush1.msra.mxu0 0.0
      %4144 = vmatprep.subr.mxu0 0.0
      %4145 = vmatpush1.msra.mxu0 0.0
      %4146 = vmatprep.subr.mxu0 0.0
      %4147 = vmatpush1.msra.mxu0 0.0
      %4148 = vmatprep.subr.mxu0 0.0
      %4149 = vmatpush1.msra.mxu0 0.0
      %4150 = vmatprep.subr.mxu0 0.0
      %4151 = vmatpush1.msra.mxu0 0.0
      %4152 = vmatprep.subr.mxu0 0.0
      %4153 = vmatpush1.msra.mxu0 0.0
      %4154 = vmatprep.subr.mxu0 0.0
      %4155 = vmatpush1.msra.mxu0 0.0
      %4156 = vmatprep.subr.mxu0 0.0
      %4157 = vmatpush1.msra.mxu0 0.0
      %4158 = vmatprep.subr.mxu0 0.0
      %4159 = vmatpush1.msra.mxu0 0.0
      %4160 = vmatprep.subr.mxu0 0.0
      %4161 = vmatpush1.msra.mxu0 0.0
      %4162 = vmatprep.mubr.f32.mxu0 0.0
      %4163 = vmatmul.mubr.f32.gmra.mrb[0].mxu0 %v3909
      %v4164 = vpop.f32.mrb[0].mxu0
      %v4165 = vadd.f32 %v3891, %v4164
      %v4166 = vpop.f32.mrb[0].mxu0
      %v4167 = vadd.f32 %v3891, %v4166
      %4168 = vmatprep.mubr.f32.mxu0 0.0
      %4169 = vmatmul.mubr.f32.gmra.mrb[0].mxu0 %v3912
      %v4170 = vpop.f32.mrb[0].mxu0
      %v4171 = vadd.f32 %v3896, %v4170
      %v4172 = vpop.f32.mrb[0].mxu0
      %v4173 = vadd.f32 %v3896, %v4172
      %4174 = vmatprep.mubr.f32.mxu0 0.0
      %4175 = vmatmul.mubr.f32.gmra.mrb[0].mxu0 %v3915
      %v4176 = vpop.f32.mrb[0].mxu0
      %v4177 = vadd.f32 %v3901, %v4176
      %v4178 = vpop.f32.mrb[0].mxu0
      %v4179 = vadd.f32 %v3901, %v4178
      %4180 = vmatprep.mubr.f32.mxu0 0.0
      %4181 = vmatmul.mubr.f32.gmra.mrb[0].mxu0 %v3918
      %v4182 = vpop.f32.mrb[0].mxu0
      %v4183 = vadd.f32 %v3906, %v4182
      %v4184 = vpop.f32.mrb[0].mxu0
      %v4185 = vadd.f32 %v3906, %v4184
      %4186 = vdwg.mxu0
      %4187 = vmatprep.subr.mxu0 %v3473
      %4188 = vmatpush1.msra.mxu0 %v3472
      %4189 = vmatprep.subr.mxu0 %v3488
      %4190 = vmatpush1.msra.mxu0 %v3487
      %4191 = vmatprep.subr.mxu0 %v3593
      %4192 = vmatpush1.msra.mxu0 %v3592
      %4193 = vmatprep.subr.mxu0 %v3607
      %4194 = vmatpush1.msra.mxu0 %v3606
      %4195 = vmatprep.subr.mxu0 %v3711
      %4196 = vmatpush1.msra.mxu0 %v3710
      %4197 = vmatprep.subr.mxu0 %v3725
      %4198 = vmatpush1.msra.mxu0 %v3724
      %4199 = vmatprep.subr.mxu0 %v3829
      %4200 = vmatpush1.msra.mxu0 %v3828
      %4201 = vmatprep.subr.mxu0 %v3843
      %4202 = vmatpush1.msra.mxu0 %v3842
      %4203 = vmatprep.subr.mxu0 0.0
      %4204 = vmatpush1.msra.mxu0 0.0
      %4205 = vmatprep.subr.mxu0 0.0
      %4206 = vmatpush1.msra.mxu0 0.0
      %4207 = vmatprep.subr.mxu0 0.0
      %4208 = vmatpush1.msra.mxu0 0.0
      %4209 = vmatprep.subr.mxu0 0.0
      %4210 = vmatpush1.msra.mxu0 0.0
      %4211 = vmatprep.subr.mxu0 0.0
      %4212 = vmatpush1.msra.mxu0 0.0
      %4213 = vmatprep.subr.mxu0 0.0
      %4214 = vmatpush1.msra.mxu0 0.0
      %4215 = vmatprep.subr.mxu0 0.0
      %4216 = vmatpush1.msra.mxu0 0.0
      %4217 = vmatprep.subr.mxu0 0.0
      %4218 = vmatpush1.msra.mxu0 0.0
      %4219 = vmatprep.subr.mxu0 0.0
      %4220 = vmatpush1.msra.mxu0 0.0
      %4221 = vmatprep.subr.mxu0 0.0
      %4222 = vmatpush1.msra.mxu0 0.0
      %4223 = vmatprep.subr.mxu0 0.0
      %4224 = vmatpush1.msra.mxu0 0.0
      %4225 = vmatprep.subr.mxu0 0.0
      %4226 = vmatpush1.msra.mxu0 0.0
      %4227 = vmatprep.subr.mxu0 0.0
      %4228 = vmatpush1.msra.mxu0 0.0
      %4229 = vmatprep.subr.mxu0 0.0
      %4230 = vmatpush1.msra.mxu0 0.0
      %4231 = vmatprep.subr.mxu0 0.0
      %4232 = vmatpush1.msra.mxu0 0.0
      %4233 = vmatprep.subr.mxu0 0.0
      %4234 = vmatpush1.msra.mxu0 0.0
      %4235 = vmatprep.subr.mxu0 0.0
      %4236 = vmatpush1.msra.mxu0 0.0
      %4237 = vmatprep.subr.mxu0 0.0
      %4238 = vmatpush1.msra.mxu0 0.0
      %4239 = vmatprep.subr.mxu0 0.0
      %4240 = vmatpush1.msra.mxu0 0.0
      %4241 = vmatprep.subr.mxu0 0.0
      %4242 = vmatpush1.msra.mxu0 0.0
      %4243 = vmatprep.subr.mxu0 0.0
      %4244 = vmatpush1.msra.mxu0 0.0
      %4245 = vmatprep.subr.mxu0 0.0
      %4246 = vmatpush1.msra.mxu0 0.0
      %4247 = vmatprep.subr.mxu0 0.0
      %4248 = vmatpush1.msra.mxu0 0.0
      %4249 = vmatprep.subr.mxu0 0.0
      %4250 = vmatpush1.msra.mxu0 0.0
      %4251 = vmatprep.mubr.f32.mxu0 0.0
      %4252 = vmatmul.mubr.f32.gmra.mrb[0].mxu0 %v3909
      %v4253 = vpop.f32.mrb[0].mxu0
      %v4254 = vadd.f32 %v3891, %v4253
      %v4255 = vpop.f32.mrb[0].mxu0
      %v4256 = vadd.f32 %v3891, %v4255
      %4257 = vmatprep.mubr.f32.mxu0 0.0
      %4258 = vmatmul.mubr.f32.gmra.mrb[0].mxu0 %v3912
      %v4259 = vpop.f32.mrb[0].mxu0
      %v4260 = vadd.f32 %v3896, %v4259
      %v4261 = vpop.f32.mrb[0].mxu0
      %v4262 = vadd.f32 %v3896, %v4261
      %4263 = vmatprep.mubr.f32.mxu0 0.0
      %4264 = vmatmul.mubr.f32.gmra.mrb[0].mxu0 %v3915
      %v4265 = vpop.f32.mrb[0].mxu0
      %v4266 = vadd.f32 %v3901, %v4265
      %v4267 = vpop.f32.mrb[0].mxu0
      %v4268 = vadd.f32 %v3901, %v4267
      %4269 = vmatprep.mubr.f32.mxu0 0.0
      %4270 = vmatmul.mubr.f32.gmra.mrb[0].mxu0 %v3918
      %v4271 = vpop.f32.mrb[0].mxu0
      %v4272 = vadd.f32 %v3906, %v4271
      %v4273 = vpop.f32.mrb[0].mxu0
      %v4274 = vadd.f32 %v3906, %v4273
      %4275 = vdwg.mxu0
      %4276 = vmatprep.subr.mxu0 %v3475
      %4277 = vmatpush1.msra.mxu0 %v3474
      %4278 = vmatprep.subr.mxu0 %v3490
      %4279 = vmatpush1.msra.mxu0 %v3489
      %4280 = vmatprep.subr.mxu0 %v3595
      %4281 = vmatpush1.msra.mxu0 %v3594
      %4282 = vmatprep.subr.mxu0 %v3609
      %4283 = vmatpush1.msra.mxu0 %v3608
      %4284 = vmatprep.subr.mxu0 %v3713
      %4285 = vmatpush1.msra.mxu0 %v3712
      %4286 = vmatprep.subr.mxu0 %v3727
      %4287 = vmatpush1.msra.mxu0 %v3726
      %4288 = vmatprep.subr.mxu0 %v3831
      %4289 = vmatpush1.msra.mxu0 %v3830
      %4290 = vmatprep.subr.mxu0 %v3845
      %4291 = vmatpush1.msra.mxu0 %v3844
      %4292 = vmatprep.subr.mxu0 0.0
      %4293 = vmatpush1.msra.mxu0 0.0
      %4294 = vmatprep.subr.mxu0 0.0
      %4295 = vmatpush1.msra.mxu0 0.0
      %4296 = vmatprep.subr.mxu0 0.0
      %4297 = vmatpush1.msra.mxu0 0.0
      %4298 = vmatprep.subr.mxu0 0.0
      %4299 = vmatpush1.msra.mxu0 0.0
      %4300 = vmatprep.subr.mxu0 0.0
      %4301 = vmatpush1.msra.mxu0 0.0
      %4302 = vmatprep.subr.mxu0 0.0
      %4303 = vmatpush1.msra.mxu0 0.0
      %4304 = vmatprep.subr.mxu0 0.0
      %4305 = vmatpush1.msra.mxu0 0.0
      %4306 = vmatprep.subr.mxu0 0.0
      %4307 = vmatpush1.msra.mxu0 0.0
      %4308 = vmatprep.subr.mxu0 0.0
      %4309 = vmatpush1.msra.mxu0 0.0
      %4310 = vmatprep.subr.mxu0 0.0
      %4311 = vmatpush1.msra.mxu0 0.0
      %4312 = vmatprep.subr.mxu0 0.0
      %4313 = vmatpush1.msra.mxu0 0.0
      %4314 = vmatprep.subr.mxu0 0.0
      %4315 = vmatpush1.msra.mxu0 0.0
      %4316 = vmatprep.subr.mxu0 0.0
      %4317 = vmatpush1.msra.mxu0 0.0
      %4318 = vmatprep.subr.mxu0 0.0
      %4319 = vmatpush1.msra.mxu0 0.0
      %4320 = vmatprep.subr.mxu0 0.0
      %4321 = vmatpush1.msra.mxu0 0.0
      %4322 = vmatprep.subr.mxu0 0.0
      %4323 = vmatpush1.msra.mxu0 0.0
      %4324 = vmatprep.subr.mxu0 0.0
      %4325 = vmatpush1.msra.mxu0 0.0
      %4326 = vmatprep.subr.mxu0 0.0
      %4327 = vmatpush1.msra.mxu0 0.0
      %4328 = vmatprep.subr.mxu0 0.0
      %4329 = vmatpush1.msra.mxu0 0.0
      %4330 = vmatprep.subr.mxu0 0.0
      %4331 = vmatpush1.msra.mxu0 0.0
      %4332 = vmatprep.subr.mxu0 0.0
      %4333 = vmatpush1.msra.mxu0 0.0
      %4334 = vmatprep.subr.mxu0 0.0
      %4335 = vmatpush1.msra.mxu0 0.0
      %4336 = vmatprep.subr.mxu0 0.0
      %4337 = vmatpush1.msra.mxu0 0.0
      %4338 = vmatprep.subr.mxu0 0.0
      %4339 = vmatpush1.msra.mxu0 0.0
      %4340 = vmatprep.mubr.f32.mxu0 0.0
      %4341 = vmatmul.mubr.f32.gmra.mrb[0].mxu0 %v3909
      %v4342 = vpop.f32.mrb[0].mxu0
      %v4343 = vadd.f32 %v3891, %v4342
      %v4344 = vpop.f32.mrb[0].mxu0
      %v4345 = vadd.f32 %v3891, %v4344
      %4346 = vmatprep.mubr.f32.mxu0 0.0
      %4347 = vmatmul.mubr.f32.gmra.mrb[0].mxu0 %v3912
      %v4348 = vpop.f32.mrb[0].mxu0
      %v4349 = vadd.f32 %v3896, %v4348
      %v4350 = vpop.f32.mrb[0].mxu0
      %v4351 = vadd.f32 %v3896, %v4350
      %4352 = vmatprep.mubr.f32.mxu0 0.0
      %4353 = vmatmul.mubr.f32.gmra.mrb[0].mxu0 %v3915
      %v4354 = vpop.f32.mrb[0].mxu0
      %v4355 = vadd.f32 %v3901, %v4354
      %v4356 = vpop.f32.mrb[0].mxu0
      %v4357 = vadd.f32 %v3901, %v4356
      %4358 = vmatprep.mubr.f32.mxu0 0.0
      %4359 = vmatmul.mubr.f32.gmra.mrb[0].mxu0 %v3918
      %v4360 = vpop.f32.mrb[0].mxu0
      %v4361 = vadd.f32 %v3906, %v4360
      %v4362 = vpop.f32.mrb[0].mxu0
      %v4363 = vadd.f32 %v3906, %v4362
      %4364 = vdwg.mxu0
      %4365 = vmatprep.subr.mxu0 %v3477
      %4366 = vmatpush1.msra.mxu0 %v3476
      %4367 = vmatprep.subr.mxu0 %v3492
      %4368 = vmatpush1.msra.mxu0 %v3491
      %4369 = vmatprep.subr.mxu0 %v3597
      %4370 = vmatpush1.msra.mxu0 %v3596
      %4371 = vmatprep.subr.mxu0 %v3611
      %4372 = vmatpush1.msra.mxu0 %v3610
      %4373 = vmatprep.subr.mxu0 %v3715
      %4374 = vmatpush1.msra.mxu0 %v3714
      %4375 = vmatprep.subr.mxu0 %v3729
      %4376 = vmatpush1.msra.mxu0 %v3728
      %4377 = vmatprep.subr.mxu0 %v3833
      %4378 = vmatpush1.msra.mxu0 %v3832
      %4379 = vmatprep.subr.mxu0 %v3847
      %4380 = vmatpush1.msra.mxu0 %v3846
      %4381 = vmatprep.subr.mxu0 0.0
      %4382 = vmatpush1.msra.mxu0 0.0
      %4383 = vmatprep.subr.mxu0 0.0
      %4384 = vmatpush1.msra.mxu0 0.0
      %4385 = vmatprep.subr.mxu0 0.0
      %4386 = vmatpush1.msra.mxu0 0.0
      %4387 = vmatprep.subr.mxu0 0.0
      %4388 = vmatpush1.msra.mxu0 0.0
      %4389 = vmatprep.subr.mxu0 0.0
      %4390 = vmatpush1.msra.mxu0 0.0
      %4391 = vmatprep.subr.mxu0 0.0
      %4392 = vmatpush1.msra.mxu0 0.0
      %4393 = vmatprep.subr.mxu0 0.0
      %4394 = vmatpush1.msra.mxu0 0.0
      %4395 = vmatprep.subr.mxu0 0.0
      %4396 = vmatpush1.msra.mxu0 0.0
      %4397 = vmatprep.subr.mxu0 0.0
      %4398 = vmatpush1.msra.mxu0 0.0
      %4399 = vmatprep.subr.mxu0 0.0
      %4400 = vmatpush1.msra.mxu0 0.0
      %4401 = vmatprep.subr.mxu0 0.0
      %4402 = vmatpush1.msra.mxu0 0.0
      %4403 = vmatprep.subr.mxu0 0.0
      %4404 = vmatpush1.msra.mxu0 0.0
      %4405 = vmatprep.subr.mxu0 0.0
      %4406 = vmatpush1.msra.mxu0 0.0
      %4407 = vmatprep.subr.mxu0 0.0
      %4408 = vmatpush1.msra.mxu0 0.0
      %4409 = vmatprep.subr.mxu0 0.0
      %4410 = vmatpush1.msra.mxu0 0.0
      %4411 = vmatprep.subr.mxu0 0.0
      %4412 = vmatpush1.msra.mxu0 0.0
      %4413 = vmatprep.subr.mxu0 0.0
      %4414 = vmatpush1.msra.mxu0 0.0
      %4415 = vmatprep.subr.mxu0 0.0
      %4416 = vmatpush1.msra.mxu0 0.0
      %4417 = vmatprep.subr.mxu0 0.0
      %4418 = vmatpush1.msra.mxu0 0.0
      %4419 = vmatprep.subr.mxu0 0.0
      %4420 = vmatpush1.msra.mxu0 0.0
      %4421 = vmatprep.subr.mxu0 0.0
      %4422 = vmatpush1.msra.mxu0 0.0
      %4423 = vmatprep.subr.mxu0 0.0
      %4424 = vmatpush1.msra.mxu0 0.0
      %4425 = vmatprep.subr.mxu0 0.0
      %4426 = vmatpush1.msra.mxu0 0.0
      %4427 = vmatprep.subr.mxu0 0.0
      %4428 = vmatpush1.msra.mxu0 0.0
      %4429 = vmatprep.mubr.f32.mxu0 0.0
      %4430 = vmatmul.mubr.f32.gmra.mrb[0].mxu0 %v3909
      %v4431 = vpop.f32.mrb[0].mxu0
      %v4432 = vadd.f32 %v3891, %v4431
      %v4433 = vpop.f32.mrb[0].mxu0
      %v4434 = vadd.f32 %v3891, %v4433
      %4435 = vmatprep.mubr.f32.mxu0 0.0
      %4436 = vmatmul.mubr.f32.gmra.mrb[0].mxu0 %v3912
      %v4437 = vpop.f32.mrb[0].mxu0
      %v4438 = vadd.f32 %v3896, %v4437
      %v4439 = vpop.f32.mrb[0].mxu0
      %v4440 = vadd.f32 %v3896, %v4439
      %4441 = vmatprep.mubr.f32.mxu0 0.0
      %4442 = vmatmul.mubr.f32.gmra.mrb[0].mxu0 %v3915
      %v4443 = vpop.f32.mrb[0].mxu0
      %v4444 = vadd.f32 %v3901, %v4443
      %v4445 = vpop.f32.mrb[0].mxu0
      %v4446 = vadd.f32 %v3901, %v4445
      %4447 = vmatprep.mubr.f32.mxu0 0.0
      %4448 = vmatmul.mubr.f32.gmra.mrb[0].mxu0 %v3918
      %v4449 = vpop.f32.mrb[0].mxu0
      %v4450 = vadd.f32 %v3906, %v4449
      %v4451 = vpop.f32.mrb[0].mxu0
      %v4452 = vadd.f32 %v3906, %v4451
      %4453 = vdwg.mxu0
      %4454 = vmatprep.subr.mxu0 %v3479
      %4455 = vmatpush1.msra.mxu0 %v3478
      %4456 = vmatprep.subr.mxu0 %v3494
      %4457 = vmatpush1.msra.mxu0 %v3493
      %4458 = vmatprep.subr.mxu0 %v3599
      %4459 = vmatpush1.msra.mxu0 %v3598
      %4460 = vmatprep.subr.mxu0 %v3613
      %4461 = vmatpush1.msra.mxu0 %v3612
      %4462 = vmatprep.subr.mxu0 %v3717
      %4463 = vmatpush1.msra.mxu0 %v3716
      %4464 = vmatprep.subr.mxu0 %v3731
      %4465 = vmatpush1.msra.mxu0 %v3730
      %4466 = vmatprep.subr.mxu0 %v3835
      %4467 = vmatpush1.msra.mxu0 %v3834
      %4468 = vmatprep.subr.mxu0 %v3849
      %4469 = vmatpush1.msra.mxu0 %v3848
      %4470 = vmatprep.subr.mxu0 0.0
      %4471 = vmatpush1.msra.mxu0 0.0
      %4472 = vmatprep.subr.mxu0 0.0
      %4473 = vmatpush1.msra.mxu0 0.0
      %4474 = vmatprep.subr.mxu0 0.0
      %4475 = vmatpush1.msra.mxu0 0.0
      %4476 = vmatprep.subr.mxu0 0.0
      %4477 = vmatpush1.msra.mxu0 0.0
      %4478 = vmatprep.subr.mxu0 0.0
      %4479 = vmatpush1.msra.mxu0 0.0
      %4480 = vmatprep.subr.mxu0 0.0
      %4481 = vmatpush1.msra.mxu0 0.0
      %4482 = vmatprep.subr.mxu0 0.0
      %4483 = vmatpush1.msra.mxu0 0.0
      %4484 = vmatprep.subr.mxu0 0.0
      %4485 = vmatpush1.msra.mxu0 0.0
      %4486 = vmatprep.subr.mxu0 0.0
      %4487 = vmatpush1.msra.mxu0 0.0
      %4488 = vmatprep.subr.mxu0 0.0
      %4489 = vmatpush1.msra.mxu0 0.0
      %4490 = vmatprep.subr.mxu0 0.0
      %4491 = vmatpush1.msra.mxu0 0.0
      %4492 = vmatprep.subr.mxu0 0.0
      %4493 = vmatpush1.msra.mxu0 0.0
      %4494 = vmatprep.subr.mxu0 0.0
      %4495 = vmatpush1.msra.mxu0 0.0
      %4496 = vmatprep.subr.mxu0 0.0
      %4497 = vmatpush1.msra.mxu0 0.0
      %4498 = vmatprep.subr.mxu0 0.0
      %4499 = vmatpush1.msra.mxu0 0.0
      %4500 = vmatprep.subr.mxu0 0.0
      %4501 = vmatpush1.msra.mxu0 0.0
      %4502 = vmatprep.subr.mxu0 0.0
      %4503 = vmatpush1.msra.mxu0 0.0
      %4504 = vmatprep.subr.mxu0 0.0
      %4505 = vmatpush1.msra.mxu0 0.0
      %4506 = vmatprep.subr.mxu0 0.0
      %4507 = vmatpush1.msra.mxu0 0.0
      %4508 = vmatprep.subr.mxu0 0.0
      %4509 = vmatpush1.msra.mxu0 0.0
      %4510 = vmatprep.subr.mxu0 0.0
      %4511 = vmatpush1.msra.mxu0 0.0
      %4512 = vmatprep.subr.mxu0 0.0
      %4513 = vmatpush1.msra.mxu0 0.0
      %4514 = vmatprep.subr.mxu0 0.0
      %4515 = vmatpush1.msra.mxu0 0.0
      %4516 = vmatprep.subr.mxu0 0.0
      %4517 = vmatpush1.msra.mxu0 0.0
      %4518 = vmatprep.mubr.f32.mxu0 0.0
      %4519 = vmatmul.mubr.f32.gmra.mrb[0].mxu0 %v3909
      %v4520 = vpop.f32.mrb[0].mxu0
      %v4521 = vadd.f32 %v3891, %v4520
      %v4522 = vpop.f32.mrb[0].mxu0
      %v4523 = vadd.f32 %v3891, %v4522
      %4524 = vmatprep.mubr.f32.mxu0 0.0
      %4525 = vmatmul.mubr.f32.gmra.mrb[0].mxu0 %v3912
      %v4526 = vpop.f32.mrb[0].mxu0
      %v4527 = vadd.f32 %v3896, %v4526
      %v4528 = vpop.f32.mrb[0].mxu0
      %v4529 = vadd.f32 %v3896, %v4528
      %4530 = vmatprep.mubr.f32.mxu0 0.0
      %4531 = vmatmul.mubr.f32.gmra.mrb[0].mxu0 %v3915
      %v4532 = vpop.f32.mrb[0].mxu0
      %v4533 = vadd.f32 %v3901, %v4532
      %v4534 = vpop.f32.mrb[0].mxu0
      %v4535 = vadd.f32 %v3901, %v4534
      %4536 = vmatprep.mubr.f32.mxu0 0.0
      %4537 = vmatmul.mubr.f32.gmra.mrb[0].mxu0 %v3918
      %v4538 = vpop.f32.mrb[0].mxu0
      %v4539 = vadd.f32 %v3906, %v4538
      %v4540 = vpop.f32.mrb[0].mxu0
      %v4541 = vadd.f32 %v3906, %v4540
      %4542 = vdwg.mxu0
      %4543 = vmatprep.subr.mxu0 0.0
      %4544 = vmatpush1.msra.mxu0 %v3480
      %4545 = vmatprep.subr.mxu0 0.0
      %4546 = vmatpush1.msra.mxu0 %v3495
      %4547 = vmatprep.subr.mxu0 0.0
      %4548 = vmatpush1.msra.mxu0 %v3555
      %4549 = vmatprep.subr.mxu0 0.0
      %4550 = vmatpush1.msra.mxu0 %v3585
      %4551 = vmatprep.subr.mxu0 0.0
      %4552 = vmatpush1.msra.mxu0 %v3673
      %4553 = vmatprep.subr.mxu0 0.0
      %4554 = vmatpush1.msra.mxu0 %v3703
      %4555 = vmatprep.subr.mxu0 0.0
      %4556 = vmatpush1.msra.mxu0 %v3791
      %4557 = vmatprep.subr.mxu0 0.0
      %4558 = vmatpush1.msra.mxu0 %v3821
      %4559 = vmatprep.subr.mxu0 0.0
      %4560 = vmatpush1.msra.mxu0 0.0
      %4561 = vmatprep.subr.mxu0 0.0
      %4562 = vmatpush1.msra.mxu0 0.0
      %4563 = vmatprep.subr.mxu0 0.0
      %4564 = vmatpush1.msra.mxu0 0.0
      %4565 = vmatprep.subr.mxu0 0.0
      %4566 = vmatpush1.msra.mxu0 0.0
      %4567 = vmatprep.subr.mxu0 0.0
      %4568 = vmatpush1.msra.mxu0 0.0
      %4569 = vmatprep.subr.mxu0 0.0
      %4570 = vmatpush1.msra.mxu0 0.0
      %4571 = vmatprep.subr.mxu0 0.0
      %4572 = vmatpush1.msra.mxu0 0.0
      %4573 = vmatprep.subr.mxu0 0.0
      %4574 = vmatpush1.msra.mxu0 0.0
      %4575 = vmatprep.subr.mxu0 0.0
      %4576 = vmatpush1.msra.mxu0 0.0
      %4577 = vmatprep.subr.mxu0 0.0
      %4578 = vmatpush1.msra.mxu0 0.0
      %4579 = vmatprep.subr.mxu0 0.0
      %4580 = vmatpush1.msra.mxu0 0.0
      %4581 = vmatprep.subr.mxu0 0.0
      %4582 = vmatpush1.msra.mxu0 0.0
      %4583 = vmatprep.subr.mxu0 0.0
      %4584 = vmatpush1.msra.mxu0 0.0
      %4585 = vmatprep.subr.mxu0 0.0
      %4586 = vmatpush1.msra.mxu0 0.0
      %4587 = vmatprep.subr.mxu0 0.0
      %4588 = vmatpush1.msra.mxu0 0.0
      %4589 = vmatprep.subr.mxu0 0.0
      %4590 = vmatpush1.msra.mxu0 0.0
      %4591 = vmatprep.subr.mxu0 0.0
      %4592 = vmatpush1.msra.mxu0 0.0
      %4593 = vmatprep.subr.mxu0 0.0
      %4594 = vmatpush1.msra.mxu0 0.0
      %4595 = vmatprep.subr.mxu0 0.0
      %4596 = vmatpush1.msra.mxu0 0.0
      %4597 = vmatprep.subr.mxu0 0.0
      %4598 = vmatpush1.msra.mxu0 0.0
      %4599 = vmatprep.subr.mxu0 0.0
      %4600 = vmatpush1.msra.mxu0 0.0
      %4601 = vmatprep.subr.mxu0 0.0
      %4602 = vmatpush1.msra.mxu0 0.0
      %4603 = vmatprep.subr.mxu0 0.0
      %4604 = vmatpush1.msra.mxu0 0.0
      %4605 = vmatprep.subr.mxu0 0.0
      %4606 = vmatpush1.msra.mxu0 0.0
      %4607 = vmatprep.mubr.f32.mxu0 0.0
      %4608 = vmatmul.mubr.f32.gmra.mrb[0].mxu0 %v3909
      %v4609 = vpop.f32.mrb[0].mxu0
      %v4610 = vadd.f32 %v3891, %v4609
      %v4611 = vpop.f32.mrb[0].mxu0
      %4612 = vmatprep.mubr.f32.mxu0 0.0
      %4613 = vmatmul.mubr.f32.gmra.mrb[0].mxu0 %v3912
      %v4614 = vpop.f32.mrb[0].mxu0
      %v4615 = vadd.f32 %v3896, %v4614
      %v4616 = vpop.f32.mrb[0].mxu0
      %4617 = vmatprep.mubr.f32.mxu0 0.0
      %4618 = vmatmul.mubr.f32.gmra.mrb[0].mxu0 %v3915
      %v4619 = vpop.f32.mrb[0].mxu0
      %v4620 = vadd.f32 %v3901, %v4619
      %v4621 = vpop.f32.mrb[0].mxu0
      %4622 = vmatprep.mubr.f32.mxu0 0.0
      %4623 = vmatmul.mubr.f32.gmra.mrb[0].mxu0 %v3918
      %v4624 = vpop.f32.mrb[0].mxu0
      %v4625 = vadd.f32 %v3906, %v4624
      %v4626 = vpop.f32.mrb[0].mxu0
      %4627 = vdwg.mxu0
      %v4628 = vmax.f32 %v3987, 0.0
      %v4629 = vmax.f32 %v3989, 0.0
      %v4630 = vmax.f32 %v4076, 0.0
      %v4631 = vmax.f32 %v4078, 0.0
      %v4632 = vmax.f32 %v4165, 0.0
      %v4633 = vmax.f32 %v4167, 0.0
      %v4634 = vmax.f32 %v4254, 0.0
      %v4635 = vmax.f32 %v4256, 0.0
      %v4636 = vmax.f32 %v4343, 0.0
      %v4637 = vmax.f32 %v4345, 0.0
      %v4638 = vmax.f32 %v4432, 0.0
      %v4639 = vmax.f32 %v4434, 0.0
      %v4640 = vmax.f32 %v4521, 0.0
      %v4641 = vmax.f32 %v4523, 0.0
      %v4642 = vmax.f32 %v4610, 0.0
      %v4643 = vmax.f32 %v3993, 0.0
      %v4644 = vmax.f32 %v3995, 0.0
      %v4645 = vmax.f32 %v4082, 0.0
      %v4646 = vmax.f32 %v4084, 0.0
      %v4647 = vmax.f32 %v4171, 0.0
      %v4648 = vmax.f32 %v4173, 0.0
      %v4649 = vmax.f32 %v4260, 0.0
      %v4650 = vmax.f32 %v4262, 0.0
      %v4651 = vmax.f32 %v4349, 0.0
      %v4652 = vmax.f32 %v4351, 0.0
      %v4653 = vmax.f32 %v4438, 0.0
      %v4654 = vmax.f32 %v4440, 0.0
      %v4655 = vmax.f32 %v4527, 0.0
      %v4656 = vmax.f32 %v4529, 0.0
      %v4657 = vmax.f32 %v4615, 0.0
      %v4658 = vmax.f32 %v3999, 0.0
      %v4659 = vmax.f32 %v4001, 0.0
      %v4660 = vmax.f32 %v4088, 0.0
      %v4661 = vmax.f32 %v4090, 0.0
      %v4662 = vmax.f32 %v4177, 0.0
      %v4663 = vmax.f32 %v4179, 0.0
      %v4664 = vmax.f32 %v4266, 0.0
      %v4665 = vmax.f32 %v4268, 0.0
      %v4666 = vmax.f32 %v4355, 0.0
      %v4667 = vmax.f32 %v4357, 0.0
      %v4668 = vmax.f32 %v4444, 0.0
      %v4669 = vmax.f32 %v4446, 0.0
      %v4670 = vmax.f32 %v4533, 0.0
      %v4671 = vmax.f32 %v4535, 0.0
      %v4672 = vmax.f32 %v4620, 0.0
      %v4673 = vmax.f32 %v4005, 0.0
      %v4674 = vmax.f32 %v4007, 0.0
      %v4675 = vmax.f32 %v4094, 0.0
      %v4676 = vmax.f32 %v4096, 0.0
      %v4677 = vmax.f32 %v4183, 0.0
      %v4678 = vmax.f32 %v4185, 0.0
      %v4679 = vmax.f32 %v4272, 0.0
      %v4680 = vmax.f32 %v4274, 0.0
      %v4681 = vmax.f32 %v4361, 0.0
      %v4682 = vmax.f32 %v4363, 0.0
      %v4683 = vmax.f32 %v4450, 0.0
      %v4684 = vmax.f32 %v4452, 0.0
      %v4685 = vmax.f32 %v4539, 0.0
      %v4686 = vmax.f32 %v4541, 0.0
      %v4687 = vmax.f32 %v4625, 0.0
      %v4688 = vld [vmem:[%s7] sm:$0xff]
      %v4689 = vld [vmem:[%s7 + $0x8] sm:$0x3]
      %v4690 = vld [vmem:[%s8] sm:$0xff]
      %v4691 = vld [vmem:[%s8 + $0x8] sm:$0x3]
      %4693 = vset.pattern.permute.xlu0 0
      %4694 = vperm.xlu0 %4693, %v4690
      %v4695 = vpop.permute.xlu0 %4694
      %4698 = vset.pattern.permute.xlu0 0
      %4699 = vperm.xlu0 %4698, %v4691
      %v4700 = vpop.permute.xlu0 %4699
      %vm4702 = vcmask 261120
      %v4704 = vsel %vm4702, %v4688, 0
      %v4707 = vsel %vm4702, %v4689, 0
      %4709 = vmatprep.subr.mxu0 %v4629
      %4710 = vmatpush1.msra.mxu0 %v4628
      %4711 = vmatprep.subr.mxu0 %v4644
      %4712 = vmatpush1.msra.mxu0 %v4643
      %4713 = vmatprep.subr.mxu0 %v4659
      %4714 = vmatpush1.msra.mxu0 %v4658
      %4715 = vmatprep.subr.mxu0 %v4674
      %4716 = vmatpush1.msra.mxu0 %v4673
      %4717 = vmatprep.subr.mxu0 0.0
      %4718 = vmatpush1.msra.mxu0 0.0
      %4719 = vmatprep.subr.mxu0 0.0
      %4720 = vmatpush1.msra.mxu0 0.0
      %4721 = vmatprep.subr.mxu0 0.0
      %4722 = vmatpush1.msra.mxu0 0.0
      %4723 = vmatprep.subr.mxu0 0.0
      %4724 = vmatpush1.msra.mxu0 0.0
      %4725 = vmatprep.subr.mxu0 0.0
      %4726 = vmatpush1.msra.mxu0 0.0
      %4727 = vmatprep.subr.mxu0 0.0
      %4728 = vmatpush1.msra.mxu0 0.0
      %4729 = vmatprep.subr.mxu0 0.0
      %4730 = vmatpush1.msra.mxu0 0.0
      %4731 = vmatprep.subr.mxu0 0.0
      %4732 = vmatpush1.msra.mxu0 0.0
      %4733 = vmatprep.subr.mxu0 0.0
      %4734 = vmatpush1.msra.mxu0 0.0
      %4735 = vmatprep.subr.mxu0 0.0
      %4736 = vmatpush1.msra.mxu0 0.0
      %4737 = vmatprep.subr.mxu0 0.0
      %4738 = vmatpush1.msra.mxu0 0.0
      %4739 = vmatprep.subr.mxu0 0.0
      %4740 = vmatpush1.msra.mxu0 0.0
      %4741 = vmatprep.subr.mxu0 0.0
      %4742 = vmatpush1.msra.mxu0 0.0
      %4743 = vmatprep.subr.mxu0 0.0
      %4744 = vmatpush1.msra.mxu0 0.0
      %4745 = vmatprep.subr.mxu0 0.0
      %4746 = vmatpush1.msra.mxu0 0.0
      %4747 = vmatprep.subr.mxu0 0.0
      %4748 = vmatpush1.msra.mxu0 0.0
      %4749 = vmatprep.subr.mxu0 0.0
      %4750 = vmatpush1.msra.mxu0 0.0
      %4751 = vmatprep.subr.mxu0 0.0
      %4752 = vmatpush1.msra.mxu0 0.0
      %4753 = vmatprep.subr.mxu0 0.0
      %4754 = vmatpush1.msra.mxu0 0.0
      %4755 = vmatprep.subr.mxu0 0.0
      %4756 = vmatpush1.msra.mxu0 0.0
      %4757 = vmatprep.subr.mxu0 0.0
      %4758 = vmatpush1.msra.mxu0 0.0
      %4759 = vmatprep.subr.mxu0 0.0
      %4760 = vmatpush1.msra.mxu0 0.0
      %4761 = vmatprep.subr.mxu0 0.0
      %4762 = vmatpush1.msra.mxu0 0.0
      %4763 = vmatprep.subr.mxu0 0.0
      %4764 = vmatpush1.msra.mxu0 0.0
      %4765 = vmatprep.subr.mxu0 0.0
      %4766 = vmatpush1.msra.mxu0 0.0
      %4767 = vmatprep.subr.mxu0 0.0
      %4768 = vmatpush1.msra.mxu0 0.0
      %4769 = vmatprep.subr.mxu0 0.0
      %4770 = vmatpush1.msra.mxu0 0.0
      %4771 = vmatprep.subr.mxu0 0.0
      %4772 = vmatpush1.msra.mxu0 0.0
      %4773 = vmatprep.mubr.f32.mxu0 0.0
      %4774 = vmatmul.mubr.f32.gmra.mrb[0].mxu0 %v4704
      %v4775 = vpop.f32.mrb[0].mxu0
      %v4776 = vadd.f32 %v4695, %v4775
      %v4777 = vpop.f32.mrb[0].mxu0
      %v4778 = vadd.f32 %v4695, %v4777
      %4779 = vmatprep.mubr.f32.mxu0 0.0
      %4780 = vmatmul.mubr.f32.gmra.mrb[0].mxu0 %v4707
      %v4781 = vpop.f32.mrb[0].mxu0
      %v4782 = vadd.f32 %v4700, %v4781
      %v4783 = vpop.f32.mrb[0].mxu0
      %v4784 = vadd.f32 %v4700, %v4783
      %4785 = vdwg.mxu0
      %4786 = vmatprep.subr.mxu0 %v4631
      %4787 = vmatpush1.msra.mxu0 %v4630
      %4788 = vmatprep.subr.mxu0 %v4646
      %4789 = vmatpush1.msra.mxu0 %v4645
      %4790 = vmatprep.subr.mxu0 %v4661
      %4791 = vmatpush1.msra.mxu0 %v4660
      %4792 = vmatprep.subr.mxu0 %v4676
      %4793 = vmatpush1.msra.mxu0 %v4675
      %4794 = vmatprep.subr.mxu0 0.0
      %4795 = vmatpush1.msra.mxu0 0.0
      %4796 = vmatprep.subr.mxu0 0.0
      %4797 = vmatpush1.msra.mxu0 0.0
      %4798 = vmatprep.subr.mxu0 0.0
      %4799 = vmatpush1.msra.mxu0 0.0
      %4800 = vmatprep.subr.mxu0 0.0
      %4801 = vmatpush1.msra.mxu0 0.0
      %4802 = vmatprep.subr.mxu0 0.0
      %4803 = vmatpush1.msra.mxu0 0.0
      %4804 = vmatprep.subr.mxu0 0.0
      %4805 = vmatpush1.msra.mxu0 0.0
      %4806 = vmatprep.subr.mxu0 0.0
      %4807 = vmatpush1.msra.mxu0 0.0
      %4808 = vmatprep.subr.mxu0 0.0
      %4809 = vmatpush1.msra.mxu0 0.0
      %4810 = vmatprep.subr.mxu0 0.0
      %4811 = vmatpush1.msra.mxu0 0.0
      %4812 = vmatprep.subr.mxu0 0.0
      %4813 = vmatpush1.msra.mxu0 0.0
      %4814 = vmatprep.subr.mxu0 0.0
      %4815 = vmatpush1.msra.mxu0 0.0
      %4816 = vmatprep.subr.mxu0 0.0
      %4817 = vmatpush1.msra.mxu0 0.0
      %4818 = vmatprep.subr.mxu0 0.0
      %4819 = vmatpush1.msra.mxu0 0.0
      %4820 = vmatprep.subr.mxu0 0.0
      %4821 = vmatpush1.msra.mxu0 0.0
      %4822 = vmatprep.subr.mxu0 0.0
      %4823 = vmatpush1.msra.mxu0 0.0
      %4824 = vmatprep.subr.mxu0 0.0
      %4825 = vmatpush1.msra.mxu0 0.0
      %4826 = vmatprep.subr.mxu0 0.0
      %4827 = vmatpush1.msra.mxu0 0.0
      %4828 = vmatprep.subr.mxu0 0.0
      %4829 = vmatpush1.msra.mxu0 0.0
      %4830 = vmatprep.subr.mxu0 0.0
      %4831 = vmatpush1.msra.mxu0 0.0
      %4832 = vmatprep.subr.mxu0 0.0
      %4833 = vmatpush1.msra.mxu0 0.0
      %4834 = vmatprep.subr.mxu0 0.0
      %4835 = vmatpush1.msra.mxu0 0.0
      %4836 = vmatprep.subr.mxu0 0.0
      %4837 = vmatpush1.msra.mxu0 0.0
      %4838 = vmatprep.subr.mxu0 0.0
      %4839 = vmatpush1.msra.mxu0 0.0
      %4840 = vmatprep.subr.mxu0 0.0
      %4841 = vmatpush1.msra.mxu0 0.0
      %4842 = vmatprep.subr.mxu0 0.0
      %4843 = vmatpush1.msra.mxu0 0.0
      %4844 = vmatprep.subr.mxu0 0.0
      %4845 = vmatpush1.msra.mxu0 0.0
      %4846 = vmatprep.subr.mxu0 0.0
      %4847 = vmatpush1.msra.mxu0 0.0
      %4848 = vmatprep.subr.mxu0 0.0
      %4849 = vmatpush1.msra.mxu0 0.0
      %4850 = vmatprep.mubr.f32.mxu0 0.0
      %4851 = vmatmul.mubr.f32.gmra.mrb[0].mxu0 %v4704
      %v4852 = vpop.f32.mrb[0].mxu0
      %v4853 = vadd.f32 %v4695, %v4852
      %v4854 = vpop.f32.mrb[0].mxu0
      %v4855 = vadd.f32 %v4695, %v4854
      %4856 = vmatprep.mubr.f32.mxu0 0.0
      %4857 = vmatmul.mubr.f32.gmra.mrb[0].mxu0 %v4707
      %v4858 = vpop.f32.mrb[0].mxu0
      %v4859 = vadd.f32 %v4700, %v4858
      %v4860 = vpop.f32.mrb[0].mxu0
      %v4861 = vadd.f32 %v4700, %v4860
      %4862 = vdwg.mxu0
      %4863 = vmatprep.subr.mxu0 %v4633
      %4864 = vmatpush1.msra.mxu0 %v4632
      %4865 = vmatprep.subr.mxu0 %v4648
      %4866 = vmatpush1.msra.mxu0 %v4647
      %4867 = vmatprep.subr.mxu0 %v4663
      %4868 = vmatpush1.msra.mxu0 %v4662
      %4869 = vmatprep.subr.mxu0 %v4678
      %4870 = vmatpush1.msra.mxu0 %v4677
      %4871 = vmatprep.subr.mxu0 0.0
      %4872 = vmatpush1.msra.mxu0 0.0
      %4873 = vmatprep.subr.mxu0 0.0
      %4874 = vmatpush1.msra.mxu0 0.0
      %4875 = vmatprep.subr.mxu0 0.0
      %4876 = vmatpush1.msra.mxu0 0.0
      %4877 = vmatprep.subr.mxu0 0.0
      %4878 = vmatpush1.msra.mxu0 0.0
      %4879 = vmatprep.subr.mxu0 0.0
      %4880 = vmatpush1.msra.mxu0 0.0
      %4881 = vmatprep.subr.mxu0 0.0
      %4882 = vmatpush1.msra.mxu0 0.0
      %4883 = vmatprep.subr.mxu0 0.0
      %4884 = vmatpush1.msra.mxu0 0.0
      %4885 = vmatprep.subr.mxu0 0.0
      %4886 = vmatpush1.msra.mxu0 0.0
      %4887 = vmatprep.subr.mxu0 0.0
      %4888 = vmatpush1.msra.mxu0 0.0
      %4889 = vmatprep.subr.mxu0 0.0
      %4890 = vmatpush1.msra.mxu0 0.0
      %4891 = vmatprep.subr.mxu0 0.0
      %4892 = vmatpush1.msra.mxu0 0.0
      %4893 = vmatprep.subr.mxu0 0.0
      %4894 = vmatpush1.msra.mxu0 0.0
      %4895 = vmatprep.subr.mxu0 0.0
      %4896 = vmatpush1.msra.mxu0 0.0
      %4897 = vmatprep.subr.mxu0 0.0
      %4898 = vmatpush1.msra.mxu0 0.0
      %4899 = vmatprep.subr.mxu0 0.0
      %4900 = vmatpush1.msra.mxu0 0.0
      %4901 = vmatprep.subr.mxu0 0.0
      %4902 = vmatpush1.msra.mxu0 0.0
      %4903 = vmatprep.subr.mxu0 0.0
      %4904 = vmatpush1.msra.mxu0 0.0
      %4905 = vmatprep.subr.mxu0 0.0
      %4906 = vmatpush1.msra.mxu0 0.0
      %4907 = vmatprep.subr.mxu0 0.0
      %4908 = vmatpush1.msra.mxu0 0.0
      %4909 = vmatprep.subr.mxu0 0.0
      %4910 = vmatpush1.msra.mxu0 0.0
      %4911 = vmatprep.subr.mxu0 0.0
      %4912 = vmatpush1.msra.mxu0 0.0
      %4913 = vmatprep.subr.mxu0 0.0
      %4914 = vmatpush1.msra.mxu0 0.0
      %4915 = vmatprep.subr.mxu0 0.0
      %4916 = vmatpush1.msra.mxu0 0.0
      %4917 = vmatprep.subr.mxu0 0.0
      %4918 = vmatpush1.msra.mxu0 0.0
      %4919 = vmatprep.subr.mxu0 0.0
      %4920 = vmatpush1.msra.mxu0 0.0
      %4921 = vmatprep.subr.mxu0 0.0
      %4922 = vmatpush1.msra.mxu0 0.0
      %4923 = vmatprep.subr.mxu0 0.0
      %4924 = vmatpush1.msra.mxu0 0.0
      %4925 = vmatprep.subr.mxu0 0.0
      %4926 = vmatpush1.msra.mxu0 0.0
      %4927 = vmatprep.mubr.f32.mxu0 0.0
      %4928 = vmatmul.mubr.f32.gmra.mrb[0].mxu0 %v4704
      %v4929 = vpop.f32.mrb[0].mxu0
      %v4930 = vadd.f32 %v4695, %v4929
      %v4931 = vpop.f32.mrb[0].mxu0
      %v4932 = vadd.f32 %v4695, %v4931
      %4933 = vmatprep.mubr.f32.mxu0 0.0
      %4934 = vmatmul.mubr.f32.gmra.mrb[0].mxu0 %v4707
      %v4935 = vpop.f32.mrb[0].mxu0
      %v4936 = vadd.f32 %v4700, %v4935
      %v4937 = vpop.f32.mrb[0].mxu0
      %v4938 = vadd.f32 %v4700, %v4937
      %4939 = vdwg.mxu0
      %4940 = vmatprep.subr.mxu0 %v4635
      %4941 = vmatpush1.msra.mxu0 %v4634
      %4942 = vmatprep.subr.mxu0 %v4650
      %4943 = vmatpush1.msra.mxu0 %v4649
      %4944 = vmatprep.subr.mxu0 %v4665
      %4945 = vmatpush1.msra.mxu0 %v4664
      %4946 = vmatprep.subr.mxu0 %v4680
      %4947 = vmatpush1.msra.mxu0 %v4679
      %4948 = vmatprep.subr.mxu0 0.0
      %4949 = vmatpush1.msra.mxu0 0.0
      %4950 = vmatprep.subr.mxu0 0.0
      %4951 = vmatpush1.msra.mxu0 0.0
      %4952 = vmatprep.subr.mxu0 0.0
      %4953 = vmatpush1.msra.mxu0 0.0
      %4954 = vmatprep.subr.mxu0 0.0
      %4955 = vmatpush1.msra.mxu0 0.0
      %4956 = vmatprep.subr.mxu0 0.0
      %4957 = vmatpush1.msra.mxu0 0.0
      %4958 = vmatprep.subr.mxu0 0.0
      %4959 = vmatpush1.msra.mxu0 0.0
      %4960 = vmatprep.subr.mxu0 0.0
      %4961 = vmatpush1.msra.mxu0 0.0
      %4962 = vmatprep.subr.mxu0 0.0
      %4963 = vmatpush1.msra.mxu0 0.0
      %4964 = vmatprep.subr.mxu0 0.0
      %4965 = vmatpush1.msra.mxu0 0.0
      %4966 = vmatprep.subr.mxu0 0.0
      %4967 = vmatpush1.msra.mxu0 0.0
      %4968 = vmatprep.subr.mxu0 0.0
      %4969 = vmatpush1.msra.mxu0 0.0
      %4970 = vmatprep.subr.mxu0 0.0
      %4971 = vmatpush1.msra.mxu0 0.0
      %4972 = vmatprep.subr.mxu0 0.0
      %4973 = vmatpush1.msra.mxu0 0.0
      %4974 = vmatprep.subr.mxu0 0.0
      %4975 = vmatpush1.msra.mxu0 0.0
      %4976 = vmatprep.subr.mxu0 0.0
      %4977 = vmatpush1.msra.mxu0 0.0
      %4978 = vmatprep.subr.mxu0 0.0
      %4979 = vmatpush1.msra.mxu0 0.0
      %4980 = vmatprep.subr.mxu0 0.0
      %4981 = vmatpush1.msra.mxu0 0.0
      %4982 = vmatprep.subr.mxu0 0.0
      %4983 = vmatpush1.msra.mxu0 0.0
      %4984 = vmatprep.subr.mxu0 0.0
      %4985 = vmatpush1.msra.mxu0 0.0
      %4986 = vmatprep.subr.mxu0 0.0
      %4987 = vmatpush1.msra.mxu0 0.0
      %4988 = vmatprep.subr.mxu0 0.0
      %4989 = vmatpush1.msra.mxu0 0.0
      %4990 = vmatprep.subr.mxu0 0.0
      %4991 = vmatpush1.msra.mxu0 0.0
      %4992 = vmatprep.subr.mxu0 0.0
      %4993 = vmatpush1.msra.mxu0 0.0
      %4994 = vmatprep.subr.mxu0 0.0
      %4995 = vmatpush1.msra.mxu0 0.0
      %4996 = vmatprep.subr.mxu0 0.0
      %4997 = vmatpush1.msra.mxu0 0.0
      %4998 = vmatprep.subr.mxu0 0.0
      %4999 = vmatpush1.msra.mxu0 0.0
      %5000 = vmatprep.subr.mxu0 0.0
      %5001 = vmatpush1.msra.mxu0 0.0
      %5002 = vmatprep.subr.mxu0 0.0
      %5003 = vmatpush1.msra.mxu0 0.0
      %5004 = vmatprep.mubr.f32.mxu0 0.0
      %5005 = vmatmul.mubr.f32.gmra.mrb[0].mxu0 %v4704
      %v5006 = vpop.f32.mrb[0].mxu0
      %v5007 = vadd.f32 %v4695, %v5006
      %v5008 = vpop.f32.mrb[0].mxu0
      %v5009 = vadd.f32 %v4695, %v5008
      %5010 = vmatprep.mubr.f32.mxu0 0.0
      %5011 = vmatmul.mubr.f32.gmra.mrb[0].mxu0 %v4707
      %v5012 = vpop.f32.mrb[0].mxu0
      %v5013 = vadd.f32 %v4700, %v5012
      %v5014 = vpop.f32.mrb[0].mxu0
      %v5015 = vadd.f32 %v4700, %v5014
      %5016 = vdwg.mxu0
      %5017 = vmatprep.subr.mxu0 %v4637
      %5018 = vmatpush1.msra.mxu0 %v4636
      %5019 = vmatprep.subr.mxu0 %v4652
      %5020 = vmatpush1.msra.mxu0 %v4651
      %5021 = vmatprep.subr.mxu0 %v4667
      %5022 = vmatpush1.msra.mxu0 %v4666
      %5023 = vmatprep.subr.mxu0 %v4682
      %5024 = vmatpush1.msra.mxu0 %v4681
      %5025 = vmatprep.subr.mxu0 0.0
      %5026 = vmatpush1.msra.mxu0 0.0
      %5027 = vmatprep.subr.mxu0 0.0
      %5028 = vmatpush1.msra.mxu0 0.0
      %5029 = vmatprep.subr.mxu0 0.0
      %5030 = vmatpush1.msra.mxu0 0.0
      %5031 = vmatprep.subr.mxu0 0.0
      %5032 = vmatpush1.msra.mxu0 0.0
      %5033 = vmatprep.subr.mxu0 0.0
      %5034 = vmatpush1.msra.mxu0 0.0
      %5035 = vmatprep.subr.mxu0 0.0
      %5036 = vmatpush1.msra.mxu0 0.0
      %5037 = vmatprep.subr.mxu0 0.0
      %5038 = vmatpush1.msra.mxu0 0.0
      %5039 = vmatprep.subr.mxu0 0.0
      %5040 = vmatpush1.msra.mxu0 0.0
      %5041 = vmatprep.subr.mxu0 0.0
      %5042 = vmatpush1.msra.mxu0 0.0
      %5043 = vmatprep.subr.mxu0 0.0
      %5044 = vmatpush1.msra.mxu0 0.0
      %5045 = vmatprep.subr.mxu0 0.0
      %5046 = vmatpush1.msra.mxu0 0.0
      %5047 = vmatprep.subr.mxu0 0.0
      %5048 = vmatpush1.msra.mxu0 0.0
      %5049 = vmatprep.subr.mxu0 0.0
      %5050 = vmatpush1.msra.mxu0 0.0
      %5051 = vmatprep.subr.mxu0 0.0
      %5052 = vmatpush1.msra.mxu0 0.0
      %5053 = vmatprep.subr.mxu0 0.0
      %5054 = vmatpush1.msra.mxu0 0.0
      %5055 = vmatprep.subr.mxu0 0.0
      %5056 = vmatpush1.msra.mxu0 0.0
      %5057 = vmatprep.subr.mxu0 0.0
      %5058 = vmatpush1.msra.mxu0 0.0
      %5059 = vmatprep.subr.mxu0 0.0
      %5060 = vmatpush1.msra.mxu0 0.0
      %5061 = vmatprep.subr.mxu0 0.0
      %5062 = vmatpush1.msra.mxu0 0.0
      %5063 = vmatprep.subr.mxu0 0.0
      %5064 = vmatpush1.msra.mxu0 0.0
      %5065 = vmatprep.subr.mxu0 0.0
      %5066 = vmatpush1.msra.mxu0 0.0
      %5067 = vmatprep.subr.mxu0 0.0
      %5068 = vmatpush1.msra.mxu0 0.0
      %5069 = vmatprep.subr.mxu0 0.0
      %5070 = vmatpush1.msra.mxu0 0.0
      %5071 = vmatprep.subr.mxu0 0.0
      %5072 = vmatpush1.msra.mxu0 0.0
      %5073 = vmatprep.subr.mxu0 0.0
      %5074 = vmatpush1.msra.mxu0 0.0
      %5075 = vmatprep.subr.mxu0 0.0
      %5076 = vmatpush1.msra.mxu0 0.0
      %5077 = vmatprep.subr.mxu0 0.0
      %5078 = vmatpush1.msra.mxu0 0.0
      %5079 = vmatprep.subr.mxu0 0.0
      %5080 = vmatpush1.msra.mxu0 0.0
      %5081 = vmatprep.mubr.f32.mxu0 0.0
      %5082 = vmatmul.mubr.f32.gmra.mrb[0].mxu0 %v4704
      %v5083 = vpop.f32.mrb[0].mxu0
      %v5084 = vadd.f32 %v4695, %v5083
      %v5085 = vpop.f32.mrb[0].mxu0
      %v5086 = vadd.f32 %v4695, %v5085
      %5087 = vmatprep.mubr.f32.mxu0 0.0
      %5088 = vmatmul.mubr.f32.gmra.mrb[0].mxu0 %v4707
      %v5089 = vpop.f32.mrb[0].mxu0
      %v5090 = vadd.f32 %v4700, %v5089
      %v5091 = vpop.f32.mrb[0].mxu0
      %v5092 = vadd.f32 %v4700, %v5091
      %5093 = vdwg.mxu0
      %5094 = vmatprep.subr.mxu0 %v4639
      %5095 = vmatpush1.msra.mxu0 %v4638
      %5096 = vmatprep.subr.mxu0 %v4654
      %5097 = vmatpush1.msra.mxu0 %v4653
      %5098 = vmatprep.subr.mxu0 %v4669
      %5099 = vmatpush1.msra.mxu0 %v4668
      %5100 = vmatprep.subr.mxu0 %v4684
      %5101 = vmatpush1.msra.mxu0 %v4683
      %5102 = vmatprep.subr.mxu0 0.0
      %5103 = vmatpush1.msra.mxu0 0.0
      %5104 = vmatprep.subr.mxu0 0.0
      %5105 = vmatpush1.msra.mxu0 0.0
      %5106 = vmatprep.subr.mxu0 0.0
      %5107 = vmatpush1.msra.mxu0 0.0
      %5108 = vmatprep.subr.mxu0 0.0
      %5109 = vmatpush1.msra.mxu0 0.0
      %5110 = vmatprep.subr.mxu0 0.0
      %5111 = vmatpush1.msra.mxu0 0.0
      %5112 = vmatprep.subr.mxu0 0.0
      %5113 = vmatpush1.msra.mxu0 0.0
      %5114 = vmatprep.subr.mxu0 0.0
      %5115 = vmatpush1.msra.mxu0 0.0
      %5116 = vmatprep.subr.mxu0 0.0
      %5117 = vmatpush1.msra.mxu0 0.0
      %5118 = vmatprep.subr.mxu0 0.0
      %5119 = vmatpush1.msra.mxu0 0.0
      %5120 = vmatprep.subr.mxu0 0.0
      %5121 = vmatpush1.msra.mxu0 0.0
      %5122 = vmatprep.subr.mxu0 0.0
      %5123 = vmatpush1.msra.mxu0 0.0
      %5124 = vmatprep.subr.mxu0 0.0
      %5125 = vmatpush1.msra.mxu0 0.0
      %5126 = vmatprep.subr.mxu0 0.0
      %5127 = vmatpush1.msra.mxu0 0.0
      %5128 = vmatprep.subr.mxu0 0.0
      %5129 = vmatpush1.msra.mxu0 0.0
      %5130 = vmatprep.subr.mxu0 0.0
      %5131 = vmatpush1.msra.mxu0 0.0
      %5132 = vmatprep.subr.mxu0 0.0
      %5133 = vmatpush1.msra.mxu0 0.0
      %5134 = vmatprep.subr.mxu0 0.0
      %5135 = vmatpush1.msra.mxu0 0.0
      %5136 = vmatprep.subr.mxu0 0.0
      %5137 = vmatpush1.msra.mxu0 0.0
      %5138 = vmatprep.subr.mxu0 0.0
      %5139 = vmatpush1.msra.mxu0 0.0
      %5140 = vmatprep.subr.mxu0 0.0
      %5141 = vmatpush1.msra.mxu0 0.0
      %5142 = vmatprep.subr.mxu0 0.0
      %5143 = vmatpush1.msra.mxu0 0.0
      %5144 = vmatprep.subr.mxu0 0.0
      %5145 = vmatpush1.msra.mxu0 0.0
      %5146 = vmatprep.subr.mxu0 0.0
      %5147 = vmatpush1.msra.mxu0 0.0
      %5148 = vmatprep.subr.mxu0 0.0
      %5149 = vmatpush1.msra.mxu0 0.0
      %5150 = vmatprep.subr.mxu0 0.0
      %5151 = vmatpush1.msra.mxu0 0.0
      %5152 = vmatprep.subr.mxu0 0.0
      %5153 = vmatpush1.msra.mxu0 0.0
      %5154 = vmatprep.subr.mxu0 0.0
      %5155 = vmatpush1.msra.mxu0 0.0
      %5156 = vmatprep.subr.mxu0 0.0
      %5157 = vmatpush1.msra.mxu0 0.0
      %5158 = vmatprep.mubr.f32.mxu0 0.0
      %5159 = vmatmul.mubr.f32.gmra.mrb[0].mxu0 %v4704
      %v5160 = vpop.f32.mrb[0].mxu0
      %v5161 = vadd.f32 %v4695, %v5160
      %v5162 = vpop.f32.mrb[0].mxu0
      %v5163 = vadd.f32 %v4695, %v5162
      %5164 = vmatprep.mubr.f32.mxu0 0.0
      %5165 = vmatmul.mubr.f32.gmra.mrb[0].mxu0 %v4707
      %v5166 = vpop.f32.mrb[0].mxu0
      %v5167 = vadd.f32 %v4700, %v5166
      %v5168 = vpop.f32.mrb[0].mxu0
      %v5169 = vadd.f32 %v4700, %v5168
      %5170 = vdwg.mxu0
      %5171 = vmatprep.subr.mxu0 %v4641
      %5172 = vmatpush1.msra.mxu0 %v4640
      %5173 = vmatprep.subr.mxu0 %v4656
      %5174 = vmatpush1.msra.mxu0 %v4655
      %5175 = vmatprep.subr.mxu0 %v4671
      %5176 = vmatpush1.msra.mxu0 %v4670
      %5177 = vmatprep.subr.mxu0 %v4686
      %5178 = vmatpush1.msra.mxu0 %v4685
      %5179 = vmatprep.subr.mxu0 0.0
      %5180 = vmatpush1.msra.mxu0 0.0
      %5181 = vmatprep.subr.mxu0 0.0
      %5182 = vmatpush1.msra.mxu0 0.0
      %5183 = vmatprep.subr.mxu0 0.0
      %5184 = vmatpush1.msra.mxu0 0.0
      %5185 = vmatprep.subr.mxu0 0.0
      %5186 = vmatpush1.msra.mxu0 0.0
      %5187 = vmatprep.subr.mxu0 0.0
      %5188 = vmatpush1.msra.mxu0 0.0
      %5189 = vmatprep.subr.mxu0 0.0
      %5190 = vmatpush1.msra.mxu0 0.0
      %5191 = vmatprep.subr.mxu0 0.0
      %5192 = vmatpush1.msra.mxu0 0.0
      %5193 = vmatprep.subr.mxu0 0.0
      %5194 = vmatpush1.msra.mxu0 0.0
      %5195 = vmatprep.subr.mxu0 0.0
      %5196 = vmatpush1.msra.mxu0 0.0
      %5197 = vmatprep.subr.mxu0 0.0
      %5198 = vmatpush1.msra.mxu0 0.0
      %5199 = vmatprep.subr.mxu0 0.0
      %5200 = vmatpush1.msra.mxu0 0.0
      %5201 = vmatprep.subr.mxu0 0.0
      %5202 = vmatpush1.msra.mxu0 0.0
      %5203 = vmatprep.subr.mxu0 0.0
      %5204 = vmatpush1.msra.mxu0 0.0
      %5205 = vmatprep.subr.mxu0 0.0
      %5206 = vmatpush1.msra.mxu0 0.0
      %5207 = vmatprep.subr.mxu0 0.0
      %5208 = vmatpush1.msra.mxu0 0.0
      %5209 = vmatprep.subr.mxu0 0.0
      %5210 = vmatpush1.msra.mxu0 0.0
      %5211 = vmatprep.subr.mxu0 0.0
      %5212 = vmatpush1.msra.mxu0 0.0
      %5213 = vmatprep.subr.mxu0 0.0
      %5214 = vmatpush1.msra.mxu0 0.0
      %5215 = vmatprep.subr.mxu0 0.0
      %5216 = vmatpush1.msra.mxu0 0.0
      %5217 = vmatprep.subr.mxu0 0.0
      %5218 = vmatpush1.msra.mxu0 0.0
      %5219 = vmatprep.subr.mxu0 0.0
      %5220 = vmatpush1.msra.mxu0 0.0
      %5221 = vmatprep.subr.mxu0 0.0
      %5222 = vmatpush1.msra.mxu0 0.0
      %5223 = vmatprep.subr.mxu0 0.0
      %5224 = vmatpush1.msra.mxu0 0.0
      %5225 = vmatprep.subr.mxu0 0.0
      %5226 = vmatpush1.msra.mxu0 0.0
      %5227 = vmatprep.subr.mxu0 0.0
      %5228 = vmatpush1.msra.mxu0 0.0
      %5229 = vmatprep.subr.mxu0 0.0
      %5230 = vmatpush1.msra.mxu0 0.0
      %5231 = vmatprep.subr.mxu0 0.0
      %5232 = vmatpush1.msra.mxu0 0.0
      %5233 = vmatprep.subr.mxu0 0.0
      %5234 = vmatpush1.msra.mxu0 0.0
      %5235 = vmatprep.mubr.f32.mxu0 0.0
      %5236 = vmatmul.mubr.f32.gmra.mrb[0].mxu0 %v4704
      %v5237 = vpop.f32.mrb[0].mxu0
      %v5238 = vadd.f32 %v4695, %v5237
      %v5239 = vpop.f32.mrb[0].mxu0
      %v5240 = vadd.f32 %v4695, %v5239
      %5241 = vmatprep.mubr.f32.mxu0 0.0
      %5242 = vmatmul.mubr.f32.gmra.mrb[0].mxu0 %v4707
      %v5243 = vpop.f32.mrb[0].mxu0
      %v5244 = vadd.f32 %v4700, %v5243
      %v5245 = vpop.f32.mrb[0].mxu0
      %v5246 = vadd.f32 %v4700, %v5245
      %5247 = vdwg.mxu0
      %5248 = vmatprep.subr.mxu0 0.0
      %5249 = vmatpush1.msra.mxu0 %v4642
      %5250 = vmatprep.subr.mxu0 0.0
      %5251 = vmatpush1.msra.mxu0 %v4657
      %5252 = vmatprep.subr.mxu0 0.0
      %5253 = vmatpush1.msra.mxu0 %v4672
      %5254 = vmatprep.subr.mxu0 0.0
      %5255 = vmatpush1.msra.mxu0 %v4687
      %5256 = vmatprep.subr.mxu0 0.0
      %5257 = vmatpush1.msra.mxu0 0.0
      %5258 = vmatprep.subr.mxu0 0.0
      %5259 = vmatpush1.msra.mxu0 0.0
      %5260 = vmatprep.subr.mxu0 0.0
      %5261 = vmatpush1.msra.mxu0 0.0
      %5262 = vmatprep.subr.mxu0 0.0
      %5263 = vmatpush1.msra.mxu0 0.0
      %5264 = vmatprep.subr.mxu0 0.0
      %5265 = vmatpush1.msra.mxu0 0.0
      %5266 = vmatprep.subr.mxu0 0.0
      %5267 = vmatpush1.msra.mxu0 0.0
      %5268 = vmatprep.subr.mxu0 0.0
      %5269 = vmatpush1.msra.mxu0 0.0
      %5270 = vmatprep.subr.mxu0 0.0
      %5271 = vmatpush1.msra.mxu0 0.0
      %5272 = vmatprep.subr.mxu0 0.0
      %5273 = vmatpush1.msra.mxu0 0.0
      %5274 = vmatprep.subr.mxu0 0.0
      %5275 = vmatpush1.msra.mxu0 0.0
      %5276 = vmatprep.subr.mxu0 0.0
      %5277 = vmatpush1.msra.mxu0 0.0
      %5278 = vmatprep.subr.mxu0 0.0
      %5279 = vmatpush1.msra.mxu0 0.0
      %5280 = vmatprep.subr.mxu0 0.0
      %5281 = vmatpush1.msra.mxu0 0.0
      %5282 = vmatprep.subr.mxu0 0.0
      %5283 = vmatpush1.msra.mxu0 0.0
      %5284 = vmatprep.subr.mxu0 0.0
      %5285 = vmatpush1.msra.mxu0 0.0
      %5286 = vmatprep.subr.mxu0 0.0
      %5287 = vmatpush1.msra.mxu0 0.0
      %5288 = vmatprep.subr.mxu0 0.0
      %5289 = vmatpush1.msra.mxu0 0.0
      %5290 = vmatprep.subr.mxu0 0.0
      %5291 = vmatpush1.msra.mxu0 0.0
      %5292 = vmatprep.subr.mxu0 0.0
      %5293 = vmatpush1.msra.mxu0 0.0
      %5294 = vmatprep.subr.mxu0 0.0
      %5295 = vmatpush1.msra.mxu0 0.0
      %5296 = vmatprep.subr.mxu0 0.0
      %5297 = vmatpush1.msra.mxu0 0.0
      %5298 = vmatprep.subr.mxu0 0.0
      %5299 = vmatpush1.msra.mxu0 0.0
      %5300 = vmatprep.subr.mxu0 0.0
      %5301 = vmatpush1.msra.mxu0 0.0
      %5302 = vmatprep.subr.mxu0 0.0
      %5303 = vmatpush1.msra.mxu0 0.0
      %5304 = vmatprep.subr.mxu0 0.0
      %5305 = vmatpush1.msra.mxu0 0.0
      %5306 = vmatprep.subr.mxu0 0.0
      %5307 = vmatpush1.msra.mxu0 0.0
      %5308 = vmatprep.subr.mxu0 0.0
      %5309 = vmatpush1.msra.mxu0 0.0
      %5310 = vmatprep.subr.mxu0 0.0
      %5311 = vmatpush1.msra.mxu0 0.0
      %5312 = vmatprep.mubr.f32.mxu0 0.0
      %5313 = vmatmul.mubr.f32.gmra.mrb[0].mxu0 %v4704
      %v5314 = vpop.f32.mrb[0].mxu0
      %v5315 = vadd.f32 %v4695, %v5314
      %v5316 = vpop.f32.mrb[0].mxu0
      %5317 = vmatprep.mubr.f32.mxu0 0.0
      %5318 = vmatmul.mubr.f32.gmra.mrb[0].mxu0 %v4707
      %v5319 = vpop.f32.mrb[0].mxu0
      %v5320 = vadd.f32 %v4700, %v5319
      %v5321 = vpop.f32.mrb[0].mxu0
      %5322 = vdwg.mxu0
      %v5323 = vmax.f32 %v4776, 0.0
      %v5324 = vmax.f32 %v4778, 0.0
      %v5325 = vmax.f32 %v4853, 0.0
      %v5326 = vmax.f32 %v4855, 0.0
      %v5327 = vmax.f32 %v4930, 0.0
      %v5328 = vmax.f32 %v4932, 0.0
      %v5329 = vmax.f32 %v5007, 0.0
      %v5330 = vmax.f32 %v5009, 0.0
      %v5331 = vmax.f32 %v5084, 0.0
      %v5332 = vmax.f32 %v5086, 0.0
      %v5333 = vmax.f32 %v5161, 0.0
      %v5334 = vmax.f32 %v5163, 0.0
      %v5335 = vmax.f32 %v5238, 0.0
      %v5336 = vmax.f32 %v5240, 0.0
      %v5337 = vmax.f32 %v5315, 0.0
      %v5338 = vmax.f32 %v4782, 0.0
      %v5339 = vmax.f32 %v4784, 0.0
      %v5340 = vmax.f32 %v4859, 0.0
      %v5341 = vmax.f32 %v4861, 0.0
      %v5342 = vmax.f32 %v4936, 0.0
      %v5343 = vmax.f32 %v4938, 0.0
      %v5344 = vmax.f32 %v5013, 0.0
      %v5345 = vmax.f32 %v5015, 0.0
      %v5346 = vmax.f32 %v5090, 0.0
      %v5347 = vmax.f32 %v5092, 0.0
      %v5348 = vmax.f32 %v5167, 0.0
      %v5349 = vmax.f32 %v5169, 0.0
      %v5350 = vmax.f32 %v5244, 0.0
      %v5351 = vmax.f32 %v5246, 0.0
      %v5352 = vmax.f32 %v5320, 0.0
      %5353 = vst [vmem:[%s332] sm:$0xff] %v5323
      %5354 = vst [vmem:[%s332 + $0x8] sm:$0xff] %v5324
      %5355 = vst [vmem:[%s332 + $0x10] sm:$0xff] %v5325
      %5356 = vst [vmem:[%s332 + $0x18] sm:$0xff] %v5326
      %5357 = vst [vmem:[%s332 + $0x20] sm:$0xff] %v5327
      %5358 = vst [vmem:[%s332 + $0x28] sm:$0xff] %v5328
      %5359 = vst [vmem:[%s332 + $0x30] sm:$0xff] %v5329
      %5360 = vst [vmem:[%s332 + $0x38] sm:$0xff] %v5330
      %5361 = vst [vmem:[%s332 + $0x40] sm:$0xff] %v5331
      %5362 = vst [vmem:[%s332 + $0x48] sm:$0xff] %v5332
      %5363 = vst [vmem:[%s332 + $0x50] sm:$0xff] %v5333
      %5364 = vst [vmem:[%s332 + $0x58] sm:$0xff] %v5334
      %5365 = vst [vmem:[%s332 + $0x60] sm:$0xff] %v5335
      %5366 = vst [vmem:[%s332 + $0x68] sm:$0xff] %v5336
      %vm5367 = vcmask 285696
      %5368 = vst.msk [vmem:[%s332 + $0x70] sm:$0xff] %vm5367, %v5337
      %5369 = vst [vmem:[%s332 + $0x78] sm:$0x3] %v5338
      %5370 = vst [vmem:[%s332 + $0x80] sm:$0x3] %v5339
      %5371 = vst [vmem:[%s332 + $0x88] sm:$0x3] %v5340
      %5372 = vst [vmem:[%s332 + $0x90] sm:$0x3] %v5341
      %5373 = vst [vmem:[%s332 + $0x98] sm:$0x3] %v5342
      %5374 = vst [vmem:[%s332 + $0xa0] sm:$0x3] %v5343
      %5375 = vst [vmem:[%s332 + $0xa8] sm:$0x3] %v5344
      %5376 = vst [vmem:[%s332 + $0xb0] sm:$0x3] %v5345
      %5377 = vst [vmem:[%s332 + $0xb8] sm:$0x3] %v5346
      %5378 = vst [vmem:[%s332 + $0xc0] sm:$0x3] %v5347
      %5379 = vst [vmem:[%s332 + $0xc8] sm:$0x3] %v5348
      %5380 = vst [vmem:[%s332 + $0xd0] sm:$0x3] %v5349
      %5381 = vst [vmem:[%s332 + $0xd8] sm:$0x3] %v5350
      %5382 = vst [vmem:[%s332 + $0xe0] sm:$0x3] %v5351
      %vm5383 = vcmask 279552
      %5384 = vst.msk [vmem:[%s332 + $0xe8] sm:$0x3] %vm5383, %v5352
      %p5385 = scmp.lt.s32.totalorder %s20, 1
      %s5386 = scalar_select %p5385, %s20, 1
      %s5387 = smul.addr %s5386, 30
      %s5388 = smul.addr %s5387, 8
      %s5389 = scalar_lea.vmem %s9, %s5388
      // Predicated region
      $region57: #{cnn_forward.1} parent=55 // pred_check
        %p5390 = pneg %p232
      $region58: #{cnn_forward.1} parent=55 // pred_check_branch
        %5392 = sbr.rel (%p5390) target = $region60
      $region59: #{cnn_forward.1} parent=55 // pred_region
        _
      $region60: #{cnn_forward.1} parent=55 // pred_fallthru
        _
    $region56: #{cnn_forward.1} parent=5 // pred_fallthru
      _
    %p5393 = scmp.le.s32.totalorder 2, %s15
    // Predicated region
    $region61: #{cnn_forward.1} parent=5 // pred_check
      %p5394 = pneg %p5393
    $region62: #{cnn_forward.1} parent=5 // pred_check_branch
      %5396 = sbr.rel (%p5394) target = $region64
    $region63: #{cnn_forward.1} parent=5 // pred_region
      %s5397 = ssub.s32 %s15, 2
      // Predicated region
      $region65: #{cnn_forward.1} parent=63 // pred_check
        %p5398 = pneg %p238
      $region66: #{cnn_forward.1} parent=63 // pred_check_branch
        %5400 = sbr.rel (%p5398) target = $region68
      $region67: #{cnn_forward.1} parent=63 // pred_region
        %p5401 = scmp.lt.s32.totalorder %s21, 1
        %s5402 = scalar_select %p5401, %s21, 1
        %s5403 = smul.addr %s5402, 30
        %s5404 = smul.addr %s5403, 8
        %s5405 = scalar_lea.vmem %s9, %s5404
      $region68: #{cnn_forward.1} parent=63 // pred_fallthru
        _
    $region64: #{cnn_forward.1} parent=5 // pred_fallthru
      _
  $region6: #{cnn_forward.1} parent=0 // loop_footer
    %s19 = sadd.s32 1, %s15
  $region7: #{cnn_forward.1} parent=0 // loop_footer_branch
    %14 = sbr.rel target = $region3
  $region8: #{cnn_forward.1} parent=0 // loop_exit
    _

</llo_original>
